<compile_context>
chip_gen: v5e
topology: v5e:2x2
jax: 0.10.0
libtpu: 0.0.40
codegen_flags: <defaults>
</compile_context>

<pallas_src>
import math
from functools import partial

import numpy as np
import jax
import jax.numpy as jnp
from jax.experimental import pallas as pl
from jax.experimental.pallas import tpu as pltpu


def _round_up(x, m):
    return ((x + m - 1) // m) * m


# ----------------------------------------------------------------------------
# in-kernel building blocks (plain jnp on VMEM-resident values)
# ----------------------------------------------------------------------------

def _ld(slab_ref, entry, dtype=None):
    """Load one parameter from the packed slab via a static (free) ref slice."""
    off, r, c = entry
    v = slab_ref[off:off + r, 0:c]
    return v if dtype is None else v.astype(dtype)


def _layernorm(x, g, b, eps=1e-5):
    mu = jnp.mean(x, axis=-1, keepdims=True)
    var = jnp.mean((x - mu) ** 2, axis=-1, keepdims=True)
    return (x - mu) * jax.lax.rsqrt(var + eps) * g + b


def _mab(Q3, K3, slab_ref, w, num_heads, ln):
    """Reference Set-Transformer MAB on a stack of G independent groups.

    Q3: (Gq, Nq, dq), K3: (G, Nk, dk) -> (G, Nq, dv).  Gq is either G or 1
    (shared query, e.g. inducing points / seeds); in the latter case the Q
    projection is computed once and broadcast on-chip.
      Q' = Q Wq + bq ; K' = K Wk + bk ; V' = K Wv + bv
      per head h: O_h = Q'_h + softmax(Q'_h K'_h^T / sqrt(dim_V)) V'_h
      O = concat_h(O_h) ; [LN] ; O = O + relu(O Wo + bo) ; [LN]
    """
    Gq, Nq, dq = Q3.shape
    G, Nk, dk = K3.shape
    dv = w["Wq"][2]
    dh = dv // num_heads
    scale = 1.0 / math.sqrt(dv)          # reference MAB scales by sqrt(dim_V)

    # Q projection (computed once if the query is shared across groups).
    Wq = _ld(slab_ref, w["Wq"])
    bq = _ld(slab_ref, w["bq"], jnp.float32)
    Qp = (jnp.dot(Q3.reshape(Gq * Nq, dq).astype(jnp.bfloat16), Wq,
                  preferred_element_type=jnp.float32) + bq).reshape(Gq, Nq, dv)
    if Gq != G:
        Qp = jnp.broadcast_to(Qp, (G, Nq, dv))

    # K / V projections: fold (group, row) into the MXU M dimension.
    k2 = K3.reshape(G * Nk, dk).astype(jnp.bfloat16)
    Wk = _ld(slab_ref, w["Wk"])
    bk = _ld(slab_ref, w["bk"], jnp.float32)
    # Fold the 1/sqrt(dim_V) score scale into K' (K' only feeds the scores, so
    # the residual keeps the reference's UNscaled Q').
    Kp = ((jnp.dot(k2, Wk, preferred_element_type=jnp.float32) + bk) * scale
          ).astype(jnp.bfloat16).reshape(G, Nk, dv)
    Wv = _ld(slab_ref, w["Wv"])
    bv = _ld(slab_ref, w["bv"], jnp.float32)
    Vp = (jnp.dot(k2, Wv, preferred_element_type=jnp.float32) + bv
          ).astype(jnp.bfloat16).reshape(G, Nk, dv)

    Qb = Qp.astype(jnp.bfloat16)

    # Per-head attention on static lane-slices of the projections; heads are
    # merged back along the feature axis in head order, matching
    # torch.cat((Q_+A.bmm(V_)).split(Q.size(0),0), 2).
    heads = []
    for h in range(num_heads):
        sl = slice(h * dh, (h + 1) * dh)
        Sc = jax.lax.dot_general(Qb[..., sl], Kp[..., sl],
                                 (((2,), (2,)), ((0,), (0,))),
                                 preferred_element_type=jnp.float32)   # (G,Nq,Nk)
        Sc = Sc - jnp.max(Sc, axis=-1, keepdims=True)
        E = jnp.exp(Sc)
        A = (E * pl.reciprocal(jnp.sum(E, axis=-1, keepdims=True), approx=True)
             ).astype(jnp.bfloat16)
        Oh = Qp[..., sl] + jax.lax.dot_general(A, Vp[..., sl],
                                               (((2,), (1,)), ((0,), (0,))),
                                               preferred_element_type=jnp.float32)
        heads.append(Oh)
    O = jnp.concatenate(heads, axis=-1)                                # (G,Nq,dv)

    if ln:
        O = _layernorm(O, _ld(slab_ref, w["g0"], jnp.float32),
                       _ld(slab_ref, w["be0"], jnp.float32))
    Wo = _ld(slab_ref, w["Wo"])
    bo = _ld(slab_ref, w["bo"], jnp.float32)
    ff = jnp.dot(O.reshape(G * Nq, dv).astype(jnp.bfloat16), Wo,
                 preferred_element_type=jnp.float32) + bo
    O = O + jnp.maximum(ff, 0.0).reshape(G, Nq, dv)
    if ln:
        O = _layernorm(O, _ld(slab_ref, w["g1"], jnp.float32),
                       _ld(slab_ref, w["be1"], jnp.float32))
    return O


def _isab(X, slab_ref, p, num_heads, ln):
    # Inducing points are shared across all groups: project once, broadcast on-chip.
    I2 = _ld(slab_ref, p["I"])                                # (num_inds, D) bf16
    H = _mab(I2[None], X, slab_ref, p["mab0"], num_heads, ln)
    return _mab(X, H, slab_ref, p["mab1"], num_heads, ln)


# ----------------------------------------------------------------------------
# fused kernel: 2x ISAB encoder (shared by both sets) + PMA + decoder Linear
# ----------------------------------------------------------------------------

def set_transformer_kernel(x_ref, slab_ref, o_ref, *, offs, num_heads, ln):
    TB, S, N, E = x_ref.shape                         # S == 2 (x1, x2)
    X = x_ref[...].reshape(TB * S, N, E)              # bf16; fold batch*set -> groups

    X = _isab(X, slab_ref, offs["enc"]["isab0"], num_heads, ln)
    X = _isab(X, slab_ref, offs["enc"]["isab1"], num_heads, ln)   # (TB*S, N, D) f32
    D = X.shape[-1]

    # torch.cat([x1, x2], -2) is a pure reshape (sets are stacked on the group axis)
    Xc = X.reshape(TB, S * N, D)                                  # (TB, 2N, D)

    pma = offs["dec"]["pma"]
    Seed = _ld(slab_ref, pma["S"])[None]                          # (1, ns, D) bf16
    Hd = _mab(Seed, Xc, slab_ref, pma["mab"], num_heads, ln)      # (TB, ns, D) f32

    _, ns, VLP = o_ref.shape
    Wd = _ld(slab_ref, offs["dec"]["W"])                          # (D, VLP) bf16, zero-padded
    bd = _ld(slab_ref, offs["dec"]["b"], jnp.float32)             # (1, VLP)
    out = jnp.dot(Hd.reshape(TB * ns, D).astype(jnp.bfloat16), Wd,
                  preferred_element_type=jnp.float32) + bd
    o_ref[...] = out.reshape(TB, ns, VLP)             # lane-dense (128-multiple) store


# ----------------------------------------------------------------------------
# host-side parameter slab packing + wrapper
# ----------------------------------------------------------------------------

def pack_set_transformer(params, cfg):
    """Pack every parameter into ONE bf16 (rows, width) slab.

    Each param occupies an 8-row-aligned row range starting at column 0 (static
    offsets -> free in-kernel slices).  The decoder Linear is zero-padded to a
    128-multiple output width so the kernel's final store is lane-dense.
    Returns (slab, offsets-pytree of (row_off, rows, cols)).
    """
    VL = cfg["vocab_size"] * cfg["max_len"]
    VLP = _round_up(VL, 128)
    p = {"enc": params["enc"],
         "dec": {"pma": params["dec"]["pma"],
                 "W": jnp.pad(params["dec"]["W"], ((0, 0), (0, VLP - VL))),
                 "b": jnp.pad(params["dec"]["b"], ((0, 0), (0, VLP - VL)))}}

    leaves = jax.tree_util.tree_leaves(p)
    width = _round_up(max(a.shape[1] for a in leaves), 128)

    row = [0]
    pieces = []

    def walk(node):
        if isinstance(node, dict):
            return {k: walk(v) for k, v in node.items()}
        r, c = node.shape
        rp = _round_up(r, 8)
        off = row[0]
        row[0] += rp
        pieces.append(jnp.pad(node.astype(jnp.float32),
                              ((0, rp - r), (0, width - c))))
        return (off, r, c)

    offs = walk(p)
    slab = jnp.concatenate(pieces, axis=0).astype(jnp.bfloat16)
    return slab, offs


def set_transformer_forward(slab, x1, x2, *, offs, cfg, tb=None):
    B, N, E = x1.shape
    ns = cfg["num_seeds"]
    V, L = cfg["vocab_size"], cfg["max_len"]
    VL = V * L
    VLP = _round_up(VL, 128)

    if tb is None:
        # >=2 grid steps keeps both v7x TensorCores busy; on single-TC v5e/v6e the
        # grid is a serial loop, so pass tb=B there to fold everything into one step.
        tb = min(max(1, -(-B // 2)), 256)
    Bp = _round_up(B, tb)

    xs = jnp.stack([x1, x2], axis=1).astype(jnp.bfloat16)         # (B, 2, N, E)
    if Bp != B:
        xs = jnp.pad(xs, ((0, Bp - B), (0, 0), (0, 0), (0, 0)))

    kernel = partial(set_transformer_kernel, offs=offs,
                     num_heads=cfg["num_heads"], ln=cfg["ln"])
    out = pl.pallas_call(
        kernel,
        grid=(Bp // tb,),
        in_specs=[pl.BlockSpec((tb, 2, N, E), lambda b: (b, 0, 0, 0)),
                  # constant index_map -> one DMA, weights stay VMEM-resident
                  pl.BlockSpec(slab.shape, lambda b: (0, 0))],
        out_specs=pl.BlockSpec((tb, ns, VLP), lambda b: (b, 0, 0)),
        out_shape=jax.ShapeDtypeStruct((Bp, ns, VLP), jnp.float32),
        compiler_params=pltpu.CompilerParams(dimension_semantics=("parallel",)),
    )(xs, slab)

    return out[:B, :, :VL].reshape(B * ns, V, L)      # (B*num_seeds, vocab, max_len)


# ----------------------------------------------------------------------------
# Deterministic parameter initialization (shapes match the torch __init__)
# ----------------------------------------------------------------------------

def _lin(key, din, dout):
    kw, kb = jax.random.split(key)
    lim = 1.0 / math.sqrt(din)
    W = jax.random.uniform(kw, (din, dout), jnp.float32, -lim, lim)
    b = jax.random.uniform(kb, (1, dout), jnp.float32, -lim, lim)
    return W, b


def init_mab(key, dq, dk, dv, ln):
    ks = jax.random.split(key, 4)
    Wq, bq = _lin(ks[0], dq, dv)
    Wk, bk = _lin(ks[1], dk, dv)
    Wv, bv = _lin(ks[2], dk, dv)
    Wo, bo = _lin(ks[3], dv, dv)
    p = {"Wq": Wq, "bq": bq, "Wk": Wk, "bk": bk,
         "Wv": Wv, "bv": bv, "Wo": Wo, "bo": bo}
    if ln:
        p.update({"g0": jnp.ones((1, dv)), "be0": jnp.zeros((1, dv)),
                  "g1": jnp.ones((1, dv)), "be1": jnp.zeros((1, dv))})
    return p


def init_isab(key, dim_in, dim_out, num_inds, ln):
    ki, k0, k1 = jax.random.split(key, 3)
    lim = math.sqrt(6.0 / (num_inds + dim_out))      # xavier_uniform
    return {
        "I": jax.random.uniform(ki, (num_inds, dim_out), jnp.float32, -lim, lim),
        "mab0": init_mab(k0, dim_out, dim_in, dim_out, ln),
        "mab1": init_mab(k1, dim_in, dim_out, dim_out, ln),
    }


def init_pma(key, dim, num_seeds, ln):
    ks, km = jax.random.split(key)
    lim = math.sqrt(6.0 / (num_seeds + dim))
    return {
        "S": jax.random.uniform(ks, (num_seeds, dim), jnp.float32, -lim, lim),
        "mab": init_mab(km, dim, dim, dim, ln),
    }


def init_set_transformer(key, cfg):
    k0, k1, k2, k3 = jax.random.split(key, 4)
    W, b = _lin(k3, cfg["proj_dim"], cfg["vocab_size"] * cfg["max_len"])
    return {
        "enc": {
            "isab0": init_isab(k0, cfg["embedding_dim"], cfg["proj_dim"],
                               cfg["num_inds"], cfg["ln"]),
            "isab1": init_isab(k1, cfg["proj_dim"], cfg["proj_dim"],
                               cfg["num_inds"], cfg["ln"]),
        },
        "dec": {
            "pma": init_pma(k2, cfg["proj_dim"], cfg["num_seeds"], cfg["ln"]),
            "W": W, "b": b,
        },
    }


# ----------------------------------------------------------------------------
# Main
# ----------------------------------------------------------------------------

if __name__ == "__main__":
    vocab = list("abcdefgh")                 # 8 tokens
    inv_vocab = np.array(vocab, dtype="object")

    cfg = {
        "embedding_dim": 16,
        "proj_dim": 32,
        "num_heads": 4,
        "num_inds": 8,
        "num_seeds": 1,
        "max_len": 4,
        "ln": False,                         # kwargs.ln; LN path also implemented in-kernel
        "vocab_size": len(vocab),
    }
    B, N = 2, 8                              # batch, num_examples per set

    key = jax.random.PRNGKey(0)
    kp, kx1, kx2 = jax.random.split(key, 3)
    params = init_set_transformer(kp, cfg)
    x1 = jax.random.normal(kx1, (B, N, cfg["embedding_dim"]), jnp.float32)
    x2 = jax.random.normal(kx2, (B, N, cfg["embedding_dim"]), jnp.float32)

    # pack once host-side (one bf16 slab, static offsets baked into the kernel)
    slab, offs = pack_set_transformer(params, cfg)

    fwd = jax.jit(partial(set_transformer_forward, offs=offs, cfg=cfg))
    logits = fwd(slab, x1, x2)               # (B*num_seeds, vocab, max_len)
    logits = jax.block_until_ready(logits)

    # aligned_chars = inv_vocab[argmax over vocab axis]  (host-side object-array lookup)
    aligned_chars = inv_vocab[np.asarray(jnp.argmax(logits, axis=1))]

    assert logits.shape == (B * cfg["num_seeds"], cfg["vocab_size"], cfg["max_len"])
    assert aligned_chars.shape == (B * cfg["num_seeds"], cfg["max_len"])
    assert bool(jnp.all(jnp.isfinite(logits)))
    print("KERNEL_OK")
</pallas_src>

<mosaic_0001>
module attributes {stable_mosaic.version = 11 : i64} {
  func.func @set_transformer_kernel(%arg0: i32, %arg1: memref<1x2x8x16xbf16, #tpu.memory_space<vmem>>, %arg2: memref<816x128xbf16, #tpu.memory_space<vmem>>, %arg3: memref<1x1x128xf32, #tpu.memory_space<vmem>>) attributes {dimension_semantics = [#tpu.dimension_semantics<parallel>], iteration_bounds = array<i64: 2>, scalar_prefetch = 0 : i64, scratch_operands = 0 : i64, tpu.core_type = #tpu.core_type<tc>, window_params = [{transform_indices = @transform_0, window_bounds = array<i64: 1, 2, 8, 16>}, {pipeline_mode = #tpu.pipeline_mode<synchronous>, transform_indices = @transform_1, window_bounds = array<i64: 816, 128>}, {transform_indices = @transform_2, window_bounds = array<i64: 1, 1, 128>}]} {
    %c0 = arith.constant 0 : index
    %c0_0 = arith.constant 0 : index
    %c0_1 = arith.constant 0 : index
    %c0_2 = arith.constant 0 : index
    %0 = vector.load %arg1[%c0, %c0_0, %c0_1, %c0_2] : memref<1x2x8x16xbf16, #tpu.memory_space<vmem>>, vector<1x2x8x16xbf16>
    %1 = vector.shape_cast %0 : vector<1x2x8x16xbf16> to vector<2x8x16xbf16>
    %c0_3 = arith.constant 0 : index
    %c0_4 = arith.constant 0 : index
    %2 = vector.load %arg2[%c0_3, %c0_4] : memref<816x128xbf16, #tpu.memory_space<vmem>>, vector<8x32xbf16>
    %3 = vector.shape_cast %2 : vector<8x32xbf16> to vector<1x8x32xbf16>
    %c8 = arith.constant 8 : index
    %c0_5 = arith.constant 0 : index
    %4 = vector.load %arg2[%c8, %c0_5] : memref<816x128xbf16, #tpu.memory_space<vmem>>, vector<32x32xbf16>
    %c40 = arith.constant 40 : index
    %c0_6 = arith.constant 0 : index
    %5 = vector.load %arg2[%c40, %c0_6] : memref<816x128xbf16, #tpu.memory_space<vmem>>, vector<1x32xbf16>
    %6 = arith.extf %5 : vector<1x32xbf16> to vector<1x32xf32>
    %7 = vector.shape_cast %3 : vector<1x8x32xbf16> to vector<8x32xbf16>
    %cst = arith.constant dense<0.000000e+00> : vector<8x32xf32>
    %8 = tpu.matmul %7, %4, %cst {dimension_numbers = #tpu.dot_dimension_numbers<[1], [0], [0], [1], [0, 0, 1, 1], [], []>} : vector<8x32xbf16>, vector<32x32xbf16>, vector<8x32xf32> -> vector<8x32xf32>
    %9 = vector.broadcast %6 : vector<1x32xf32> to vector<8x32xf32>
    %10 = arith.addf %8, %9 : vector<8x32xf32>
    %11 = vector.shape_cast %10 : vector<8x32xf32> to vector<1x8x32xf32>
    %12 = vector.shape_cast %11 : vector<1x8x32xf32> to vector<1x8x32xf32>
    %13 = vector.broadcast %12 : vector<1x8x32xf32> to vector<2x8x32xf32>
    %14 = vector.shape_cast %1 : vector<2x8x16xbf16> to vector<16x16xbf16>
    %c48 = arith.constant 48 : index
    %c0_7 = arith.constant 0 : index
    %15 = vector.load %arg2[%c48, %c0_7] : memref<816x128xbf16, #tpu.memory_space<vmem>>, vector<16x32xbf16>
    %c64 = arith.constant 64 : index
    %c0_8 = arith.constant 0 : index
    %16 = vector.load %arg2[%c64, %c0_8] : memref<816x128xbf16, #tpu.memory_space<vmem>>, vector<1x32xbf16>
    %17 = arith.extf %16 : vector<1x32xbf16> to vector<1x32xf32>
    %cst_9 = arith.constant dense<0.000000e+00> : vector<16x32xf32>
    %18 = tpu.matmul %14, %15, %cst_9 {dimension_numbers = #tpu.dot_dimension_numbers<[1], [0], [0], [1], [0, 0, 1, 1], [], []>} : vector<16x16xbf16>, vector<16x32xbf16>, vector<16x32xf32> -> vector<16x32xf32>
    %19 = vector.broadcast %17 : vector<1x32xf32> to vector<16x32xf32>
    %20 = arith.addf %18, %19 : vector<16x32xf32>
    %cst_10 = arith.constant 0.176776692 : f32
    %21 = vector.broadcast %cst_10 : f32 to vector<16x32xf32>
    %22 = arith.mulf %20, %21 : vector<16x32xf32>
    %23 = arith.truncf %22 : vector<16x32xf32> to vector<16x32xbf16>
    %24 = vector.shape_cast %23 : vector<16x32xbf16> to vector<2x8x32xbf16>
    %c72 = arith.constant 72 : index
    %c0_11 = arith.constant 0 : index
    %25 = vector.load %arg2[%c72, %c0_11] : memref<816x128xbf16, #tpu.memory_space<vmem>>, vector<16x32xbf16>
    %c88 = arith.constant 88 : index
    %c0_12 = arith.constant 0 : index
    %26 = vector.load %arg2[%c88, %c0_12] : memref<816x128xbf16, #tpu.memory_space<vmem>>, vector<1x32xbf16>
    %27 = arith.extf %26 : vector<1x32xbf16> to vector<1x32xf32>
    %cst_13 = arith.constant dense<0.000000e+00> : vector<16x32xf32>
    %28 = tpu.matmul %14, %25, %cst_13 {dimension_numbers = #tpu.dot_dimension_numbers<[1], [0], [0], [1], [0, 0, 1, 1], [], []>} : vector<16x16xbf16>, vector<16x32xbf16>, vector<16x32xf32> -> vector<16x32xf32>
    %29 = vector.broadcast %27 : vector<1x32xf32> to vector<16x32xf32>
    %30 = arith.addf %28, %29 : vector<16x32xf32>
    %31 = arith.truncf %30 : vector<16x32xf32> to vector<16x32xbf16>
    %32 = vector.shape_cast %31 : vector<16x32xbf16> to vector<2x8x32xbf16>
    %33 = arith.truncf %13 : vector<2x8x32xf32> to vector<2x8x32xbf16>
    %34 = vector.extract_strided_slice %33 {offsets = [0, 0, 0], sizes = [2, 8, 8], strides = [1, 1, 1]} : vector<2x8x32xbf16> to vector<2x8x8xbf16>
    %35 = vector.extract_strided_slice %24 {offsets = [0, 0, 0], sizes = [2, 8, 8], strides = [1, 1, 1]} : vector<2x8x32xbf16> to vector<2x8x8xbf16>
    %cst_14 = arith.constant dense<0.000000e+00> : vector<2x8x8xf32>
    %36 = tpu.matmul %34, %35, %cst_14 {dimension_numbers = #tpu.dot_dimension_numbers<[2], [2], [1], [1], [0, 0, 0, 1, 1, 1], [0], [0]>} : vector<2x8x8xbf16>, vector<2x8x8xbf16>, vector<2x8x8xf32> -> vector<2x8x8xf32>
    %cst_15 = arith.constant dense<0xFF800000> : vector<2x8xf32>
    %37 = vector.multi_reduction <maximumf>, %36, %cst_15 [2] : vector<2x8x8xf32> to vector<2x8xf32>
    %38 = vector.shape_cast %37 : vector<2x8xf32> to vector<2x8x1xf32>
    %39 = vector.broadcast %38 : vector<2x8x1xf32> to vector<2x8x8xf32>
    %40 = arith.subf %36, %39 : vector<2x8x8xf32>
    %41 = math.exp %40 : vector<2x8x8xf32>
    %cst_16 = arith.constant dense<0.000000e+00> : vector<2x8xf32>
    %42 = vector.multi_reduction <add>, %41, %cst_16 [2] : vector<2x8x8xf32> to vector<2x8xf32>
    %43 = vector.shape_cast %42 : vector<2x8xf32> to vector<2x8x1xf32>
    %44 = tpu.reciprocal %43 {approx = true} : vector<2x8x1xf32> -> vector<2x8x1xf32>
    %45 = vector.broadcast %44 : vector<2x8x1xf32> to vector<2x8x8xf32>
    %46 = arith.mulf %41, %45 : vector<2x8x8xf32>
    %47 = arith.truncf %46 : vector<2x8x8xf32> to vector<2x8x8xbf16>
    %48 = vector.extract_strided_slice %13 {offsets = [0, 0, 0], sizes = [2, 8, 8], strides = [1, 1, 1]} : vector<2x8x32xf32> to vector<2x8x8xf32>
    %49 = vector.extract_strided_slice %32 {offsets = [0, 0, 0], sizes = [2, 8, 8], strides = [1, 1, 1]} : vector<2x8x32xbf16> to vector<2x8x8xbf16>
    %cst_17 = arith.constant dense<0.000000e+00> : vector<2x8x8xf32>
    %50 = tpu.matmul %47, %49, %cst_17 {dimension_numbers = #tpu.dot_dimension_numbers<[2], [1], [1], [2], [0, 0, 0, 1, 1, 2], [0], [0]>} : vector<2x8x8xbf16>, vector<2x8x8xbf16>, vector<2x8x8xf32> -> vector<2x8x8xf32>
    %51 = arith.addf %48, %50 : vector<2x8x8xf32>
    %52 = vector.extract_strided_slice %33 {offsets = [0, 0, 8], sizes = [2, 8, 8], strides = [1, 1, 1]} : vector<2x8x32xbf16> to vector<2x8x8xbf16>
    %53 = vector.extract_strided_slice %24 {offsets = [0, 0, 8], sizes = [2, 8, 8], strides = [1, 1, 1]} : vector<2x8x32xbf16> to vector<2x8x8xbf16>
    %cst_18 = arith.constant dense<0.000000e+00> : vector<2x8x8xf32>
    %54 = tpu.matmul %52, %53, %cst_18 {dimension_numbers = #tpu.dot_dimension_numbers<[2], [2], [1], [1], [0, 0, 0, 1, 1, 1], [0], [0]>} : vector<2x8x8xbf16>, vector<2x8x8xbf16>, vector<2x8x8xf32> -> vector<2x8x8xf32>
    %cst_19 = arith.constant dense<0xFF800000> : vector<2x8xf32>
    %55 = vector.multi_reduction <maximumf>, %54, %cst_19 [2] : vector<2x8x8xf32> to vector<2x8xf32>
    %56 = vector.shape_cast %55 : vector<2x8xf32> to vector<2x8x1xf32>
    %57 = vector.broadcast %56 : vector<2x8x1xf32> to vector<2x8x8xf32>
    %58 = arith.subf %54, %57 : vector<2x8x8xf32>
    %59 = math.exp %58 : vector<2x8x8xf32>
    %cst_20 = arith.constant dense<0.000000e+00> : vector<2x8xf32>
    %60 = vector.multi_reduction <add>, %59, %cst_20 [2] : vector<2x8x8xf32> to vector<2x8xf32>
    %61 = vector.shape_cast %60 : vector<2x8xf32> to vector<2x8x1xf32>
    %62 = tpu.reciprocal %61 {approx = true} : vector<2x8x1xf32> -> vector<2x8x1xf32>
    %63 = vector.broadcast %62 : vector<2x8x1xf32> to vector<2x8x8xf32>
    %64 = arith.mulf %59, %63 : vector<2x8x8xf32>
    %65 = arith.truncf %64 : vector<2x8x8xf32> to vector<2x8x8xbf16>
    %66 = vector.extract_strided_slice %13 {offsets = [0, 0, 8], sizes = [2, 8, 8], strides = [1, 1, 1]} : vector<2x8x32xf32> to vector<2x8x8xf32>
    %67 = vector.extract_strided_slice %32 {offsets = [0, 0, 8], sizes = [2, 8, 8], strides = [1, 1, 1]} : vector<2x8x32xbf16> to vector<2x8x8xbf16>
    %cst_21 = arith.constant dense<0.000000e+00> : vector<2x8x8xf32>
    %68 = tpu.matmul %65, %67, %cst_21 {dimension_numbers = #tpu.dot_dimension_numbers<[2], [1], [1], [2], [0, 0, 0, 1, 1, 2], [0], [0]>} : vector<2x8x8xbf16>, vector<2x8x8xbf16>, vector<2x8x8xf32> -> vector<2x8x8xf32>
    %69 = arith.addf %66, %68 : vector<2x8x8xf32>
    %70 = vector.extract_strided_slice %33 {offsets = [0, 0, 16], sizes = [2, 8, 8], strides = [1, 1, 1]} : vector<2x8x32xbf16> to vector<2x8x8xbf16>
    %71 = vector.extract_strided_slice %24 {offsets = [0, 0, 16], sizes = [2, 8, 8], strides = [1, 1, 1]} : vector<2x8x32xbf16> to vector<2x8x8xbf16>
    %cst_22 = arith.constant dense<0.000000e+00> : vector<2x8x8xf32>
    %72 = tpu.matmul %70, %71, %cst_22 {dimension_numbers = #tpu.dot_dimension_numbers<[2], [2], [1], [1], [0, 0, 0, 1, 1, 1], [0], [0]>} : vector<2x8x8xbf16>, vector<2x8x8xbf16>, vector<2x8x8xf32> -> vector<2x8x8xf32>
    %cst_23 = arith.constant dense<0xFF800000> : vector<2x8xf32>
    %73 = vector.multi_reduction <maximumf>, %72, %cst_23 [2] : vector<2x8x8xf32> to vector<2x8xf32>
    %74 = vector.shape_cast %73 : vector<2x8xf32> to vector<2x8x1xf32>
    %75 = vector.broadcast %74 : vector<2x8x1xf32> to vector<2x8x8xf32>
    %76 = arith.subf %72, %75 : vector<2x8x8xf32>
    %77 = math.exp %76 : vector<2x8x8xf32>
    %cst_24 = arith.constant dense<0.000000e+00> : vector<2x8xf32>
    %78 = vector.multi_reduction <add>, %77, %cst_24 [2] : vector<2x8x8xf32> to vector<2x8xf32>
    %79 = vector.shape_cast %78 : vector<2x8xf32> to vector<2x8x1xf32>
    %80 = tpu.reciprocal %79 {approx = true} : vector<2x8x1xf32> -> vector<2x8x1xf32>
    %81 = vector.broadcast %80 : vector<2x8x1xf32> to vector<2x8x8xf32>
    %82 = arith.mulf %77, %81 : vector<2x8x8xf32>
    %83 = arith.truncf %82 : vector<2x8x8xf32> to vector<2x8x8xbf16>
    %84 = vector.extract_strided_slice %13 {offsets = [0, 0, 16], sizes = [2, 8, 8], strides = [1, 1, 1]} : vector<2x8x32xf32> to vector<2x8x8xf32>
    %85 = vector.extract_strided_slice %32 {offsets = [0, 0, 16], sizes = [2, 8, 8], strides = [1, 1, 1]} : vector<2x8x32xbf16> to vector<2x8x8xbf16>
    %cst_25 = arith.constant dense<0.000000e+00> : vector<2x8x8xf32>
    %86 = tpu.matmul %83, %85, %cst_25 {dimension_numbers = #tpu.dot_dimension_numbers<[2], [1], [1], [2], [0, 0, 0, 1, 1, 2], [0], [0]>} : vector<2x8x8xbf16>, vector<2x8x8xbf16>, vector<2x8x8xf32> -> vector<2x8x8xf32>
    %87 = arith.addf %84, %86 : vector<2x8x8xf32>
    %88 = vector.extract_strided_slice %33 {offsets = [0, 0, 24], sizes = [2, 8, 8], strides = [1, 1, 1]} : vector<2x8x32xbf16> to vector<2x8x8xbf16>
    %89 = vector.extract_strided_slice %24 {offsets = [0, 0, 24], sizes = [2, 8, 8], strides = [1, 1, 1]} : vector<2x8x32xbf16> to vector<2x8x8xbf16>
    %cst_26 = arith.constant dense<0.000000e+00> : vector<2x8x8xf32>
    %90 = tpu.matmul %88, %89, %cst_26 {dimension_numbers = #tpu.dot_dimension_numbers<[2], [2], [1], [1], [0, 0, 0, 1, 1, 1], [0], [0]>} : vector<2x8x8xbf16>, vector<2x8x8xbf16>, vector<2x8x8xf32> -> vector<2x8x8xf32>
    %cst_27 = arith.constant dense<0xFF800000> : vector<2x8xf32>
    %91 = vector.multi_reduction <maximumf>, %90, %cst_27 [2] : vector<2x8x8xf32> to vector<2x8xf32>
    %92 = vector.shape_cast %91 : vector<2x8xf32> to vector<2x8x1xf32>
    %93 = vector.broadcast %92 : vector<2x8x1xf32> to vector<2x8x8xf32>
    %94 = arith.subf %90, %93 : vector<2x8x8xf32>
    %95 = math.exp %94 : vector<2x8x8xf32>
    %cst_28 = arith.constant dense<0.000000e+00> : vector<2x8xf32>
    %96 = vector.multi_reduction <add>, %95, %cst_28 [2] : vector<2x8x8xf32> to vector<2x8xf32>
    %97 = vector.shape_cast %96 : vector<2x8xf32> to vector<2x8x1xf32>
    %98 = tpu.reciprocal %97 {approx = true} : vector<2x8x1xf32> -> vector<2x8x1xf32>
    %99 = vector.broadcast %98 : vector<2x8x1xf32> to vector<2x8x8xf32>
    %100 = arith.mulf %95, %99 : vector<2x8x8xf32>
    %101 = arith.truncf %100 : vector<2x8x8xf32> to vector<2x8x8xbf16>
    %102 = vector.extract_strided_slice %13 {offsets = [0, 0, 24], sizes = [2, 8, 8], strides = [1, 1, 1]} : vector<2x8x32xf32> to vector<2x8x8xf32>
    %103 = vector.extract_strided_slice %32 {offsets = [0, 0, 24], sizes = [2, 8, 8], strides = [1, 1, 1]} : vector<2x8x32xbf16> to vector<2x8x8xbf16>
    %cst_29 = arith.constant dense<0.000000e+00> : vector<2x8x8xf32>
    %104 = tpu.matmul %101, %103, %cst_29 {dimension_numbers = #tpu.dot_dimension_numbers<[2], [1], [1], [2], [0, 0, 0, 1, 1, 2], [0], [0]>} : vector<2x8x8xbf16>, vector<2x8x8xbf16>, vector<2x8x8xf32> -> vector<2x8x8xf32>
    %105 = arith.addf %102, %104 : vector<2x8x8xf32>
    %106 = tpu.concatenate %51, %69, %87, %105 in 2 : vector<2x8x8xf32>, vector<2x8x8xf32>, vector<2x8x8xf32>, vector<2x8x8xf32> -> vector<2x8x32xf32>
    %c96 = arith.constant 96 : index
    %c0_30 = arith.constant 0 : index
    %107 = vector.load %arg2[%c96, %c0_30] : memref<816x128xbf16, #tpu.memory_space<vmem>>, vector<32x32xbf16>
    %c128 = arith.constant 128 : index
    %c0_31 = arith.constant 0 : index
    %108 = vector.load %arg2[%c128, %c0_31] : memref<816x128xbf16, #tpu.memory_space<vmem>>, vector<1x32xbf16>
    %109 = arith.extf %108 : vector<1x32xbf16> to vector<1x32xf32>
    %110 = vector.shape_cast %106 : vector<2x8x32xf32> to vector<16x32xf32>
    %111 = arith.truncf %110 : vector<16x32xf32> to vector<16x32xbf16>
    %cst_32 = arith.constant dense<0.000000e+00> : vector<16x32xf32>
    %112 = tpu.matmul %111, %107, %cst_32 {dimension_numbers = #tpu.dot_dimension_numbers<[1], [0], [0], [1], [0, 0, 1, 1], [], []>} : vector<16x32xbf16>, vector<32x32xbf16>, vector<16x32xf32> -> vector<16x32xf32>
    %113 = vector.broadcast %109 : vector<1x32xf32> to vector<16x32xf32>
    %114 = arith.addf %112, %113 : vector<16x32xf32>
    %cst_33 = arith.constant 0.000000e+00 : f32
    %115 = vector.broadcast %cst_33 : f32 to vector<16x32xf32>
    %116 = arith.maximumf %114, %115 : vector<16x32xf32>
    %117 = vector.shape_cast %116 : vector<16x32xf32> to vector<2x8x32xf32>
    %118 = arith.addf %106, %117 : vector<2x8x32xf32>
    %c136 = arith.constant 136 : index
    %c0_34 = arith.constant 0 : index
    %119 = vector.load %arg2[%c136, %c0_34] : memref<816x128xbf16, #tpu.memory_space<vmem>>, vector<16x32xbf16>
    %c152 = arith.constant 152 : index
    %c0_35 = arith.constant 0 : index
    %120 = vector.load %arg2[%c152, %c0_35] : memref<816x128xbf16, #tpu.memory_space<vmem>>, vector<1x32xbf16>
    %121 = arith.extf %120 : vector<1x32xbf16> to vector<1x32xf32>
    %122 = vector.shape_cast %1 : vector<2x8x16xbf16> to vector<16x16xbf16>
    %cst_36 = arith.constant dense<0.000000e+00> : vector<16x32xf32>
    %123 = tpu.matmul %122, %119, %cst_36 {dimension_numbers = #tpu.dot_dimension_numbers<[1], [0], [0], [1], [0, 0, 1, 1], [], []>} : vector<16x16xbf16>, vector<16x32xbf16>, vector<16x32xf32> -> vector<16x32xf32>
    %124 = vector.broadcast %121 : vector<1x32xf32> to vector<16x32xf32>
    %125 = arith.addf %123, %124 : vector<16x32xf32>
    %126 = vector.shape_cast %125 : vector<16x32xf32> to vector<2x8x32xf32>
    %127 = vector.shape_cast %118 : vector<2x8x32xf32> to vector<16x32xf32>
    %128 = arith.truncf %127 : vector<16x32xf32> to vector<16x32xbf16>
    %c160 = arith.constant 160 : index
    %c0_37 = arith.constant 0 : index
    %129 = vector.load %arg2[%c160, %c0_37] : memref<816x128xbf16, #tpu.memory_space<vmem>>, vector<32x32xbf16>
    %c192 = arith.constant 192 : index
    %c0_38 = arith.constant 0 : index
    %130 = vector.load %arg2[%c192, %c0_38] : memref<816x128xbf16, #tpu.memory_space<vmem>>, vector<1x32xbf16>
    %131 = arith.extf %130 : vector<1x32xbf16> to vector<1x32xf32>
    %cst_39 = arith.constant dense<0.000000e+00> : vector<16x32xf32>
    %132 = tpu.matmul %128, %129, %cst_39 {dimension_numbers = #tpu.dot_dimension_numbers<[1], [0], [0], [1], [0, 0, 1, 1], [], []>} : vector<16x32xbf16>, vector<32x32xbf16>, vector<16x32xf32> -> vector<16x32xf32>
    %133 = vector.broadcast %131 : vector<1x32xf32> to vector<16x32xf32>
    %134 = arith.addf %132, %133 : vector<16x32xf32>
    %cst_40 = arith.constant 0.176776692 : f32
    %135 = vector.broadcast %cst_40 : f32 to vector<16x32xf32>
    %136 = arith.mulf %134, %135 : vector<16x32xf32>
    %137 = arith.truncf %136 : vector<16x32xf32> to vector<16x32xbf16>
    %138 = vector.shape_cast %137 : vector<16x32xbf16> to vector<2x8x32xbf16>
    %c200 = arith.constant 200 : index
    %c0_41 = arith.constant 0 : index
    %139 = vector.load %arg2[%c200, %c0_41] : memref<816x128xbf16, #tpu.memory_space<vmem>>, vector<32x32xbf16>
    %c232 = arith.constant 232 : index
    %c0_42 = arith.constant 0 : index
    %140 = vector.load %arg2[%c232, %c0_42] : memref<816x128xbf16, #tpu.memory_space<vmem>>, vector<1x32xbf16>
    %141 = arith.extf %140 : vector<1x32xbf16> to vector<1x32xf32>
    %cst_43 = arith.constant dense<0.000000e+00> : vector<16x32xf32>
    %142 = tpu.matmul %128, %139, %cst_43 {dimension_numbers = #tpu.dot_dimension_numbers<[1], [0], [0], [1], [0, 0, 1, 1], [], []>} : vector<16x32xbf16>, vector<32x32xbf16>, vector<16x32xf32> -> vector<16x32xf32>
    %143 = vector.broadcast %141 : vector<1x32xf32> to vector<16x32xf32>
    %144 = arith.addf %142, %143 : vector<16x32xf32>
    %145 = arith.truncf %144 : vector<16x32xf32> to vector<16x32xbf16>
    %146 = vector.shape_cast %145 : vector<16x32xbf16> to vector<2x8x32xbf16>
    %147 = arith.truncf %126 : vector<2x8x32xf32> to vector<2x8x32xbf16>
    %148 = vector.extract_strided_slice %147 {offsets = [0, 0, 0], sizes = [2, 8, 8], strides = [1, 1, 1]} : vector<2x8x32xbf16> to vector<2x8x8xbf16>
    %149 = vector.extract_strided_slice %138 {offsets = [0, 0, 0], sizes = [2, 8, 8], strides = [1, 1, 1]} : vector<2x8x32xbf16> to vector<2x8x8xbf16>
    %cst_44 = arith.constant dense<0.000000e+00> : vector<2x8x8xf32>
    %150 = tpu.matmul %148, %149, %cst_44 {dimension_numbers = #tpu.dot_dimension_numbers<[2], [2], [1], [1], [0, 0, 0, 1, 1, 1], [0], [0]>} : vector<2x8x8xbf16>, vector<2x8x8xbf16>, vector<2x8x8xf32> -> vector<2x8x8xf32>
    %cst_45 = arith.constant dense<0xFF800000> : vector<2x8xf32>
    %151 = vector.multi_reduction <maximumf>, %150, %cst_45 [2] : vector<2x8x8xf32> to vector<2x8xf32>
    %152 = vector.shape_cast %151 : vector<2x8xf32> to vector<2x8x1xf32>
    %153 = vector.broadcast %152 : vector<2x8x1xf32> to vector<2x8x8xf32>
    %154 = arith.subf %150, %153 : vector<2x8x8xf32>
    %155 = math.exp %154 : vector<2x8x8xf32>
    %cst_46 = arith.constant dense<0.000000e+00> : vector<2x8xf32>
    %156 = vector.multi_reduction <add>, %155, %cst_46 [2] : vector<2x8x8xf32> to vector<2x8xf32>
    %157 = vector.shape_cast %156 : vector<2x8xf32> to vector<2x8x1xf32>
    %158 = tpu.reciprocal %157 {approx = true} : vector<2x8x1xf32> -> vector<2x8x1xf32>
    %159 = vector.broadcast %158 : vector<2x8x1xf32> to vector<2x8x8xf32>
    %160 = arith.mulf %155, %159 : vector<2x8x8xf32>
    %161 = arith.truncf %160 : vector<2x8x8xf32> to vector<2x8x8xbf16>
    %162 = vector.extract_strided_slice %126 {offsets = [0, 0, 0], sizes = [2, 8, 8], strides = [1, 1, 1]} : vector<2x8x32xf32> to vector<2x8x8xf32>
    %163 = vector.extract_strided_slice %146 {offsets = [0, 0, 0], sizes = [2, 8, 8], strides = [1, 1, 1]} : vector<2x8x32xbf16> to vector<2x8x8xbf16>
    %cst_47 = arith.constant dense<0.000000e+00> : vector<2x8x8xf32>
    %164 = tpu.matmul %161, %163, %cst_47 {dimension_numbers = #tpu.dot_dimension_numbers<[2], [1], [1], [2], [0, 0, 0, 1, 1, 2], [0], [0]>} : vector<2x8x8xbf16>, vector<2x8x8xbf16>, vector<2x8x8xf32> -> vector<2x8x8xf32>
    %165 = arith.addf %162, %164 : vector<2x8x8xf32>
    %166 = vector.extract_strided_slice %147 {offsets = [0, 0, 8], sizes = [2, 8, 8], strides = [1, 1, 1]} : vector<2x8x32xbf16> to vector<2x8x8xbf16>
    %167 = vector.extract_strided_slice %138 {offsets = [0, 0, 8], sizes = [2, 8, 8], strides = [1, 1, 1]} : vector<2x8x32xbf16> to vector<2x8x8xbf16>
    %cst_48 = arith.constant dense<0.000000e+00> : vector<2x8x8xf32>
    %168 = tpu.matmul %166, %167, %cst_48 {dimension_numbers = #tpu.dot_dimension_numbers<[2], [2], [1], [1], [0, 0, 0, 1, 1, 1], [0], [0]>} : vector<2x8x8xbf16>, vector<2x8x8xbf16>, vector<2x8x8xf32> -> vector<2x8x8xf32>
    %cst_49 = arith.constant dense<0xFF800000> : vector<2x8xf32>
    %169 = vector.multi_reduction <maximumf>, %168, %cst_49 [2] : vector<2x8x8xf32> to vector<2x8xf32>
    %170 = vector.shape_cast %169 : vector<2x8xf32> to vector<2x8x1xf32>
    %171 = vector.broadcast %170 : vector<2x8x1xf32> to vector<2x8x8xf32>
    %172 = arith.subf %168, %171 : vector<2x8x8xf32>
    %173 = math.exp %172 : vector<2x8x8xf32>
    %cst_50 = arith.constant dense<0.000000e+00> : vector<2x8xf32>
    %174 = vector.multi_reduction <add>, %173, %cst_50 [2] : vector<2x8x8xf32> to vector<2x8xf32>
    %175 = vector.shape_cast %174 : vector<2x8xf32> to vector<2x8x1xf32>
    %176 = tpu.reciprocal %175 {approx = true} : vector<2x8x1xf32> -> vector<2x8x1xf32>
    %177 = vector.broadcast %176 : vector<2x8x1xf32> to vector<2x8x8xf32>
    %178 = arith.mulf %173, %177 : vector<2x8x8xf32>
    %179 = arith.truncf %178 : vector<2x8x8xf32> to vector<2x8x8xbf16>
    %180 = vector.extract_strided_slice %126 {offsets = [0, 0, 8], sizes = [2, 8, 8], strides = [1, 1, 1]} : vector<2x8x32xf32> to vector<2x8x8xf32>
    %181 = vector.extract_strided_slice %146 {offsets = [0, 0, 8], sizes = [2, 8, 8], strides = [1, 1, 1]} : vector<2x8x32xbf16> to vector<2x8x8xbf16>
    %cst_51 = arith.constant dense<0.000000e+00> : vector<2x8x8xf32>
    %182 = tpu.matmul %179, %181, %cst_51 {dimension_numbers = #tpu.dot_dimension_numbers<[2], [1], [1], [2], [0, 0, 0, 1, 1, 2], [0], [0]>} : vector<2x8x8xbf16>, vector<2x8x8xbf16>, vector<2x8x8xf32> -> vector<2x8x8xf32>
    %183 = arith.addf %180, %182 : vector<2x8x8xf32>
    %184 = vector.extract_strided_slice %147 {offsets = [0, 0, 16], sizes = [2, 8, 8], strides = [1, 1, 1]} : vector<2x8x32xbf16> to vector<2x8x8xbf16>
    %185 = vector.extract_strided_slice %138 {offsets = [0, 0, 16], sizes = [2, 8, 8], strides = [1, 1, 1]} : vector<2x8x32xbf16> to vector<2x8x8xbf16>
    %cst_52 = arith.constant dense<0.000000e+00> : vector<2x8x8xf32>
    %186 = tpu.matmul %184, %185, %cst_52 {dimension_numbers = #tpu.dot_dimension_numbers<[2], [2], [1], [1], [0, 0, 0, 1, 1, 1], [0], [0]>} : vector<2x8x8xbf16>, vector<2x8x8xbf16>, vector<2x8x8xf32> -> vector<2x8x8xf32>
    %cst_53 = arith.constant dense<0xFF800000> : vector<2x8xf32>
    %187 = vector.multi_reduction <maximumf>, %186, %cst_53 [2] : vector<2x8x8xf32> to vector<2x8xf32>
    %188 = vector.shape_cast %187 : vector<2x8xf32> to vector<2x8x1xf32>
    %189 = vector.broadcast %188 : vector<2x8x1xf32> to vector<2x8x8xf32>
    %190 = arith.subf %186, %189 : vector<2x8x8xf32>
    %191 = math.exp %190 : vector<2x8x8xf32>
    %cst_54 = arith.constant dense<0.000000e+00> : vector<2x8xf32>
    %192 = vector.multi_reduction <add>, %191, %cst_54 [2] : vector<2x8x8xf32> to vector<2x8xf32>
    %193 = vector.shape_cast %192 : vector<2x8xf32> to vector<2x8x1xf32>
    %194 = tpu.reciprocal %193 {approx = true} : vector<2x8x1xf32> -> vector<2x8x1xf32>
    %195 = vector.broadcast %194 : vector<2x8x1xf32> to vector<2x8x8xf32>
    %196 = arith.mulf %191, %195 : vector<2x8x8xf32>
    %197 = arith.truncf %196 : vector<2x8x8xf32> to vector<2x8x8xbf16>
    %198 = vector.extract_strided_slice %126 {offsets = [0, 0, 16], sizes = [2, 8, 8], strides = [1, 1, 1]} : vector<2x8x32xf32> to vector<2x8x8xf32>
    %199 = vector.extract_strided_slice %146 {offsets = [0, 0, 16], sizes = [2, 8, 8], strides = [1, 1, 1]} : vector<2x8x32xbf16> to vector<2x8x8xbf16>
    %cst_55 = arith.constant dense<0.000000e+00> : vector<2x8x8xf32>
    %200 = tpu.matmul %197, %199, %cst_55 {dimension_numbers = #tpu.dot_dimension_numbers<[2], [1], [1], [2], [0, 0, 0, 1, 1, 2], [0], [0]>} : vector<2x8x8xbf16>, vector<2x8x8xbf16>, vector<2x8x8xf32> -> vector<2x8x8xf32>
    %201 = arith.addf %198, %200 : vector<2x8x8xf32>
    %202 = vector.extract_strided_slice %147 {offsets = [0, 0, 24], sizes = [2, 8, 8], strides = [1, 1, 1]} : vector<2x8x32xbf16> to vector<2x8x8xbf16>
    %203 = vector.extract_strided_slice %138 {offsets = [0, 0, 24], sizes = [2, 8, 8], strides = [1, 1, 1]} : vector<2x8x32xbf16> to vector<2x8x8xbf16>
    %cst_56 = arith.constant dense<0.000000e+00> : vector<2x8x8xf32>
    %204 = tpu.matmul %202, %203, %cst_56 {dimension_numbers = #tpu.dot_dimension_numbers<[2], [2], [1], [1], [0, 0, 0, 1, 1, 1], [0], [0]>} : vector<2x8x8xbf16>, vector<2x8x8xbf16>, vector<2x8x8xf32> -> vector<2x8x8xf32>
    %cst_57 = arith.constant dense<0xFF800000> : vector<2x8xf32>
    %205 = vector.multi_reduction <maximumf>, %204, %cst_57 [2] : vector<2x8x8xf32> to vector<2x8xf32>
    %206 = vector.shape_cast %205 : vector<2x8xf32> to vector<2x8x1xf32>
    %207 = vector.broadcast %206 : vector<2x8x1xf32> to vector<2x8x8xf32>
    %208 = arith.subf %204, %207 : vector<2x8x8xf32>
    %209 = math.exp %208 : vector<2x8x8xf32>
    %cst_58 = arith.constant dense<0.000000e+00> : vector<2x8xf32>
    %210 = vector.multi_reduction <add>, %209, %cst_58 [2] : vector<2x8x8xf32> to vector<2x8xf32>
    %211 = vector.shape_cast %210 : vector<2x8xf32> to vector<2x8x1xf32>
    %212 = tpu.reciprocal %211 {approx = true} : vector<2x8x1xf32> -> vector<2x8x1xf32>
    %213 = vector.broadcast %212 : vector<2x8x1xf32> to vector<2x8x8xf32>
    %214 = arith.mulf %209, %213 : vector<2x8x8xf32>
    %215 = arith.truncf %214 : vector<2x8x8xf32> to vector<2x8x8xbf16>
    %216 = vector.extract_strided_slice %126 {offsets = [0, 0, 24], sizes = [2, 8, 8], strides = [1, 1, 1]} : vector<2x8x32xf32> to vector<2x8x8xf32>
    %217 = vector.extract_strided_slice %146 {offsets = [0, 0, 24], sizes = [2, 8, 8], strides = [1, 1, 1]} : vector<2x8x32xbf16> to vector<2x8x8xbf16>
    %cst_59 = arith.constant dense<0.000000e+00> : vector<2x8x8xf32>
    %218 = tpu.matmul %215, %217, %cst_59 {dimension_numbers = #tpu.dot_dimension_numbers<[2], [1], [1], [2], [0, 0, 0, 1, 1, 2], [0], [0]>} : vector<2x8x8xbf16>, vector<2x8x8xbf16>, vector<2x8x8xf32> -> vector<2x8x8xf32>
    %219 = arith.addf %216, %218 : vector<2x8x8xf32>
    %220 = tpu.concatenate %165, %183, %201, %219 in 2 : vector<2x8x8xf32>, vector<2x8x8xf32>, vector<2x8x8xf32>, vector<2x8x8xf32> -> vector<2x8x32xf32>
    %c240 = arith.constant 240 : index
    %c0_60 = arith.constant 0 : index
    %221 = vector.load %arg2[%c240, %c0_60] : memref<816x128xbf16, #tpu.memory_space<vmem>>, vector<32x32xbf16>
    %c272 = arith.constant 272 : index
    %c0_61 = arith.constant 0 : index
    %222 = vector.load %arg2[%c272, %c0_61] : memref<816x128xbf16, #tpu.memory_space<vmem>>, vector<1x32xbf16>
    %223 = arith.extf %222 : vector<1x32xbf16> to vector<1x32xf32>
    %224 = vector.shape_cast %220 : vector<2x8x32xf32> to vector<16x32xf32>
    %225 = arith.truncf %224 : vector<16x32xf32> to vector<16x32xbf16>
    %cst_62 = arith.constant dense<0.000000e+00> : vector<16x32xf32>
    %226 = tpu.matmul %225, %221, %cst_62 {dimension_numbers = #tpu.dot_dimension_numbers<[1], [0], [0], [1], [0, 0, 1, 1], [], []>} : vector<16x32xbf16>, vector<32x32xbf16>, vector<16x32xf32> -> vector<16x32xf32>
    %227 = vector.broadcast %223 : vector<1x32xf32> to vector<16x32xf32>
    %228 = arith.addf %226, %227 : vector<16x32xf32>
    %cst_63 = arith.constant 0.000000e+00 : f32
    %229 = vector.broadcast %cst_63 : f32 to vector<16x32xf32>
    %230 = arith.maximumf %228, %229 : vector<16x32xf32>
    %231 = vector.shape_cast %230 : vector<16x32xf32> to vector<2x8x32xf32>
    %232 = arith.addf %220, %231 : vector<2x8x32xf32>
    %c280 = arith.constant 280 : index
    %c0_64 = arith.constant 0 : index
    %233 = vector.load %arg2[%c280, %c0_64] : memref<816x128xbf16, #tpu.memory_space<vmem>>, vector<8x32xbf16>
    %234 = vector.shape_cast %233 : vector<8x32xbf16> to vector<1x8x32xbf16>
    %c288 = arith.constant 288 : index
    %c0_65 = arith.constant 0 : index
    %235 = vector.load %arg2[%c288, %c0_65] : memref<816x128xbf16, #tpu.memory_space<vmem>>, vector<32x32xbf16>
    %c320 = arith.constant 320 : index
    %c0_66 = arith.constant 0 : index
    %236 = vector.load %arg2[%c320, %c0_66] : memref<816x128xbf16, #tpu.memory_space<vmem>>, vector<1x32xbf16>
    %237 = arith.extf %236 : vector<1x32xbf16> to vector<1x32xf32>
    %238 = vector.shape_cast %234 : vector<1x8x32xbf16> to vector<8x32xbf16>
    %cst_67 = arith.constant dense<0.000000e+00> : vector<8x32xf32>
    %239 = tpu.matmul %238, %235, %cst_67 {dimension_numbers = #tpu.dot_dimension_numbers<[1], [0], [0], [1], [0, 0, 1, 1], [], []>} : vector<8x32xbf16>, vector<32x32xbf16>, vector<8x32xf32> -> vector<8x32xf32>
    %240 = vector.broadcast %237 : vector<1x32xf32> to vector<8x32xf32>
    %241 = arith.addf %239, %240 : vector<8x32xf32>
    %242 = vector.shape_cast %241 : vector<8x32xf32> to vector<1x8x32xf32>
    %243 = vector.shape_cast %242 : vector<1x8x32xf32> to vector<1x8x32xf32>
    %244 = vector.broadcast %243 : vector<1x8x32xf32> to vector<2x8x32xf32>
    %245 = vector.shape_cast %232 : vector<2x8x32xf32> to vector<16x32xf32>
    %246 = arith.truncf %245 : vector<16x32xf32> to vector<16x32xbf16>
    %c328 = arith.constant 328 : index
    %c0_68 = arith.constant 0 : index
    %247 = vector.load %arg2[%c328, %c0_68] : memref<816x128xbf16, #tpu.memory_space<vmem>>, vector<32x32xbf16>
    %c360 = arith.constant 360 : index
    %c0_69 = arith.constant 0 : index
    %248 = vector.load %arg2[%c360, %c0_69] : memref<816x128xbf16, #tpu.memory_space<vmem>>, vector<1x32xbf16>
    %249 = arith.extf %248 : vector<1x32xbf16> to vector<1x32xf32>
    %cst_70 = arith.constant dense<0.000000e+00> : vector<16x32xf32>
    %250 = tpu.matmul %246, %247, %cst_70 {dimension_numbers = #tpu.dot_dimension_numbers<[1], [0], [0], [1], [0, 0, 1, 1], [], []>} : vector<16x32xbf16>, vector<32x32xbf16>, vector<16x32xf32> -> vector<16x32xf32>
    %251 = vector.broadcast %249 : vector<1x32xf32> to vector<16x32xf32>
    %252 = arith.addf %250, %251 : vector<16x32xf32>
    %cst_71 = arith.constant 0.176776692 : f32
    %253 = vector.broadcast %cst_71 : f32 to vector<16x32xf32>
    %254 = arith.mulf %252, %253 : vector<16x32xf32>
    %255 = arith.truncf %254 : vector<16x32xf32> to vector<16x32xbf16>
    %256 = vector.shape_cast %255 : vector<16x32xbf16> to vector<2x8x32xbf16>
    %c368 = arith.constant 368 : index
    %c0_72 = arith.constant 0 : index
    %257 = vector.load %arg2[%c368, %c0_72] : memref<816x128xbf16, #tpu.memory_space<vmem>>, vector<32x32xbf16>
    %c400 = arith.constant 400 : index
    %c0_73 = arith.constant 0 : index
    %258 = vector.load %arg2[%c400, %c0_73] : memref<816x128xbf16, #tpu.memory_space<vmem>>, vector<1x32xbf16>
    %259 = arith.extf %258 : vector<1x32xbf16> to vector<1x32xf32>
    %cst_74 = arith.constant dense<0.000000e+00> : vector<16x32xf32>
    %260 = tpu.matmul %246, %257, %cst_74 {dimension_numbers = #tpu.dot_dimension_numbers<[1], [0], [0], [1], [0, 0, 1, 1], [], []>} : vector<16x32xbf16>, vector<32x32xbf16>, vector<16x32xf32> -> vector<16x32xf32>
    %261 = vector.broadcast %259 : vector<1x32xf32> to vector<16x32xf32>
    %262 = arith.addf %260, %261 : vector<16x32xf32>
    %263 = arith.truncf %262 : vector<16x32xf32> to vector<16x32xbf16>
    %264 = vector.shape_cast %263 : vector<16x32xbf16> to vector<2x8x32xbf16>
    %265 = arith.truncf %244 : vector<2x8x32xf32> to vector<2x8x32xbf16>
    %266 = vector.extract_strided_slice %265 {offsets = [0, 0, 0], sizes = [2, 8, 8], strides = [1, 1, 1]} : vector<2x8x32xbf16> to vector<2x8x8xbf16>
    %267 = vector.extract_strided_slice %256 {offsets = [0, 0, 0], sizes = [2, 8, 8], strides = [1, 1, 1]} : vector<2x8x32xbf16> to vector<2x8x8xbf16>
    %cst_75 = arith.constant dense<0.000000e+00> : vector<2x8x8xf32>
    %268 = tpu.matmul %266, %267, %cst_75 {dimension_numbers = #tpu.dot_dimension_numbers<[2], [2], [1], [1], [0, 0, 0, 1, 1, 1], [0], [0]>} : vector<2x8x8xbf16>, vector<2x8x8xbf16>, vector<2x8x8xf32> -> vector<2x8x8xf32>
    %cst_76 = arith.constant dense<0xFF800000> : vector<2x8xf32>
    %269 = vector.multi_reduction <maximumf>, %268, %cst_76 [2] : vector<2x8x8xf32> to vector<2x8xf32>
    %270 = vector.shape_cast %269 : vector<2x8xf32> to vector<2x8x1xf32>
    %271 = vector.broadcast %270 : vector<2x8x1xf32> to vector<2x8x8xf32>
    %272 = arith.subf %268, %271 : vector<2x8x8xf32>
    %273 = math.exp %272 : vector<2x8x8xf32>
    %cst_77 = arith.constant dense<0.000000e+00> : vector<2x8xf32>
    %274 = vector.multi_reduction <add>, %273, %cst_77 [2] : vector<2x8x8xf32> to vector<2x8xf32>
    %275 = vector.shape_cast %274 : vector<2x8xf32> to vector<2x8x1xf32>
    %276 = tpu.reciprocal %275 {approx = true} : vector<2x8x1xf32> -> vector<2x8x1xf32>
    %277 = vector.broadcast %276 : vector<2x8x1xf32> to vector<2x8x8xf32>
    %278 = arith.mulf %273, %277 : vector<2x8x8xf32>
    %279 = arith.truncf %278 : vector<2x8x8xf32> to vector<2x8x8xbf16>
    %280 = vector.extract_strided_slice %244 {offsets = [0, 0, 0], sizes = [2, 8, 8], strides = [1, 1, 1]} : vector<2x8x32xf32> to vector<2x8x8xf32>
    %281 = vector.extract_strided_slice %264 {offsets = [0, 0, 0], sizes = [2, 8, 8], strides = [1, 1, 1]} : vector<2x8x32xbf16> to vector<2x8x8xbf16>
    %cst_78 = arith.constant dense<0.000000e+00> : vector<2x8x8xf32>
    %282 = tpu.matmul %279, %281, %cst_78 {dimension_numbers = #tpu.dot_dimension_numbers<[2], [1], [1], [2], [0, 0, 0, 1, 1, 2], [0], [0]>} : vector<2x8x8xbf16>, vector<2x8x8xbf16>, vector<2x8x8xf32> -> vector<2x8x8xf32>
    %283 = arith.addf %280, %282 : vector<2x8x8xf32>
    %284 = vector.extract_strided_slice %265 {offsets = [0, 0, 8], sizes = [2, 8, 8], strides = [1, 1, 1]} : vector<2x8x32xbf16> to vector<2x8x8xbf16>
    %285 = vector.extract_strided_slice %256 {offsets = [0, 0, 8], sizes = [2, 8, 8], strides = [1, 1, 1]} : vector<2x8x32xbf16> to vector<2x8x8xbf16>
    %cst_79 = arith.constant dense<0.000000e+00> : vector<2x8x8xf32>
    %286 = tpu.matmul %284, %285, %cst_79 {dimension_numbers = #tpu.dot_dimension_numbers<[2], [2], [1], [1], [0, 0, 0, 1, 1, 1], [0], [0]>} : vector<2x8x8xbf16>, vector<2x8x8xbf16>, vector<2x8x8xf32> -> vector<2x8x8xf32>
    %cst_80 = arith.constant dense<0xFF800000> : vector<2x8xf32>
    %287 = vector.multi_reduction <maximumf>, %286, %cst_80 [2] : vector<2x8x8xf32> to vector<2x8xf32>
    %288 = vector.shape_cast %287 : vector<2x8xf32> to vector<2x8x1xf32>
    %289 = vector.broadcast %288 : vector<2x8x1xf32> to vector<2x8x8xf32>
    %290 = arith.subf %286, %289 : vector<2x8x8xf32>
    %291 = math.exp %290 : vector<2x8x8xf32>
    %cst_81 = arith.constant dense<0.000000e+00> : vector<2x8xf32>
    %292 = vector.multi_reduction <add>, %291, %cst_81 [2] : vector<2x8x8xf32> to vector<2x8xf32>
    %293 = vector.shape_cast %292 : vector<2x8xf32> to vector<2x8x1xf32>
    %294 = tpu.reciprocal %293 {approx = true} : vector<2x8x1xf32> -> vector<2x8x1xf32>
    %295 = vector.broadcast %294 : vector<2x8x1xf32> to vector<2x8x8xf32>
    %296 = arith.mulf %291, %295 : vector<2x8x8xf32>
    %297 = arith.truncf %296 : vector<2x8x8xf32> to vector<2x8x8xbf16>
    %298 = vector.extract_strided_slice %244 {offsets = [0, 0, 8], sizes = [2, 8, 8], strides = [1, 1, 1]} : vector<2x8x32xf32> to vector<2x8x8xf32>
    %299 = vector.extract_strided_slice %264 {offsets = [0, 0, 8], sizes = [2, 8, 8], strides = [1, 1, 1]} : vector<2x8x32xbf16> to vector<2x8x8xbf16>
    %cst_82 = arith.constant dense<0.000000e+00> : vector<2x8x8xf32>
    %300 = tpu.matmul %297, %299, %cst_82 {dimension_numbers = #tpu.dot_dimension_numbers<[2], [1], [1], [2], [0, 0, 0, 1, 1, 2], [0], [0]>} : vector<2x8x8xbf16>, vector<2x8x8xbf16>, vector<2x8x8xf32> -> vector<2x8x8xf32>
    %301 = arith.addf %298, %300 : vector<2x8x8xf32>
    %302 = vector.extract_strided_slice %265 {offsets = [0, 0, 16], sizes = [2, 8, 8], strides = [1, 1, 1]} : vector<2x8x32xbf16> to vector<2x8x8xbf16>
    %303 = vector.extract_strided_slice %256 {offsets = [0, 0, 16], sizes = [2, 8, 8], strides = [1, 1, 1]} : vector<2x8x32xbf16> to vector<2x8x8xbf16>
    %cst_83 = arith.constant dense<0.000000e+00> : vector<2x8x8xf32>
    %304 = tpu.matmul %302, %303, %cst_83 {dimension_numbers = #tpu.dot_dimension_numbers<[2], [2], [1], [1], [0, 0, 0, 1, 1, 1], [0], [0]>} : vector<2x8x8xbf16>, vector<2x8x8xbf16>, vector<2x8x8xf32> -> vector<2x8x8xf32>
    %cst_84 = arith.constant dense<0xFF800000> : vector<2x8xf32>
    %305 = vector.multi_reduction <maximumf>, %304, %cst_84 [2] : vector<2x8x8xf32> to vector<2x8xf32>
    %306 = vector.shape_cast %305 : vector<2x8xf32> to vector<2x8x1xf32>
    %307 = vector.broadcast %306 : vector<2x8x1xf32> to vector<2x8x8xf32>
    %308 = arith.subf %304, %307 : vector<2x8x8xf32>
    %309 = math.exp %308 : vector<2x8x8xf32>
    %cst_85 = arith.constant dense<0.000000e+00> : vector<2x8xf32>
    %310 = vector.multi_reduction <add>, %309, %cst_85 [2] : vector<2x8x8xf32> to vector<2x8xf32>
    %311 = vector.shape_cast %310 : vector<2x8xf32> to vector<2x8x1xf32>
    %312 = tpu.reciprocal %311 {approx = true} : vector<2x8x1xf32> -> vector<2x8x1xf32>
    %313 = vector.broadcast %312 : vector<2x8x1xf32> to vector<2x8x8xf32>
    %314 = arith.mulf %309, %313 : vector<2x8x8xf32>
    %315 = arith.truncf %314 : vector<2x8x8xf32> to vector<2x8x8xbf16>
    %316 = vector.extract_strided_slice %244 {offsets = [0, 0, 16], sizes = [2, 8, 8], strides = [1, 1, 1]} : vector<2x8x32xf32> to vector<2x8x8xf32>
    %317 = vector.extract_strided_slice %264 {offsets = [0, 0, 16], sizes = [2, 8, 8], strides = [1, 1, 1]} : vector<2x8x32xbf16> to vector<2x8x8xbf16>
    %cst_86 = arith.constant dense<0.000000e+00> : vector<2x8x8xf32>
    %318 = tpu.matmul %315, %317, %cst_86 {dimension_numbers = #tpu.dot_dimension_numbers<[2], [1], [1], [2], [0, 0, 0, 1, 1, 2], [0], [0]>} : vector<2x8x8xbf16>, vector<2x8x8xbf16>, vector<2x8x8xf32> -> vector<2x8x8xf32>
    %319 = arith.addf %316, %318 : vector<2x8x8xf32>
    %320 = vector.extract_strided_slice %265 {offsets = [0, 0, 24], sizes = [2, 8, 8], strides = [1, 1, 1]} : vector<2x8x32xbf16> to vector<2x8x8xbf16>
    %321 = vector.extract_strided_slice %256 {offsets = [0, 0, 24], sizes = [2, 8, 8], strides = [1, 1, 1]} : vector<2x8x32xbf16> to vector<2x8x8xbf16>
    %cst_87 = arith.constant dense<0.000000e+00> : vector<2x8x8xf32>
    %322 = tpu.matmul %320, %321, %cst_87 {dimension_numbers = #tpu.dot_dimension_numbers<[2], [2], [1], [1], [0, 0, 0, 1, 1, 1], [0], [0]>} : vector<2x8x8xbf16>, vector<2x8x8xbf16>, vector<2x8x8xf32> -> vector<2x8x8xf32>
    %cst_88 = arith.constant dense<0xFF800000> : vector<2x8xf32>
    %323 = vector.multi_reduction <maximumf>, %322, %cst_88 [2] : vector<2x8x8xf32> to vector<2x8xf32>
    %324 = vector.shape_cast %323 : vector<2x8xf32> to vector<2x8x1xf32>
    %325 = vector.broadcast %324 : vector<2x8x1xf32> to vector<2x8x8xf32>
    %326 = arith.subf %322, %325 : vector<2x8x8xf32>
    %327 = math.exp %326 : vector<2x8x8xf32>
    %cst_89 = arith.constant dense<0.000000e+00> : vector<2x8xf32>
    %328 = vector.multi_reduction <add>, %327, %cst_89 [2] : vector<2x8x8xf32> to vector<2x8xf32>
    %329 = vector.shape_cast %328 : vector<2x8xf32> to vector<2x8x1xf32>
    %330 = tpu.reciprocal %329 {approx = true} : vector<2x8x1xf32> -> vector<2x8x1xf32>
    %331 = vector.broadcast %330 : vector<2x8x1xf32> to vector<2x8x8xf32>
    %332 = arith.mulf %327, %331 : vector<2x8x8xf32>
    %333 = arith.truncf %332 : vector<2x8x8xf32> to vector<2x8x8xbf16>
    %334 = vector.extract_strided_slice %244 {offsets = [0, 0, 24], sizes = [2, 8, 8], strides = [1, 1, 1]} : vector<2x8x32xf32> to vector<2x8x8xf32>
    %335 = vector.extract_strided_slice %264 {offsets = [0, 0, 24], sizes = [2, 8, 8], strides = [1, 1, 1]} : vector<2x8x32xbf16> to vector<2x8x8xbf16>
    %cst_90 = arith.constant dense<0.000000e+00> : vector<2x8x8xf32>
    %336 = tpu.matmul %333, %335, %cst_90 {dimension_numbers = #tpu.dot_dimension_numbers<[2], [1], [1], [2], [0, 0, 0, 1, 1, 2], [0], [0]>} : vector<2x8x8xbf16>, vector<2x8x8xbf16>, vector<2x8x8xf32> -> vector<2x8x8xf32>
    %337 = arith.addf %334, %336 : vector<2x8x8xf32>
    %338 = tpu.concatenate %283, %301, %319, %337 in 2 : vector<2x8x8xf32>, vector<2x8x8xf32>, vector<2x8x8xf32>, vector<2x8x8xf32> -> vector<2x8x32xf32>
    %c408 = arith.constant 408 : index
    %c0_91 = arith.constant 0 : index
    %339 = vector.load %arg2[%c408, %c0_91] : memref<816x128xbf16, #tpu.memory_space<vmem>>, vector<32x32xbf16>
    %c440 = arith.constant 440 : index
    %c0_92 = arith.constant 0 : index
    %340 = vector.load %arg2[%c440, %c0_92] : memref<816x128xbf16, #tpu.memory_space<vmem>>, vector<1x32xbf16>
    %341 = arith.extf %340 : vector<1x32xbf16> to vector<1x32xf32>
    %342 = vector.shape_cast %338 : vector<2x8x32xf32> to vector<16x32xf32>
    %343 = arith.truncf %342 : vector<16x32xf32> to vector<16x32xbf16>
    %cst_93 = arith.constant dense<0.000000e+00> : vector<16x32xf32>
    %344 = tpu.matmul %343, %339, %cst_93 {dimension_numbers = #tpu.dot_dimension_numbers<[1], [0], [0], [1], [0, 0, 1, 1], [], []>} : vector<16x32xbf16>, vector<32x32xbf16>, vector<16x32xf32> -> vector<16x32xf32>
    %345 = vector.broadcast %341 : vector<1x32xf32> to vector<16x32xf32>
    %346 = arith.addf %344, %345 : vector<16x32xf32>
    %cst_94 = arith.constant 0.000000e+00 : f32
    %347 = vector.broadcast %cst_94 : f32 to vector<16x32xf32>
    %348 = arith.maximumf %346, %347 : vector<16x32xf32>
    %349 = vector.shape_cast %348 : vector<16x32xf32> to vector<2x8x32xf32>
    %350 = arith.addf %338, %349 : vector<2x8x32xf32>
    %c448 = arith.constant 448 : index
    %c0_95 = arith.constant 0 : index
    %351 = vector.load %arg2[%c448, %c0_95] : memref<816x128xbf16, #tpu.memory_space<vmem>>, vector<32x32xbf16>
    %c480 = arith.constant 480 : index
    %c0_96 = arith.constant 0 : index
    %352 = vector.load %arg2[%c480, %c0_96] : memref<816x128xbf16, #tpu.memory_space<vmem>>, vector<1x32xbf16>
    %353 = arith.extf %352 : vector<1x32xbf16> to vector<1x32xf32>
    %354 = vector.shape_cast %232 : vector<2x8x32xf32> to vector<16x32xf32>
    %355 = arith.truncf %354 : vector<16x32xf32> to vector<16x32xbf16>
    %cst_97 = arith.constant dense<0.000000e+00> : vector<16x32xf32>
    %356 = tpu.matmul %355, %351, %cst_97 {dimension_numbers = #tpu.dot_dimension_numbers<[1], [0], [0], [1], [0, 0, 1, 1], [], []>} : vector<16x32xbf16>, vector<32x32xbf16>, vector<16x32xf32> -> vector<16x32xf32>
    %357 = vector.broadcast %353 : vector<1x32xf32> to vector<16x32xf32>
    %358 = arith.addf %356, %357 : vector<16x32xf32>
    %359 = vector.shape_cast %358 : vector<16x32xf32> to vector<2x8x32xf32>
    %360 = vector.shape_cast %350 : vector<2x8x32xf32> to vector<16x32xf32>
    %361 = arith.truncf %360 : vector<16x32xf32> to vector<16x32xbf16>
    %c488 = arith.constant 488 : index
    %c0_98 = arith.constant 0 : index
    %362 = vector.load %arg2[%c488, %c0_98] : memref<816x128xbf16, #tpu.memory_space<vmem>>, vector<32x32xbf16>
    %c520 = arith.constant 520 : index
    %c0_99 = arith.constant 0 : index
    %363 = vector.load %arg2[%c520, %c0_99] : memref<816x128xbf16, #tpu.memory_space<vmem>>, vector<1x32xbf16>
    %364 = arith.extf %363 : vector<1x32xbf16> to vector<1x32xf32>
    %cst_100 = arith.constant dense<0.000000e+00> : vector<16x32xf32>
    %365 = tpu.matmul %361, %362, %cst_100 {dimension_numbers = #tpu.dot_dimension_numbers<[1], [0], [0], [1], [0, 0, 1, 1], [], []>} : vector<16x32xbf16>, vector<32x32xbf16>, vector<16x32xf32> -> vector<16x32xf32>
    %366 = vector.broadcast %364 : vector<1x32xf32> to vector<16x32xf32>
    %367 = arith.addf %365, %366 : vector<16x32xf32>
    %cst_101 = arith.constant 0.176776692 : f32
    %368 = vector.broadcast %cst_101 : f32 to vector<16x32xf32>
    %369 = arith.mulf %367, %368 : vector<16x32xf32>
    %370 = arith.truncf %369 : vector<16x32xf32> to vector<16x32xbf16>
    %371 = vector.shape_cast %370 : vector<16x32xbf16> to vector<2x8x32xbf16>
    %c528 = arith.constant 528 : index
    %c0_102 = arith.constant 0 : index
    %372 = vector.load %arg2[%c528, %c0_102] : memref<816x128xbf16, #tpu.memory_space<vmem>>, vector<32x32xbf16>
    %c560 = arith.constant 560 : index
    %c0_103 = arith.constant 0 : index
    %373 = vector.load %arg2[%c560, %c0_103] : memref<816x128xbf16, #tpu.memory_space<vmem>>, vector<1x32xbf16>
    %374 = arith.extf %373 : vector<1x32xbf16> to vector<1x32xf32>
    %cst_104 = arith.constant dense<0.000000e+00> : vector<16x32xf32>
    %375 = tpu.matmul %361, %372, %cst_104 {dimension_numbers = #tpu.dot_dimension_numbers<[1], [0], [0], [1], [0, 0, 1, 1], [], []>} : vector<16x32xbf16>, vector<32x32xbf16>, vector<16x32xf32> -> vector<16x32xf32>
    %376 = vector.broadcast %374 : vector<1x32xf32> to vector<16x32xf32>
    %377 = arith.addf %375, %376 : vector<16x32xf32>
    %378 = arith.truncf %377 : vector<16x32xf32> to vector<16x32xbf16>
    %379 = vector.shape_cast %378 : vector<16x32xbf16> to vector<2x8x32xbf16>
    %380 = arith.truncf %359 : vector<2x8x32xf32> to vector<2x8x32xbf16>
    %381 = vector.extract_strided_slice %380 {offsets = [0, 0, 0], sizes = [2, 8, 8], strides = [1, 1, 1]} : vector<2x8x32xbf16> to vector<2x8x8xbf16>
    %382 = vector.extract_strided_slice %371 {offsets = [0, 0, 0], sizes = [2, 8, 8], strides = [1, 1, 1]} : vector<2x8x32xbf16> to vector<2x8x8xbf16>
    %cst_105 = arith.constant dense<0.000000e+00> : vector<2x8x8xf32>
    %383 = tpu.matmul %381, %382, %cst_105 {dimension_numbers = #tpu.dot_dimension_numbers<[2], [2], [1], [1], [0, 0, 0, 1, 1, 1], [0], [0]>} : vector<2x8x8xbf16>, vector<2x8x8xbf16>, vector<2x8x8xf32> -> vector<2x8x8xf32>
    %cst_106 = arith.constant dense<0xFF800000> : vector<2x8xf32>
    %384 = vector.multi_reduction <maximumf>, %383, %cst_106 [2] : vector<2x8x8xf32> to vector<2x8xf32>
    %385 = vector.shape_cast %384 : vector<2x8xf32> to vector<2x8x1xf32>
    %386 = vector.broadcast %385 : vector<2x8x1xf32> to vector<2x8x8xf32>
    %387 = arith.subf %383, %386 : vector<2x8x8xf32>
    %388 = math.exp %387 : vector<2x8x8xf32>
    %cst_107 = arith.constant dense<0.000000e+00> : vector<2x8xf32>
    %389 = vector.multi_reduction <add>, %388, %cst_107 [2] : vector<2x8x8xf32> to vector<2x8xf32>
    %390 = vector.shape_cast %389 : vector<2x8xf32> to vector<2x8x1xf32>
    %391 = tpu.reciprocal %390 {approx = true} : vector<2x8x1xf32> -> vector<2x8x1xf32>
    %392 = vector.broadcast %391 : vector<2x8x1xf32> to vector<2x8x8xf32>
    %393 = arith.mulf %388, %392 : vector<2x8x8xf32>
    %394 = arith.truncf %393 : vector<2x8x8xf32> to vector<2x8x8xbf16>
    %395 = vector.extract_strided_slice %359 {offsets = [0, 0, 0], sizes = [2, 8, 8], strides = [1, 1, 1]} : vector<2x8x32xf32> to vector<2x8x8xf32>
    %396 = vector.extract_strided_slice %379 {offsets = [0, 0, 0], sizes = [2, 8, 8], strides = [1, 1, 1]} : vector<2x8x32xbf16> to vector<2x8x8xbf16>
    %cst_108 = arith.constant dense<0.000000e+00> : vector<2x8x8xf32>
    %397 = tpu.matmul %394, %396, %cst_108 {dimension_numbers = #tpu.dot_dimension_numbers<[2], [1], [1], [2], [0, 0, 0, 1, 1, 2], [0], [0]>} : vector<2x8x8xbf16>, vector<2x8x8xbf16>, vector<2x8x8xf32> -> vector<2x8x8xf32>
    %398 = arith.addf %395, %397 : vector<2x8x8xf32>
    %399 = vector.extract_strided_slice %380 {offsets = [0, 0, 8], sizes = [2, 8, 8], strides = [1, 1, 1]} : vector<2x8x32xbf16> to vector<2x8x8xbf16>
    %400 = vector.extract_strided_slice %371 {offsets = [0, 0, 8], sizes = [2, 8, 8], strides = [1, 1, 1]} : vector<2x8x32xbf16> to vector<2x8x8xbf16>
    %cst_109 = arith.constant dense<0.000000e+00> : vector<2x8x8xf32>
    %401 = tpu.matmul %399, %400, %cst_109 {dimension_numbers = #tpu.dot_dimension_numbers<[2], [2], [1], [1], [0, 0, 0, 1, 1, 1], [0], [0]>} : vector<2x8x8xbf16>, vector<2x8x8xbf16>, vector<2x8x8xf32> -> vector<2x8x8xf32>
    %cst_110 = arith.constant dense<0xFF800000> : vector<2x8xf32>
    %402 = vector.multi_reduction <maximumf>, %401, %cst_110 [2] : vector<2x8x8xf32> to vector<2x8xf32>
    %403 = vector.shape_cast %402 : vector<2x8xf32> to vector<2x8x1xf32>
    %404 = vector.broadcast %403 : vector<2x8x1xf32> to vector<2x8x8xf32>
    %405 = arith.subf %401, %404 : vector<2x8x8xf32>
    %406 = math.exp %405 : vector<2x8x8xf32>
    %cst_111 = arith.constant dense<0.000000e+00> : vector<2x8xf32>
    %407 = vector.multi_reduction <add>, %406, %cst_111 [2] : vector<2x8x8xf32> to vector<2x8xf32>
    %408 = vector.shape_cast %407 : vector<2x8xf32> to vector<2x8x1xf32>
    %409 = tpu.reciprocal %408 {approx = true} : vector<2x8x1xf32> -> vector<2x8x1xf32>
    %410 = vector.broadcast %409 : vector<2x8x1xf32> to vector<2x8x8xf32>
    %411 = arith.mulf %406, %410 : vector<2x8x8xf32>
    %412 = arith.truncf %411 : vector<2x8x8xf32> to vector<2x8x8xbf16>
    %413 = vector.extract_strided_slice %359 {offsets = [0, 0, 8], sizes = [2, 8, 8], strides = [1, 1, 1]} : vector<2x8x32xf32> to vector<2x8x8xf32>
    %414 = vector.extract_strided_slice %379 {offsets = [0, 0, 8], sizes = [2, 8, 8], strides = [1, 1, 1]} : vector<2x8x32xbf16> to vector<2x8x8xbf16>
    %cst_112 = arith.constant dense<0.000000e+00> : vector<2x8x8xf32>
    %415 = tpu.matmul %412, %414, %cst_112 {dimension_numbers = #tpu.dot_dimension_numbers<[2], [1], [1], [2], [0, 0, 0, 1, 1, 2], [0], [0]>} : vector<2x8x8xbf16>, vector<2x8x8xbf16>, vector<2x8x8xf32> -> vector<2x8x8xf32>
    %416 = arith.addf %413, %415 : vector<2x8x8xf32>
    %417 = vector.extract_strided_slice %380 {offsets = [0, 0, 16], sizes = [2, 8, 8], strides = [1, 1, 1]} : vector<2x8x32xbf16> to vector<2x8x8xbf16>
    %418 = vector.extract_strided_slice %371 {offsets = [0, 0, 16], sizes = [2, 8, 8], strides = [1, 1, 1]} : vector<2x8x32xbf16> to vector<2x8x8xbf16>
    %cst_113 = arith.constant dense<0.000000e+00> : vector<2x8x8xf32>
    %419 = tpu.matmul %417, %418, %cst_113 {dimension_numbers = #tpu.dot_dimension_numbers<[2], [2], [1], [1], [0, 0, 0, 1, 1, 1], [0], [0]>} : vector<2x8x8xbf16>, vector<2x8x8xbf16>, vector<2x8x8xf32> -> vector<2x8x8xf32>
    %cst_114 = arith.constant dense<0xFF800000> : vector<2x8xf32>
    %420 = vector.multi_reduction <maximumf>, %419, %cst_114 [2] : vector<2x8x8xf32> to vector<2x8xf32>
    %421 = vector.shape_cast %420 : vector<2x8xf32> to vector<2x8x1xf32>
    %422 = vector.broadcast %421 : vector<2x8x1xf32> to vector<2x8x8xf32>
    %423 = arith.subf %419, %422 : vector<2x8x8xf32>
    %424 = math.exp %423 : vector<2x8x8xf32>
    %cst_115 = arith.constant dense<0.000000e+00> : vector<2x8xf32>
    %425 = vector.multi_reduction <add>, %424, %cst_115 [2] : vector<2x8x8xf32> to vector<2x8xf32>
    %426 = vector.shape_cast %425 : vector<2x8xf32> to vector<2x8x1xf32>
    %427 = tpu.reciprocal %426 {approx = true} : vector<2x8x1xf32> -> vector<2x8x1xf32>
    %428 = vector.broadcast %427 : vector<2x8x1xf32> to vector<2x8x8xf32>
    %429 = arith.mulf %424, %428 : vector<2x8x8xf32>
    %430 = arith.truncf %429 : vector<2x8x8xf32> to vector<2x8x8xbf16>
    %431 = vector.extract_strided_slice %359 {offsets = [0, 0, 16], sizes = [2, 8, 8], strides = [1, 1, 1]} : vector<2x8x32xf32> to vector<2x8x8xf32>
    %432 = vector.extract_strided_slice %379 {offsets = [0, 0, 16], sizes = [2, 8, 8], strides = [1, 1, 1]} : vector<2x8x32xbf16> to vector<2x8x8xbf16>
    %cst_116 = arith.constant dense<0.000000e+00> : vector<2x8x8xf32>
    %433 = tpu.matmul %430, %432, %cst_116 {dimension_numbers = #tpu.dot_dimension_numbers<[2], [1], [1], [2], [0, 0, 0, 1, 1, 2], [0], [0]>} : vector<2x8x8xbf16>, vector<2x8x8xbf16>, vector<2x8x8xf32> -> vector<2x8x8xf32>
    %434 = arith.addf %431, %433 : vector<2x8x8xf32>
    %435 = vector.extract_strided_slice %380 {offsets = [0, 0, 24], sizes = [2, 8, 8], strides = [1, 1, 1]} : vector<2x8x32xbf16> to vector<2x8x8xbf16>
    %436 = vector.extract_strided_slice %371 {offsets = [0, 0, 24], sizes = [2, 8, 8], strides = [1, 1, 1]} : vector<2x8x32xbf16> to vector<2x8x8xbf16>
    %cst_117 = arith.constant dense<0.000000e+00> : vector<2x8x8xf32>
    %437 = tpu.matmul %435, %436, %cst_117 {dimension_numbers = #tpu.dot_dimension_numbers<[2], [2], [1], [1], [0, 0, 0, 1, 1, 1], [0], [0]>} : vector<2x8x8xbf16>, vector<2x8x8xbf16>, vector<2x8x8xf32> -> vector<2x8x8xf32>
    %cst_118 = arith.constant dense<0xFF800000> : vector<2x8xf32>
    %438 = vector.multi_reduction <maximumf>, %437, %cst_118 [2] : vector<2x8x8xf32> to vector<2x8xf32>
    %439 = vector.shape_cast %438 : vector<2x8xf32> to vector<2x8x1xf32>
    %440 = vector.broadcast %439 : vector<2x8x1xf32> to vector<2x8x8xf32>
    %441 = arith.subf %437, %440 : vector<2x8x8xf32>
    %442 = math.exp %441 : vector<2x8x8xf32>
    %cst_119 = arith.constant dense<0.000000e+00> : vector<2x8xf32>
    %443 = vector.multi_reduction <add>, %442, %cst_119 [2] : vector<2x8x8xf32> to vector<2x8xf32>
    %444 = vector.shape_cast %443 : vector<2x8xf32> to vector<2x8x1xf32>
    %445 = tpu.reciprocal %444 {approx = true} : vector<2x8x1xf32> -> vector<2x8x1xf32>
    %446 = vector.broadcast %445 : vector<2x8x1xf32> to vector<2x8x8xf32>
    %447 = arith.mulf %442, %446 : vector<2x8x8xf32>
    %448 = arith.truncf %447 : vector<2x8x8xf32> to vector<2x8x8xbf16>
    %449 = vector.extract_strided_slice %359 {offsets = [0, 0, 24], sizes = [2, 8, 8], strides = [1, 1, 1]} : vector<2x8x32xf32> to vector<2x8x8xf32>
    %450 = vector.extract_strided_slice %379 {offsets = [0, 0, 24], sizes = [2, 8, 8], strides = [1, 1, 1]} : vector<2x8x32xbf16> to vector<2x8x8xbf16>
    %cst_120 = arith.constant dense<0.000000e+00> : vector<2x8x8xf32>
    %451 = tpu.matmul %448, %450, %cst_120 {dimension_numbers = #tpu.dot_dimension_numbers<[2], [1], [1], [2], [0, 0, 0, 1, 1, 2], [0], [0]>} : vector<2x8x8xbf16>, vector<2x8x8xbf16>, vector<2x8x8xf32> -> vector<2x8x8xf32>
    %452 = arith.addf %449, %451 : vector<2x8x8xf32>
    %453 = tpu.concatenate %398, %416, %434, %452 in 2 : vector<2x8x8xf32>, vector<2x8x8xf32>, vector<2x8x8xf32>, vector<2x8x8xf32> -> vector<2x8x32xf32>
    %c568 = arith.constant 568 : index
    %c0_121 = arith.constant 0 : index
    %454 = vector.load %arg2[%c568, %c0_121] : memref<816x128xbf16, #tpu.memory_space<vmem>>, vector<32x32xbf16>
    %c600 = arith.constant 600 : index
    %c0_122 = arith.constant 0 : index
    %455 = vector.load %arg2[%c600, %c0_122] : memref<816x128xbf16, #tpu.memory_space<vmem>>, vector<1x32xbf16>
    %456 = arith.extf %455 : vector<1x32xbf16> to vector<1x32xf32>
    %457 = vector.shape_cast %453 : vector<2x8x32xf32> to vector<16x32xf32>
    %458 = arith.truncf %457 : vector<16x32xf32> to vector<16x32xbf16>
    %cst_123 = arith.constant dense<0.000000e+00> : vector<16x32xf32>
    %459 = tpu.matmul %458, %454, %cst_123 {dimension_numbers = #tpu.dot_dimension_numbers<[1], [0], [0], [1], [0, 0, 1, 1], [], []>} : vector<16x32xbf16>, vector<32x32xbf16>, vector<16x32xf32> -> vector<16x32xf32>
    %460 = vector.broadcast %456 : vector<1x32xf32> to vector<16x32xf32>
    %461 = arith.addf %459, %460 : vector<16x32xf32>
    %cst_124 = arith.constant 0.000000e+00 : f32
    %462 = vector.broadcast %cst_124 : f32 to vector<16x32xf32>
    %463 = arith.maximumf %461, %462 : vector<16x32xf32>
    %464 = vector.shape_cast %463 : vector<16x32xf32> to vector<2x8x32xf32>
    %465 = arith.addf %453, %464 : vector<2x8x32xf32>
    %466 = vector.shape_cast %465 : vector<2x8x32xf32> to vector<1x16x32xf32>
    %c608 = arith.constant 608 : index
    %c0_125 = arith.constant 0 : index
    %467 = vector.load %arg2[%c608, %c0_125] : memref<816x128xbf16, #tpu.memory_space<vmem>>, vector<1x32xbf16>
    %468 = vector.shape_cast %467 : vector<1x32xbf16> to vector<1x1x32xbf16>
    %c616 = arith.constant 616 : index
    %c0_126 = arith.constant 0 : index
    %469 = vector.load %arg2[%c616, %c0_126] : memref<816x128xbf16, #tpu.memory_space<vmem>>, vector<32x32xbf16>
    %c648 = arith.constant 648 : index
    %c0_127 = arith.constant 0 : index
    %470 = vector.load %arg2[%c648, %c0_127] : memref<816x128xbf16, #tpu.memory_space<vmem>>, vector<1x32xbf16>
    %471 = arith.extf %470 : vector<1x32xbf16> to vector<1x32xf32>
    %472 = vector.shape_cast %468 : vector<1x1x32xbf16> to vector<1x32xbf16>
    %cst_128 = arith.constant dense<0.000000e+00> : vector<1x32xf32>
    %473 = tpu.matmul %472, %469, %cst_128 {dimension_numbers = #tpu.dot_dimension_numbers<[1], [0], [0], [1], [0, 0, 1, 1], [], []>} : vector<1x32xbf16>, vector<32x32xbf16>, vector<1x32xf32> -> vector<1x32xf32>
    %474 = arith.addf %473, %471 : vector<1x32xf32>
    %475 = vector.shape_cast %474 : vector<1x32xf32> to vector<1x1x32xf32>
    %476 = vector.shape_cast %466 : vector<1x16x32xf32> to vector<16x32xf32>
    %477 = arith.truncf %476 : vector<16x32xf32> to vector<16x32xbf16>
    %c656 = arith.constant 656 : index
    %c0_129 = arith.constant 0 : index
    %478 = vector.load %arg2[%c656, %c0_129] : memref<816x128xbf16, #tpu.memory_space<vmem>>, vector<32x32xbf16>
    %c688 = arith.constant 688 : index
    %c0_130 = arith.constant 0 : index
    %479 = vector.load %arg2[%c688, %c0_130] : memref<816x128xbf16, #tpu.memory_space<vmem>>, vector<1x32xbf16>
    %480 = arith.extf %479 : vector<1x32xbf16> to vector<1x32xf32>
    %cst_131 = arith.constant dense<0.000000e+00> : vector<16x32xf32>
    %481 = tpu.matmul %477, %478, %cst_131 {dimension_numbers = #tpu.dot_dimension_numbers<[1], [0], [0], [1], [0, 0, 1, 1], [], []>} : vector<16x32xbf16>, vector<32x32xbf16>, vector<16x32xf32> -> vector<16x32xf32>
    %482 = vector.broadcast %480 : vector<1x32xf32> to vector<16x32xf32>
    %483 = arith.addf %481, %482 : vector<16x32xf32>
    %cst_132 = arith.constant 0.176776692 : f32
    %484 = vector.broadcast %cst_132 : f32 to vector<16x32xf32>
    %485 = arith.mulf %483, %484 : vector<16x32xf32>
    %486 = arith.truncf %485 : vector<16x32xf32> to vector<16x32xbf16>
    %487 = vector.shape_cast %486 : vector<16x32xbf16> to vector<1x16x32xbf16>
    %c696 = arith.constant 696 : index
    %c0_133 = arith.constant 0 : index
    %488 = vector.load %arg2[%c696, %c0_133] : memref<816x128xbf16, #tpu.memory_space<vmem>>, vector<32x32xbf16>
    %c728 = arith.constant 728 : index
    %c0_134 = arith.constant 0 : index
    %489 = vector.load %arg2[%c728, %c0_134] : memref<816x128xbf16, #tpu.memory_space<vmem>>, vector<1x32xbf16>
    %490 = arith.extf %489 : vector<1x32xbf16> to vector<1x32xf32>
    %cst_135 = arith.constant dense<0.000000e+00> : vector<16x32xf32>
    %491 = tpu.matmul %477, %488, %cst_135 {dimension_numbers = #tpu.dot_dimension_numbers<[1], [0], [0], [1], [0, 0, 1, 1], [], []>} : vector<16x32xbf16>, vector<32x32xbf16>, vector<16x32xf32> -> vector<16x32xf32>
    %492 = vector.broadcast %490 : vector<1x32xf32> to vector<16x32xf32>
    %493 = arith.addf %491, %492 : vector<16x32xf32>
    %494 = arith.truncf %493 : vector<16x32xf32> to vector<16x32xbf16>
    %495 = vector.shape_cast %494 : vector<16x32xbf16> to vector<1x16x32xbf16>
    %496 = arith.truncf %475 : vector<1x1x32xf32> to vector<1x1x32xbf16>
    %497 = vector.extract_strided_slice %496 {offsets = [0, 0, 0], sizes = [1, 1, 8], strides = [1, 1, 1]} : vector<1x1x32xbf16> to vector<1x1x8xbf16>
    %498 = vector.extract_strided_slice %487 {offsets = [0, 0, 0], sizes = [1, 16, 8], strides = [1, 1, 1]} : vector<1x16x32xbf16> to vector<1x16x8xbf16>
    %cst_136 = arith.constant dense<0.000000e+00> : vector<1x1x16xf32>
    %499 = tpu.matmul %497, %498, %cst_136 {dimension_numbers = #tpu.dot_dimension_numbers<[2], [2], [1], [1], [0, 0, 0, 1, 1, 1], [0], [0]>} : vector<1x1x8xbf16>, vector<1x16x8xbf16>, vector<1x1x16xf32> -> vector<1x1x16xf32>
    %cst_137 = arith.constant dense<0xFF800000> : vector<1x1xf32>
    %500 = vector.multi_reduction <maximumf>, %499, %cst_137 [2] : vector<1x1x16xf32> to vector<1x1xf32>
    %501 = vector.shape_cast %500 : vector<1x1xf32> to vector<1x1x1xf32>
    %502 = vector.broadcast %501 : vector<1x1x1xf32> to vector<1x1x16xf32>
    %503 = arith.subf %499, %502 : vector<1x1x16xf32>
    %504 = math.exp %503 : vector<1x1x16xf32>
    %cst_138 = arith.constant dense<0.000000e+00> : vector<1x1xf32>
    %505 = vector.multi_reduction <add>, %504, %cst_138 [2] : vector<1x1x16xf32> to vector<1x1xf32>
    %506 = vector.shape_cast %505 : vector<1x1xf32> to vector<1x1x1xf32>
    %507 = tpu.reciprocal %506 {approx = true} : vector<1x1x1xf32> -> vector<1x1x1xf32>
    %508 = vector.broadcast %507 : vector<1x1x1xf32> to vector<1x1x16xf32>
    %509 = arith.mulf %504, %508 : vector<1x1x16xf32>
    %510 = arith.truncf %509 : vector<1x1x16xf32> to vector<1x1x16xbf16>
    %511 = vector.extract_strided_slice %475 {offsets = [0, 0, 0], sizes = [1, 1, 8], strides = [1, 1, 1]} : vector<1x1x32xf32> to vector<1x1x8xf32>
    %512 = vector.extract_strided_slice %495 {offsets = [0, 0, 0], sizes = [1, 16, 8], strides = [1, 1, 1]} : vector<1x16x32xbf16> to vector<1x16x8xbf16>
    %cst_139 = arith.constant dense<0.000000e+00> : vector<1x1x8xf32>
    %513 = tpu.matmul %510, %512, %cst_139 {dimension_numbers = #tpu.dot_dimension_numbers<[2], [1], [1], [2], [0, 0, 0, 1, 1, 2], [0], [0]>} : vector<1x1x16xbf16>, vector<1x16x8xbf16>, vector<1x1x8xf32> -> vector<1x1x8xf32>
    %514 = arith.addf %511, %513 : vector<1x1x8xf32>
    %515 = vector.extract_strided_slice %496 {offsets = [0, 0, 8], sizes = [1, 1, 8], strides = [1, 1, 1]} : vector<1x1x32xbf16> to vector<1x1x8xbf16>
    %516 = vector.extract_strided_slice %487 {offsets = [0, 0, 8], sizes = [1, 16, 8], strides = [1, 1, 1]} : vector<1x16x32xbf16> to vector<1x16x8xbf16>
    %cst_140 = arith.constant dense<0.000000e+00> : vector<1x1x16xf32>
    %517 = tpu.matmul %515, %516, %cst_140 {dimension_numbers = #tpu.dot_dimension_numbers<[2], [2], [1], [1], [0, 0, 0, 1, 1, 1], [0], [0]>} : vector<1x1x8xbf16>, vector<1x16x8xbf16>, vector<1x1x16xf32> -> vector<1x1x16xf32>
    %cst_141 = arith.constant dense<0xFF800000> : vector<1x1xf32>
    %518 = vector.multi_reduction <maximumf>, %517, %cst_141 [2] : vector<1x1x16xf32> to vector<1x1xf32>
    %519 = vector.shape_cast %518 : vector<1x1xf32> to vector<1x1x1xf32>
    %520 = vector.broadcast %519 : vector<1x1x1xf32> to vector<1x1x16xf32>
    %521 = arith.subf %517, %520 : vector<1x1x16xf32>
    %522 = math.exp %521 : vector<1x1x16xf32>
    %cst_142 = arith.constant dense<0.000000e+00> : vector<1x1xf32>
    %523 = vector.multi_reduction <add>, %522, %cst_142 [2] : vector<1x1x16xf32> to vector<1x1xf32>
    %524 = vector.shape_cast %523 : vector<1x1xf32> to vector<1x1x1xf32>
    %525 = tpu.reciprocal %524 {approx = true} : vector<1x1x1xf32> -> vector<1x1x1xf32>
    %526 = vector.broadcast %525 : vector<1x1x1xf32> to vector<1x1x16xf32>
    %527 = arith.mulf %522, %526 : vector<1x1x16xf32>
    %528 = arith.truncf %527 : vector<1x1x16xf32> to vector<1x1x16xbf16>
    %529 = vector.extract_strided_slice %475 {offsets = [0, 0, 8], sizes = [1, 1, 8], strides = [1, 1, 1]} : vector<1x1x32xf32> to vector<1x1x8xf32>
    %530 = vector.extract_strided_slice %495 {offsets = [0, 0, 8], sizes = [1, 16, 8], strides = [1, 1, 1]} : vector<1x16x32xbf16> to vector<1x16x8xbf16>
    %cst_143 = arith.constant dense<0.000000e+00> : vector<1x1x8xf32>
    %531 = tpu.matmul %528, %530, %cst_143 {dimension_numbers = #tpu.dot_dimension_numbers<[2], [1], [1], [2], [0, 0, 0, 1, 1, 2], [0], [0]>} : vector<1x1x16xbf16>, vector<1x16x8xbf16>, vector<1x1x8xf32> -> vector<1x1x8xf32>
    %532 = arith.addf %529, %531 : vector<1x1x8xf32>
    %533 = vector.extract_strided_slice %496 {offsets = [0, 0, 16], sizes = [1, 1, 8], strides = [1, 1, 1]} : vector<1x1x32xbf16> to vector<1x1x8xbf16>
    %534 = vector.extract_strided_slice %487 {offsets = [0, 0, 16], sizes = [1, 16, 8], strides = [1, 1, 1]} : vector<1x16x32xbf16> to vector<1x16x8xbf16>
    %cst_144 = arith.constant dense<0.000000e+00> : vector<1x1x16xf32>
    %535 = tpu.matmul %533, %534, %cst_144 {dimension_numbers = #tpu.dot_dimension_numbers<[2], [2], [1], [1], [0, 0, 0, 1, 1, 1], [0], [0]>} : vector<1x1x8xbf16>, vector<1x16x8xbf16>, vector<1x1x16xf32> -> vector<1x1x16xf32>
    %cst_145 = arith.constant dense<0xFF800000> : vector<1x1xf32>
    %536 = vector.multi_reduction <maximumf>, %535, %cst_145 [2] : vector<1x1x16xf32> to vector<1x1xf32>
    %537 = vector.shape_cast %536 : vector<1x1xf32> to vector<1x1x1xf32>
    %538 = vector.broadcast %537 : vector<1x1x1xf32> to vector<1x1x16xf32>
    %539 = arith.subf %535, %538 : vector<1x1x16xf32>
    %540 = math.exp %539 : vector<1x1x16xf32>
    %cst_146 = arith.constant dense<0.000000e+00> : vector<1x1xf32>
    %541 = vector.multi_reduction <add>, %540, %cst_146 [2] : vector<1x1x16xf32> to vector<1x1xf32>
    %542 = vector.shape_cast %541 : vector<1x1xf32> to vector<1x1x1xf32>
    %543 = tpu.reciprocal %542 {approx = true} : vector<1x1x1xf32> -> vector<1x1x1xf32>
    %544 = vector.broadcast %543 : vector<1x1x1xf32> to vector<1x1x16xf32>
    %545 = arith.mulf %540, %544 : vector<1x1x16xf32>
    %546 = arith.truncf %545 : vector<1x1x16xf32> to vector<1x1x16xbf16>
    %547 = vector.extract_strided_slice %475 {offsets = [0, 0, 16], sizes = [1, 1, 8], strides = [1, 1, 1]} : vector<1x1x32xf32> to vector<1x1x8xf32>
    %548 = vector.extract_strided_slice %495 {offsets = [0, 0, 16], sizes = [1, 16, 8], strides = [1, 1, 1]} : vector<1x16x32xbf16> to vector<1x16x8xbf16>
    %cst_147 = arith.constant dense<0.000000e+00> : vector<1x1x8xf32>
    %549 = tpu.matmul %546, %548, %cst_147 {dimension_numbers = #tpu.dot_dimension_numbers<[2], [1], [1], [2], [0, 0, 0, 1, 1, 2], [0], [0]>} : vector<1x1x16xbf16>, vector<1x16x8xbf16>, vector<1x1x8xf32> -> vector<1x1x8xf32>
    %550 = arith.addf %547, %549 : vector<1x1x8xf32>
    %551 = vector.extract_strided_slice %496 {offsets = [0, 0, 24], sizes = [1, 1, 8], strides = [1, 1, 1]} : vector<1x1x32xbf16> to vector<1x1x8xbf16>
    %552 = vector.extract_strided_slice %487 {offsets = [0, 0, 24], sizes = [1, 16, 8], strides = [1, 1, 1]} : vector<1x16x32xbf16> to vector<1x16x8xbf16>
    %cst_148 = arith.constant dense<0.000000e+00> : vector<1x1x16xf32>
    %553 = tpu.matmul %551, %552, %cst_148 {dimension_numbers = #tpu.dot_dimension_numbers<[2], [2], [1], [1], [0, 0, 0, 1, 1, 1], [0], [0]>} : vector<1x1x8xbf16>, vector<1x16x8xbf16>, vector<1x1x16xf32> -> vector<1x1x16xf32>
    %cst_149 = arith.constant dense<0xFF800000> : vector<1x1xf32>
    %554 = vector.multi_reduction <maximumf>, %553, %cst_149 [2] : vector<1x1x16xf32> to vector<1x1xf32>
    %555 = vector.shape_cast %554 : vector<1x1xf32> to vector<1x1x1xf32>
    %556 = vector.broadcast %555 : vector<1x1x1xf32> to vector<1x1x16xf32>
    %557 = arith.subf %553, %556 : vector<1x1x16xf32>
    %558 = math.exp %557 : vector<1x1x16xf32>
    %cst_150 = arith.constant dense<0.000000e+00> : vector<1x1xf32>
    %559 = vector.multi_reduction <add>, %558, %cst_150 [2] : vector<1x1x16xf32> to vector<1x1xf32>
    %560 = vector.shape_cast %559 : vector<1x1xf32> to vector<1x1x1xf32>
    %561 = tpu.reciprocal %560 {approx = true} : vector<1x1x1xf32> -> vector<1x1x1xf32>
    %562 = vector.broadcast %561 : vector<1x1x1xf32> to vector<1x1x16xf32>
    %563 = arith.mulf %558, %562 : vector<1x1x16xf32>
    %564 = arith.truncf %563 : vector<1x1x16xf32> to vector<1x1x16xbf16>
    %565 = vector.extract_strided_slice %475 {offsets = [0, 0, 24], sizes = [1, 1, 8], strides = [1, 1, 1]} : vector<1x1x32xf32> to vector<1x1x8xf32>
    %566 = vector.extract_strided_slice %495 {offsets = [0, 0, 24], sizes = [1, 16, 8], strides = [1, 1, 1]} : vector<1x16x32xbf16> to vector<1x16x8xbf16>
    %cst_151 = arith.constant dense<0.000000e+00> : vector<1x1x8xf32>
    %567 = tpu.matmul %564, %566, %cst_151 {dimension_numbers = #tpu.dot_dimension_numbers<[2], [1], [1], [2], [0, 0, 0, 1, 1, 2], [0], [0]>} : vector<1x1x16xbf16>, vector<1x16x8xbf16>, vector<1x1x8xf32> -> vector<1x1x8xf32>
    %568 = arith.addf %565, %567 : vector<1x1x8xf32>
    %569 = tpu.concatenate %514, %532, %550, %568 in 2 : vector<1x1x8xf32>, vector<1x1x8xf32>, vector<1x1x8xf32>, vector<1x1x8xf32> -> vector<1x1x32xf32>
    %c736 = arith.constant 736 : index
    %c0_152 = arith.constant 0 : index
    %570 = vector.load %arg2[%c736, %c0_152] : memref<816x128xbf16, #tpu.memory_space<vmem>>, vector<32x32xbf16>
    %c768 = arith.constant 768 : index
    %c0_153 = arith.constant 0 : index
    %571 = vector.load %arg2[%c768, %c0_153] : memref<816x128xbf16, #tpu.memory_space<vmem>>, vector<1x32xbf16>
    %572 = arith.extf %571 : vector<1x32xbf16> to vector<1x32xf32>
    %573 = vector.shape_cast %569 : vector<1x1x32xf32> to vector<1x32xf32>
    %574 = arith.truncf %573 : vector<1x32xf32> to vector<1x32xbf16>
    %cst_154 = arith.constant dense<0.000000e+00> : vector<1x32xf32>
    %575 = tpu.matmul %574, %570, %cst_154 {dimension_numbers = #tpu.dot_dimension_numbers<[1], [0], [0], [1], [0, 0, 1, 1], [], []>} : vector<1x32xbf16>, vector<32x32xbf16>, vector<1x32xf32> -> vector<1x32xf32>
    %576 = arith.addf %575, %572 : vector<1x32xf32>
    %cst_155 = arith.constant 0.000000e+00 : f32
    %577 = vector.broadcast %cst_155 : f32 to vector<1x32xf32>
    %578 = arith.maximumf %576, %577 : vector<1x32xf32>
    %579 = vector.shape_cast %578 : vector<1x32xf32> to vector<1x1x32xf32>
    %580 = arith.addf %569, %579 : vector<1x1x32xf32>
    %c776 = arith.constant 776 : index
    %c0_156 = arith.constant 0 : index
    %581 = vector.load %arg2[%c776, %c0_156] : memref<816x128xbf16, #tpu.memory_space<vmem>>, vector<32x128xbf16>
    %c808 = arith.constant 808 : index
    %c0_157 = arith.constant 0 : index
    %582 = vector.load %arg2[%c808, %c0_157] : memref<816x128xbf16, #tpu.memory_space<vmem>>, vector<1x128xbf16>
    %583 = arith.extf %582 : vector<1x128xbf16> to vector<1x128xf32>
    %584 = vector.shape_cast %580 : vector<1x1x32xf32> to vector<1x32xf32>
    %585 = arith.truncf %584 : vector<1x32xf32> to vector<1x32xbf16>
    %cst_158 = arith.constant dense<0.000000e+00> : vector<1x128xf32>
    %586 = tpu.matmul %585, %581, %cst_158 {dimension_numbers = #tpu.dot_dimension_numbers<[1], [0], [0], [1], [0, 0, 1, 1], [], []>} : vector<1x32xbf16>, vector<32x128xbf16>, vector<1x128xf32> -> vector<1x128xf32>
    %587 = arith.addf %586, %583 : vector<1x128xf32>
    %588 = vector.shape_cast %587 : vector<1x128xf32> to vector<1x1x128xf32>
    %c0_159 = arith.constant 0 : index
    %c0_160 = arith.constant 0 : index
    %c0_161 = arith.constant 0 : index
    %589 = vector.load %arg3[%c0_159, %c0_160, %c0_161] : memref<1x1x128xf32, #tpu.memory_space<vmem>>, vector<1x1x128xf32>
    tpu.vector_store %arg3[%c0_159, %c0_160, %c0_161], %588 {strides = array<i32>} : memref<1x1x128xf32, #tpu.memory_space<vmem>>, vector<1x1x128xf32>,
    return
  }
  func.func @transform_0(%arg0: i32) -> (i32, i32, i32, i32) {
    %c0_i32 = arith.constant 0 : i32
    %c0_i32_0 = arith.constant 0 : i32
    %c0_i32_1 = arith.constant 0 : i32
    %c0_i32_2 = arith.constant 0 : i32
    return %arg0, %c0_i32, %c0_i32_0, %c0_i32_1 : i32, i32, i32, i32
  }
  func.func @transform_1(%arg0: i32) -> (i32, i32) {
    %c0_i32 = arith.constant 0 : i32
    %c0_i32_0 = arith.constant 0 : i32
    %c0_i32_1 = arith.constant 0 : i32
    return %c0_i32, %c0_i32_0 : i32, i32
  }
  func.func @transform_2(%arg0: i32) -> (i32, i32, i32) {
    %c0_i32 = arith.constant 0 : i32
    %c0_i32_0 = arith.constant 0 : i32
    %c0_i32_1 = arith.constant 0 : i32
    return %arg0, %c0_i32, %c0_i32_0 : i32, i32, i32
  }
}

</mosaic_0001>

<llo_original>
// kernel: set_transformer_forward.1
$region0: #{set_transformer_forward.1}
  #allocation0 [shape = 'u32[]', space=smem, size = 0x4, offset = 0x4, fixed_abs, tag = 'smem constant byte address 0x4 - core index']
  #allocation1 [shape = 'u32[72,128]{1,0:T(1,128)}', space=vmem, size = 0x9000, scoped, tag = 'internal scratch']
  %s0 = inlined_call_operand.vmem [shape: bf16[2,2,8,16], index: 0, kind: input, shape index: {}]
  %s1 = inlined_call_operand.hbm [shape: bf16[816,128], index: 1, kind: input, shape index: {}]
  %s2 = inlined_call_operand.vmem [shape: f32[2,1,128], index: 2, kind: output, shape index: {}]
  %s3 = sld [smem:[#allocation0]]
  $region45: #{set_transformer_forward.1} parent=0
    _
  %s5 = ssub.s32 1, %s3
  %s6 = scalar_select 0, %s5, %s3
  $region1: #{set_transformer_forward.1} parent=0
    #allocation2 [shape = 'u8[208896]{0}', space=vmem, size = 0x33000, scoped, tag = 'input window, operand 1, single buffered']
    #allocation3 [shape = 's32[2]{0}', space=sflag, size = 0x8, scoped, tag = 'scoped memory for set_transformer_forward.1']
    %7 = vsyncpa [#allocation3], 0
    loop: start=0, step=1, limit=4
    $region2: #{set_transformer_forward.1} parent=1 // loop_pre_header
      _
    $region3: #{set_transformer_forward.1} parent=1 // loop_header
      %s9 = sphi 0, %s13
      %p10 = scmp.ge.s32.totalorder %s9, 4
      %s19 = sphi 0, %s21
      %s22 = sphi 0, %s19
      %s23 = sphi 0, %s22
      %s39 = sphi 0, %s23
      %s43 = sphi 0, %s43
      %s45 = sphi 0, %s43
      %s46 = sphi 0, %s45
      %s60 = sphi 0, %s46
      %s66 = sphi 0, %s68
      %s69 = sphi 0, %s66
      %s70 = sphi 0, %s69
      %s86 = sphi 0, %s70
    $region4: #{set_transformer_forward.1} parent=1 // loop_header_branch
      %12 = sbr.rel (%p10) target = $region8
    $region5: #{set_transformer_forward.1} parent=1 // loop_body
      %s14 = ssub.s32 %s9, 1
      %s15 = ssub.s32 %s9, 2
      %s16 = sadd.s32 %s9, 1
      %s17 = ssub.s32 %s9, %s16
      %p18 = scmp.eq.s32.totalorder %s17, 0
      %s20 = sadd.s32 %s19, 1
      %s21 = scalar_select %p18, %s19, %s20
      %p24 = pneg %p18
      %p25 = scmp.eq.s32.totalorder %s9, 1
      %p26 = por %p24, %p25
      %p27 = scmp.ne.s32.totalorder %s19, %s22
      %p28 = scmp.eq.s32.totalorder %s9, 0
      %p29 = por %p27, %p28
      %p30 = scmp.ne.s32.totalorder %s19, %s22
      %p31 = scmp.eq.s32.totalorder %s14, 1
      %p32 = por %p30, %p31
      %p33 = scmp.ne.s32.totalorder %s22, %s23
      %p34 = scmp.eq.s32.totalorder %s14, 0
      %p35 = por %p33, %p34
      %p36 = scmp.ne.s32.totalorder %s22, %s23
      %p37 = scmp.eq.s32.totalorder %s15, 1
      %p38 = por %p36, %p37
      %p40 = scmp.ne.s32.totalorder %s23, %s39
      %p41 = scmp.eq.s32.totalorder %s15, 0
      %p42 = por %p40, %p41
      %s44 = sadd.s32 %s43, 1
      %p47 = scmp.eq.s32.totalorder %s9, 1
      %p48 = scmp.ne.s32.totalorder %s43, %s45
      %p49 = scmp.eq.s32.totalorder %s9, 0
      %p50 = por %p48, %p49
      %p51 = scmp.ne.s32.totalorder %s43, %s45
      %p52 = scmp.eq.s32.totalorder %s14, 1
      %p53 = por %p51, %p52
      %p54 = scmp.ne.s32.totalorder %s45, %s46
      %p55 = scmp.eq.s32.totalorder %s14, 0
      %p56 = por %p54, %p55
      %p57 = scmp.ne.s32.totalorder %s45, %s46
      %p58 = scmp.eq.s32.totalorder %s15, 1
      %p59 = por %p57, %p58
      %p61 = scmp.ne.s32.totalorder %s46, %s60
      %p62 = scmp.eq.s32.totalorder %s15, 0
      %p63 = por %p61, %p62
      %s64 = ssub.s32 %s9, %s16
      %p65 = scmp.eq.s32.totalorder %s64, 0
      %s67 = sadd.s32 %s66, 1
      %s68 = scalar_select %p65, %s66, %s67
      %p71 = pneg %p65
      %p72 = scmp.eq.s32.totalorder %s9, 1
      %p73 = por %p71, %p72
      %p74 = scmp.ne.s32.totalorder %s66, %s69
      %p75 = scmp.eq.s32.totalorder %s9, 0
      %p76 = por %p74, %p75
      %p77 = scmp.ne.s32.totalorder %s66, %s69
      %p78 = scmp.eq.s32.totalorder %s14, 1
      %p79 = por %p77, %p78
      %p80 = scmp.ne.s32.totalorder %s69, %s70
      %p81 = scmp.eq.s32.totalorder %s14, 0
      %p82 = por %p80, %p81
      %p83 = scmp.ne.s32.totalorder %s69, %s70
      %p84 = scmp.eq.s32.totalorder %s15, 1
      %p85 = por %p83, %p84
      %p87 = scmp.ne.s32.totalorder %s70, %s86
      %p88 = scmp.eq.s32.totalorder %s15, 0
      %p89 = por %p87, %p88
      %p90 = scmp.le.s32.totalorder 1, %s9
      %p91 = scmp.lt.s32.totalorder %s9, 3
      %p92 = pnand %p90, %p91
      %p93 = pneg %p92
      // Predicated region
      $region9: #{set_transformer_forward.1} parent=5 // pred_check
        _
      $region10: #{set_transformer_forward.1} parent=5 // pred_check_branch
        %95 = sbr.rel (%p92) target = $region12
      $region11: #{set_transformer_forward.1} parent=5 // pred_region
        %s96 = ssub.s32 %s9, 1
        // Predicated region
        $region13: #{set_transformer_forward.1} parent=11 // pred_check
          %p97 = pneg %p56
        $region14: #{set_transformer_forward.1} parent=11 // pred_check_branch
          %99 = sbr.rel (%p97) target = $region16
        $region15: #{set_transformer_forward.1} parent=11 // pred_region
          %101 = vsyncadd [#allocation3], 0
          %s102 = sshll.u32 %s1, 4
          %s103 = int_to_ptr.hbm [resolvable:$true] %s102
          %s104 = sshll.u32 [#allocation2], 4
          %s105 = int_to_ptr.vmem [resolvable:$true] %s104
          %110 = dma.hbm_to_vmem [thread:$0]  %s103, 6528, %s105, [#allocation3], 64, 64, 4
        $region16: #{set_transformer_forward.1} parent=11 // pred_fallthru
          _
      $region12: #{set_transformer_forward.1} parent=5 // pred_fallthru
        _
      %p111 = scmp.lt.s32.totalorder %s9, 2
      // Predicated region
      $region17: #{set_transformer_forward.1} parent=5 // pred_check
        %p112 = pneg %p111
      $region18: #{set_transformer_forward.1} parent=5 // pred_check_branch
        %114 = sbr.rel (%p112) target = $region20
      $region19: #{set_transformer_forward.1} parent=5 // pred_region
        // Predicated region
        $region21: #{set_transformer_forward.1} parent=19 // pred_check
          %p115 = pneg %p29
        $region22: #{set_transformer_forward.1} parent=19 // pred_check_branch
          %117 = sbr.rel (%p115) target = $region24
        $region23: #{set_transformer_forward.1} parent=19 // pred_region
          %p118 = scmp.lt.s32.totalorder %s9, 1
          %s119 = scalar_select %p118, %s9, 1
          %s120 = smul.addr %s119, 2
          %s121 = smul.addr %s120, 4
          %s122 = scalar_lea.vmem %s0, %s121
        $region24: #{set_transformer_forward.1} parent=19 // pred_fallthru
          _
      $region20: #{set_transformer_forward.1} parent=5 // pred_fallthru
        _
      %p123 = scmp.le.s32.totalorder 1, %s9
      %p124 = scmp.lt.s32.totalorder %s9, 3
      %p125 = pnand %p123, %p124
      %p126 = pneg %p125
      // Predicated region
      $region25: #{set_transformer_forward.1} parent=5 // pred_check
        _
      $region26: #{set_transformer_forward.1} parent=5 // pred_check_branch
        %128 = sbr.rel (%p125) target = $region28
      $region27: #{set_transformer_forward.1} parent=5 // pred_region
        %s129 = ssub.s32 %s9, 1
        // Predicated region
        $region29: #{set_transformer_forward.1} parent=27 // pred_check
          %p130 = pneg %p56
        $region30: #{set_transformer_forward.1} parent=27 // pred_check_branch
          %132 = sbr.rel (%p130) target = $region32
        $region31: #{set_transformer_forward.1} parent=27 // pred_region
          %134 = dma.done [#allocation3], 6528
        $region32: #{set_transformer_forward.1} parent=27 // pred_fallthru
          _
        %p135 = scmp.lt.s32.totalorder %s14, 1
        %s136 = scalar_select %p135, %s14, 1
        %s137 = smul.addr %s136, 2
        %s138 = smul.addr %s137, 4
        %s139 = scalar_lea.vmem %s0, %s138
        %p140 = pneg %p35
        %p141 = pneg %p32
        %p142 = pneg %p56
        %p143 = pneg %p53
        %p144 = pneg %p82
        %p145 = pneg %p79
        %p146 = scmp.lt.s32.totalorder %s14, 1
        %s147 = scalar_select %p146, %s14, 1
        %s148 = scalar_lea.vmem %s2, %s147
        %p149 = scmp.lt.s32.totalorder %s14, 1
        %s150 = scalar_select %p149, %s14, 1
        %s151 = smul.addr %s150, 2
        %s152 = smul.addr %s151, 4
        %s153 = scalar_lea.vmem %s0, %s152
        %p154 = scmp.lt.s32.totalorder %s14, 1
        %s155 = scalar_select %p154, %s14, 1
        %s156 = scalar_lea.vmem %s2, %s155
        %v158 = vld [vmem:[%s153] sm:$0xf]
        %v159 = vld [vmem:[%s153 + $0x4] sm:$0xf]
        %v160 = vld [vmem:[#allocation2] sm:$0xf]
        %v161 = vld [vmem:[#allocation2 + $0x4] sm:$0xf]
        %v162 = vld [vmem:[#allocation2 + $0x8] sm:$0xf]
        %v163 = vld [vmem:[#allocation2 + $0xc] sm:$0xf]
        %v164 = vld [vmem:[#allocation2 + $0x10] sm:$0xf]
        %v165 = vld [vmem:[#allocation2 + $0x14] sm:$0x1]
        %v166 = vunpack.c.l.bf16 %v165
        %v167 = vperm.slane %v166, 0
        %v172 = vunpack.c.l.b16 %v161
        %v173 = vunpack.c.l.b16 %v162
        %v174 = vunpack.c.l.b16 %v163
        %v175 = vunpack.c.l.b16 %v164
        %v176 = vpack.c.b16 %v173, %v172
        %v177 = vpack.c.b16 %v175, %v174
        %vm180 = vcmask 261120
        %v182 = vsel %vm180, %v160, 0
        %184 = vmatpush.bf16.msra.mxu0 0
        %185 = vmatpush.bf16.msra.mxu0 0
        %186 = vmatpush.bf16.msra.mxu0 0
        %187 = vmatpush.bf16.msra.mxu0 0
        %188 = vmatpush.bf16.msra.mxu0 0
        %189 = vmatpush.bf16.msra.mxu0 0
        %190 = vmatpush.bf16.msra.mxu0 %v177
        %191 = vmatpush.bf16.msra.mxu0 %v176
        %192 = vmatmul.bf16.gmra.mxu0 %v182
        %v193 = vpop.f32.mrf.mxu0
        %v194 = vadd.f32 %v167, %v193
        %v195 = vpop.f32.mrf.mxu0
        %196 = vdwg.mxu0
        %v197 = vld [vmem:[#allocation2 + $0x18] sm:$0xf]
        %v198 = vld [vmem:[#allocation2 + $0x1c] sm:$0xf]
        %v199 = vld [vmem:[#allocation2 + $0x20] sm:$0x1]
        %v200 = vunpack.c.l.bf16 %v199
        %v201 = vperm.slane %v200, 0
        %v204 = vunpack.c.l.b16 %v158
        %v205 = vunpack.c.l.b16 %v159
        %v206 = vpack.c.b16 %v205, %v204
        %v209 = vunpack.c.l.b16 %v197
        %v210 = vunpack.c.l.b16 %v198
        %v211 = vpack.c.b16 %v210, %v209
        %vm213 = vcmask 130048
        %v215 = vsel %vm213, %v206, 0
        %217 = vmatpush.bf16.msra.mxu0 0
        %218 = vmatpush.bf16.msra.mxu0 0
        %219 = vmatpush.bf16.msra.mxu0 0
        %220 = vmatpush.bf16.msra.mxu0 0
        %221 = vmatpush.bf16.msra.mxu0 0
        %222 = vmatpush.bf16.msra.mxu0 0
        %223 = vmatpush.bf16.msra.mxu0 0
        %224 = vmatpush.bf16.msra.mxu0 %v211
        %225 = vmatmul.bf16.gmra.mxu0 %v215
        %v226 = vpop.f32.mrf.mxu0
        %v227 = vadd.f32 %v201, %v226
        %v228 = vpop.f32.mrf.mxu0
        %v229 = vadd.f32 %v201, %v228
        %230 = vdwg.mxu0
        %v231 = vmul.f32 %v227, 0.17677669
        %v232 = vmul.f32 %v229, 0.17677669
        %v233 = vpack.c.bf16 %v231, %v231
        %v234 = vpack.c.bf16 %v232, %v232
        %v235 = vld [vmem:[#allocation2 + $0x24] sm:$0xf]
        %v236 = vld [vmem:[#allocation2 + $0x28] sm:$0xf]
        %v237 = vld [vmem:[#allocation2 + $0x2c] sm:$0x1]
        %v238 = vunpack.c.l.bf16 %v237
        %v239 = vperm.slane %v238, 0
        %v242 = vunpack.c.l.b16 %v235
        %v243 = vunpack.c.l.b16 %v236
        %v244 = vpack.c.b16 %v243, %v242
        %246 = vmatpush.bf16.msra.mxu0 0
        %247 = vmatpush.bf16.msra.mxu0 0
        %248 = vmatpush.bf16.msra.mxu0 0
        %249 = vmatpush.bf16.msra.mxu0 0
        %250 = vmatpush.bf16.msra.mxu0 0
        %251 = vmatpush.bf16.msra.mxu0 0
        %252 = vmatpush.bf16.msra.mxu0 0
        %253 = vmatpush.bf16.msra.mxu0 %v244
        %254 = vmatmul.bf16.gmra.mxu0 %v215
        %v255 = vpop.f32.mrf.mxu0
        %v256 = vadd.f32 %v239, %v255
        %v257 = vpop.f32.mrf.mxu0
        %v258 = vadd.f32 %v239, %v257
        %259 = vdwg.mxu0
        %v260 = vpack.c.bf16 %v256, %v256
        %v261 = vpack.c.bf16 %v258, %v258
        %v262 = vpack.c.bf16 %v194, %v194
        %vm263 = vcmask 64512
        %v265 = vsel %vm263, %v262, 0
        %v268 = vsel %vm263, %v233, 0
        %270 = vmatpush.bf16.xpose.msra.mxu0 0
        %271 = vmatpush.bf16.xpose.msra.mxu0 0
        %272 = vmatpush.bf16.xpose.msra.mxu0 0
        %273 = vmatpush.bf16.xpose.msra.mxu0 0
        %274 = vmatpush.bf16.xpose.msra.mxu0 0
        %275 = vmatpush.bf16.xpose.msra.mxu0 0
        %276 = vmatpush.bf16.xpose.msra.mxu0 0
        %277 = vmatpush.bf16.xpose.msra.mxu0 %v268
        %278 = vmatmul.bf16.gmra.mxu0 %v265
        %v279 = vpop.f32.mrf.mxu0
        %v280 = vadd.f32 0.0, %v279
        %v281 = vpop.f32.mrf.mxu0
        %282 = vdwg.mxu0
        %v284 = vsel %vm263, %v234, 0
        %286 = vmatpush.bf16.xpose.msra.mxu0 0
        %287 = vmatpush.bf16.xpose.msra.mxu0 0
        %288 = vmatpush.bf16.xpose.msra.mxu0 0
        %289 = vmatpush.bf16.xpose.msra.mxu0 0
        %290 = vmatpush.bf16.xpose.msra.mxu0 0
        %291 = vmatpush.bf16.xpose.msra.mxu0 0
        %292 = vmatpush.bf16.xpose.msra.mxu0 0
        %293 = vmatpush.bf16.xpose.msra.mxu0 %v284
        %294 = vmatmul.bf16.gmra.mxu0 %v265
        %v295 = vpop.f32.mrf.mxu0
        %v296 = vadd.f32 0.0, %v295
        %v297 = vpop.f32.mrf.mxu0
        %298 = vdwg.mxu0
        %v299 = vsel %vm263, %v280, -inf
        %300 = vmax.xlane.f32.xlu0 %v299
        %v301 = vpop.xlane.xlu0 %300
        %v302 = vsel %vm263, %v296, -inf
        %303 = vmax.xlane.f32.xlu0 %v302
        %v304 = vpop.xlane.xlu0 %303
        %v305 = vsub.f32 %v280, %v301
        %v306 = vsub.f32 %v296, %v304
        %v307 = vmul.f32 %v305, 1.442695
        %v308 = vpow.pop %v307
        %v309 = vmul.f32 %v306, 1.442695
        %v310 = vpow.pop %v309
        %v311 = vsel %vm263, %v308, 0.0
        %312 = vadd.xlane.f32.xlu0 %v311
        %v313 = vpop.xlane.xlu0 %312
        %v314 = vsel %vm263, %v310, 0.0
        %315 = vadd.xlane.f32.xlu0 %v314
        %v316 = vpop.xlane.xlu0 %315
        %v317 = vrcp.pop %v313
        %v318 = vrcp.pop %v316
        %v319 = vmul.f32 %v308, %v317
        %v320 = vmul.f32 %v310, %v318
        %v321 = vpack.c.bf16 %v319, %v319
        %v322 = vpack.c.bf16 %v320, %v320
        %v324 = vsel %vm263, %v321, 0
        %vm326 = vcmask 1043456
        %v328 = vsel %vm326, %v260, 0
        %330 = vmatpush.bf16.msra.mxu0 0
        %331 = vmatpush.bf16.msra.mxu0 0
        %332 = vmatpush.bf16.msra.mxu0 0
        %333 = vmatpush.bf16.msra.mxu0 0
        %334 = vmatpush.bf16.msra.mxu0 0
        %335 = vmatpush.bf16.msra.mxu0 0
        %336 = vmatpush.bf16.msra.mxu0 0
        %337 = vmatpush.bf16.msra.mxu0 %v328
        %338 = vmatmul.bf16.gmra.mxu0 %v324
        %v339 = vpop.f32.mrf.mxu0
        %v340 = vadd.f32 0.0, %v339
        %v341 = vpop.f32.mrf.mxu0
        %342 = vdwg.mxu0
        %v344 = vsel %vm263, %v322, 0
        %v347 = vsel %vm326, %v261, 0
        %349 = vmatpush.bf16.msra.mxu0 0
        %350 = vmatpush.bf16.msra.mxu0 0
        %351 = vmatpush.bf16.msra.mxu0 0
        %352 = vmatpush.bf16.msra.mxu0 0
        %353 = vmatpush.bf16.msra.mxu0 0
        %354 = vmatpush.bf16.msra.mxu0 0
        %355 = vmatpush.bf16.msra.mxu0 0
        %356 = vmatpush.bf16.msra.mxu0 %v347
        %357 = vmatmul.bf16.gmra.mxu0 %v344
        %v358 = vpop.f32.mrf.mxu0
        %v359 = vadd.f32 0.0, %v358
        %v360 = vpop.f32.mrf.mxu0
        %361 = vdwg.mxu0
        %v362 = vadd.f32 %v194, %v340
        %v363 = vadd.f32 %v194, %v359
        %v365 = vunpack.c.l.b16 %v262
        %v366 = vpack.c.b16 %v365, %v365
        %367 = vrot.lane.b32.xlu0 %v366, 120
        %v368 = vpop.permute.xlu0 %367
        %v370 = vunpack.c.l.b16 %v233
        %v371 = vpack.c.b16 %v370, %v370
        %372 = vrot.lane.b32.xlu0 %v371, 120
        %v373 = vpop.permute.xlu0 %372
        %v375 = vsel %vm263, %v368, 0
        %v378 = vsel %vm263, %v373, 0
        %380 = vmatpush.bf16.xpose.msra.mxu0 0
        %381 = vmatpush.bf16.xpose.msra.mxu0 0
        %382 = vmatpush.bf16.xpose.msra.mxu0 0
        %383 = vmatpush.bf16.xpose.msra.mxu0 0
        %384 = vmatpush.bf16.xpose.msra.mxu0 0
        %385 = vmatpush.bf16.xpose.msra.mxu0 0
        %386 = vmatpush.bf16.xpose.msra.mxu0 0
        %387 = vmatpush.bf16.xpose.msra.mxu0 %v378
        %388 = vmatmul.bf16.gmra.mxu0 %v375
        %v389 = vpop.f32.mrf.mxu0
        %v390 = vadd.f32 0.0, %v389
        %v391 = vpop.f32.mrf.mxu0
        %392 = vdwg.mxu0
        %v394 = vunpack.c.l.b16 %v234
        %v395 = vpack.c.b16 %v394, %v394
        %396 = vrot.lane.b32.xlu0 %v395, 120
        %v397 = vpop.permute.xlu0 %396
        %v399 = vsel %vm263, %v397, 0
        %401 = vmatpush.bf16.xpose.msra.mxu0 0
        %402 = vmatpush.bf16.xpose.msra.mxu0 0
        %403 = vmatpush.bf16.xpose.msra.mxu0 0
        %404 = vmatpush.bf16.xpose.msra.mxu0 0
        %405 = vmatpush.bf16.xpose.msra.mxu0 0
        %406 = vmatpush.bf16.xpose.msra.mxu0 0
        %407 = vmatpush.bf16.xpose.msra.mxu0 0
        %408 = vmatpush.bf16.xpose.msra.mxu0 %v399
        %409 = vmatmul.bf16.gmra.mxu0 %v375
        %v410 = vpop.f32.mrf.mxu0
        %v411 = vadd.f32 0.0, %v410
        %v412 = vpop.f32.mrf.mxu0
        %413 = vdwg.mxu0
        %v414 = vsel %vm263, %v390, -inf
        %415 = vmax.xlane.f32.xlu0 %v414
        %v416 = vpop.xlane.xlu0 %415
        %v417 = vsel %vm263, %v411, -inf
        %418 = vmax.xlane.f32.xlu0 %v417
        %v419 = vpop.xlane.xlu0 %418
        %v420 = vsub.f32 %v390, %v416
        %v421 = vsub.f32 %v411, %v419
        %v422 = vmul.f32 %v420, 1.442695
        %v423 = vpow.pop %v422
        %v424 = vmul.f32 %v421, 1.442695
        %v425 = vpow.pop %v424
        %v426 = vsel %vm263, %v423, 0.0
        %427 = vadd.xlane.f32.xlu0 %v426
        %v428 = vpop.xlane.xlu0 %427
        %v429 = vsel %vm263, %v425, 0.0
        %430 = vadd.xlane.f32.xlu0 %v429
        %v431 = vpop.xlane.xlu0 %430
        %v432 = vrcp.pop %v428
        %v433 = vrcp.pop %v431
        %v434 = vmul.f32 %v423, %v432
        %v435 = vmul.f32 %v425, %v433
        %v436 = vpack.c.bf16 %v434, %v434
        %v437 = vpack.c.bf16 %v435, %v435
        %v439 = vunpack.c.l.b16 %v260
        %v440 = vpack.c.b16 %v439, %v439
        %441 = vrot.lane.b32.xlu0 %v440, 120
        %v442 = vpop.permute.xlu0 %441
        %v444 = vsel %vm263, %v436, 0
        %v447 = vsel %vm326, %v442, 0
        %449 = vmatpush.bf16.msra.mxu0 0
        %450 = vmatpush.bf16.msra.mxu0 0
        %451 = vmatpush.bf16.msra.mxu0 0
        %452 = vmatpush.bf16.msra.mxu0 0
        %453 = vmatpush.bf16.msra.mxu0 0
        %454 = vmatpush.bf16.msra.mxu0 0
        %455 = vmatpush.bf16.msra.mxu0 0
        %456 = vmatpush.bf16.msra.mxu0 %v447
        %457 = vmatmul.bf16.gmra.mxu0 %v444
        %v458 = vpop.f32.mrf.mxu0
        %v459 = vadd.f32 0.0, %v458
        %v460 = vpop.f32.mrf.mxu0
        %461 = vdwg.mxu0
        %v463 = vunpack.c.l.b16 %v261
        %v464 = vpack.c.b16 %v463, %v463
        %465 = vrot.lane.b32.xlu0 %v464, 120
        %v466 = vpop.permute.xlu0 %465
        %v468 = vsel %vm263, %v437, 0
        %v471 = vsel %vm326, %v466, 0
        %473 = vmatpush.bf16.msra.mxu0 0
        %474 = vmatpush.bf16.msra.mxu0 0
        %475 = vmatpush.bf16.msra.mxu0 0
        %476 = vmatpush.bf16.msra.mxu0 0
        %477 = vmatpush.bf16.msra.mxu0 0
        %478 = vmatpush.bf16.msra.mxu0 0
        %479 = vmatpush.bf16.msra.mxu0 0
        %480 = vmatpush.bf16.msra.mxu0 %v471
        %481 = vmatmul.bf16.gmra.mxu0 %v468
        %v482 = vpop.f32.mrf.mxu0
        %v483 = vadd.f32 0.0, %v482
        %v484 = vpop.f32.mrf.mxu0
        %485 = vdwg.mxu0
        %488 = vrot.lane.b32.xlu0 %v459, 8
        %v489 = vpop.permute.xlu0 %488
        %490 = vrot.lane.b32.xlu0 %v483, 8
        %v491 = vpop.permute.xlu0 %490
        %v494 = vadd.f32 %v194, %v489
        %v495 = vadd.f32 %v194, %v491
        %496 = vrot.lane.b32.xlu0 %v366, 112
        %v497 = vpop.permute.xlu0 %496
        %498 = vrot.lane.b32.xlu0 %v371, 112
        %v499 = vpop.permute.xlu0 %498
        %v501 = vsel %vm263, %v497, 0
        %v504 = vsel %vm263, %v499, 0
        %506 = vmatpush.bf16.xpose.msra.mxu0 0
        %507 = vmatpush.bf16.xpose.msra.mxu0 0
        %508 = vmatpush.bf16.xpose.msra.mxu0 0
        %509 = vmatpush.bf16.xpose.msra.mxu0 0
        %510 = vmatpush.bf16.xpose.msra.mxu0 0
        %511 = vmatpush.bf16.xpose.msra.mxu0 0
        %512 = vmatpush.bf16.xpose.msra.mxu0 0
        %513 = vmatpush.bf16.xpose.msra.mxu0 %v504
        %514 = vmatmul.bf16.gmra.mxu0 %v501
        %v515 = vpop.f32.mrf.mxu0
        %v516 = vadd.f32 0.0, %v515
        %v517 = vpop.f32.mrf.mxu0
        %518 = vdwg.mxu0
        %519 = vrot.lane.b32.xlu0 %v395, 112
        %v520 = vpop.permute.xlu0 %519
        %v522 = vsel %vm263, %v520, 0
        %524 = vmatpush.bf16.xpose.msra.mxu0 0
        %525 = vmatpush.bf16.xpose.msra.mxu0 0
        %526 = vmatpush.bf16.xpose.msra.mxu0 0
        %527 = vmatpush.bf16.xpose.msra.mxu0 0
        %528 = vmatpush.bf16.xpose.msra.mxu0 0
        %529 = vmatpush.bf16.xpose.msra.mxu0 0
        %530 = vmatpush.bf16.xpose.msra.mxu0 0
        %531 = vmatpush.bf16.xpose.msra.mxu0 %v522
        %532 = vmatmul.bf16.gmra.mxu0 %v501
        %v533 = vpop.f32.mrf.mxu0
        %v534 = vadd.f32 0.0, %v533
        %v535 = vpop.f32.mrf.mxu0
        %536 = vdwg.mxu0
        %v537 = vsel %vm263, %v516, -inf
        %538 = vmax.xlane.f32.xlu0 %v537
        %v539 = vpop.xlane.xlu0 %538
        %v540 = vsel %vm263, %v534, -inf
        %541 = vmax.xlane.f32.xlu0 %v540
        %v542 = vpop.xlane.xlu0 %541
        %v543 = vsub.f32 %v516, %v539
        %v544 = vsub.f32 %v534, %v542
        %v545 = vmul.f32 %v543, 1.442695
        %v546 = vpow.pop %v545
        %v547 = vmul.f32 %v544, 1.442695
        %v548 = vpow.pop %v547
        %v549 = vsel %vm263, %v546, 0.0
        %550 = vadd.xlane.f32.xlu0 %v549
        %v551 = vpop.xlane.xlu0 %550
        %v552 = vsel %vm263, %v548, 0.0
        %553 = vadd.xlane.f32.xlu0 %v552
        %v554 = vpop.xlane.xlu0 %553
        %v555 = vrcp.pop %v551
        %v556 = vrcp.pop %v554
        %v557 = vmul.f32 %v546, %v555
        %v558 = vmul.f32 %v548, %v556
        %v559 = vpack.c.bf16 %v557, %v557
        %v560 = vpack.c.bf16 %v558, %v558
        %561 = vrot.lane.b32.xlu0 %v440, 112
        %v562 = vpop.permute.xlu0 %561
        %v564 = vsel %vm263, %v559, 0
        %v567 = vsel %vm326, %v562, 0
        %569 = vmatpush.bf16.msra.mxu0 0
        %570 = vmatpush.bf16.msra.mxu0 0
        %571 = vmatpush.bf16.msra.mxu0 0
        %572 = vmatpush.bf16.msra.mxu0 0
        %573 = vmatpush.bf16.msra.mxu0 0
        %574 = vmatpush.bf16.msra.mxu0 0
        %575 = vmatpush.bf16.msra.mxu0 0
        %576 = vmatpush.bf16.msra.mxu0 %v567
        %577 = vmatmul.bf16.gmra.mxu0 %v564
        %v578 = vpop.f32.mrf.mxu0
        %v579 = vadd.f32 0.0, %v578
        %v580 = vpop.f32.mrf.mxu0
        %581 = vdwg.mxu0
        %582 = vrot.lane.b32.xlu0 %v464, 112
        %v583 = vpop.permute.xlu0 %582
        %v585 = vsel %vm263, %v560, 0
        %v588 = vsel %vm326, %v583, 0
        %590 = vmatpush.bf16.msra.mxu0 0
        %591 = vmatpush.bf16.msra.mxu0 0
        %592 = vmatpush.bf16.msra.mxu0 0
        %593 = vmatpush.bf16.msra.mxu0 0
        %594 = vmatpush.bf16.msra.mxu0 0
        %595 = vmatpush.bf16.msra.mxu0 0
        %596 = vmatpush.bf16.msra.mxu0 0
        %597 = vmatpush.bf16.msra.mxu0 %v588
        %598 = vmatmul.bf16.gmra.mxu0 %v585
        %v599 = vpop.f32.mrf.mxu0
        %v600 = vadd.f32 0.0, %v599
        %v601 = vpop.f32.mrf.mxu0
        %602 = vdwg.mxu0
        %605 = vrot.lane.b32.xlu0 %v579, 16
        %v606 = vpop.permute.xlu0 %605
        %607 = vrot.lane.b32.xlu0 %v600, 16
        %v608 = vpop.permute.xlu0 %607
        %v611 = vadd.f32 %v194, %v606
        %v612 = vadd.f32 %v194, %v608
        %613 = vrot.lane.b32.xlu0 %v366, 104
        %v614 = vpop.permute.xlu0 %613
        %615 = vrot.lane.b32.xlu0 %v371, 104
        %v616 = vpop.permute.xlu0 %615
        %v618 = vsel %vm263, %v614, 0
        %v621 = vsel %vm263, %v616, 0
        %623 = vmatpush.bf16.xpose.msra.mxu0 0
        %624 = vmatpush.bf16.xpose.msra.mxu0 0
        %625 = vmatpush.bf16.xpose.msra.mxu0 0
        %626 = vmatpush.bf16.xpose.msra.mxu0 0
        %627 = vmatpush.bf16.xpose.msra.mxu0 0
        %628 = vmatpush.bf16.xpose.msra.mxu0 0
        %629 = vmatpush.bf16.xpose.msra.mxu0 0
        %630 = vmatpush.bf16.xpose.msra.mxu0 %v621
        %631 = vmatmul.bf16.gmra.mxu0 %v618
        %v632 = vpop.f32.mrf.mxu0
        %v633 = vadd.f32 0.0, %v632
        %v634 = vpop.f32.mrf.mxu0
        %635 = vdwg.mxu0
        %636 = vrot.lane.b32.xlu0 %v395, 104
        %v637 = vpop.permute.xlu0 %636
        %v639 = vsel %vm263, %v637, 0
        %641 = vmatpush.bf16.xpose.msra.mxu0 0
        %642 = vmatpush.bf16.xpose.msra.mxu0 0
        %643 = vmatpush.bf16.xpose.msra.mxu0 0
        %644 = vmatpush.bf16.xpose.msra.mxu0 0
        %645 = vmatpush.bf16.xpose.msra.mxu0 0
        %646 = vmatpush.bf16.xpose.msra.mxu0 0
        %647 = vmatpush.bf16.xpose.msra.mxu0 0
        %648 = vmatpush.bf16.xpose.msra.mxu0 %v639
        %649 = vmatmul.bf16.gmra.mxu0 %v618
        %v650 = vpop.f32.mrf.mxu0
        %v651 = vadd.f32 0.0, %v650
        %v652 = vpop.f32.mrf.mxu0
        %653 = vdwg.mxu0
        %v654 = vsel %vm263, %v633, -inf
        %655 = vmax.xlane.f32.xlu0 %v654
        %v656 = vpop.xlane.xlu0 %655
        %v657 = vsel %vm263, %v651, -inf
        %658 = vmax.xlane.f32.xlu0 %v657
        %v659 = vpop.xlane.xlu0 %658
        %v660 = vsub.f32 %v633, %v656
        %v661 = vsub.f32 %v651, %v659
        %v662 = vmul.f32 %v660, 1.442695
        %v663 = vpow.pop %v662
        %v664 = vmul.f32 %v661, 1.442695
        %v665 = vpow.pop %v664
        %v666 = vsel %vm263, %v663, 0.0
        %667 = vadd.xlane.f32.xlu0 %v666
        %v668 = vpop.xlane.xlu0 %667
        %v669 = vsel %vm263, %v665, 0.0
        %670 = vadd.xlane.f32.xlu0 %v669
        %v671 = vpop.xlane.xlu0 %670
        %v672 = vrcp.pop %v668
        %v673 = vrcp.pop %v671
        %v674 = vmul.f32 %v663, %v672
        %v675 = vmul.f32 %v665, %v673
        %v676 = vpack.c.bf16 %v674, %v674
        %v677 = vpack.c.bf16 %v675, %v675
        %678 = vrot.lane.b32.xlu0 %v440, 104
        %v679 = vpop.permute.xlu0 %678
        %v681 = vsel %vm263, %v676, 0
        %v684 = vsel %vm326, %v679, 0
        %686 = vmatpush.bf16.msra.mxu0 0
        %687 = vmatpush.bf16.msra.mxu0 0
        %688 = vmatpush.bf16.msra.mxu0 0
        %689 = vmatpush.bf16.msra.mxu0 0
        %690 = vmatpush.bf16.msra.mxu0 0
        %691 = vmatpush.bf16.msra.mxu0 0
        %692 = vmatpush.bf16.msra.mxu0 0
        %693 = vmatpush.bf16.msra.mxu0 %v684
        %694 = vmatmul.bf16.gmra.mxu0 %v681
        %v695 = vpop.f32.mrf.mxu0
        %v696 = vadd.f32 0.0, %v695
        %v697 = vpop.f32.mrf.mxu0
        %698 = vdwg.mxu0
        %699 = vrot.lane.b32.xlu0 %v464, 104
        %v700 = vpop.permute.xlu0 %699
        %v702 = vsel %vm263, %v677, 0
        %v705 = vsel %vm326, %v700, 0
        %707 = vmatpush.bf16.msra.mxu0 0
        %708 = vmatpush.bf16.msra.mxu0 0
        %709 = vmatpush.bf16.msra.mxu0 0
        %710 = vmatpush.bf16.msra.mxu0 0
        %711 = vmatpush.bf16.msra.mxu0 0
        %712 = vmatpush.bf16.msra.mxu0 0
        %713 = vmatpush.bf16.msra.mxu0 0
        %714 = vmatpush.bf16.msra.mxu0 %v705
        %715 = vmatmul.bf16.gmra.mxu0 %v702
        %v716 = vpop.f32.mrf.mxu0
        %v717 = vadd.f32 0.0, %v716
        %v718 = vpop.f32.mrf.mxu0
        %719 = vdwg.mxu0
        %722 = vrot.lane.b32.xlu0 %v696, 24
        %v723 = vpop.permute.xlu0 %722
        %724 = vrot.lane.b32.xlu0 %v717, 24
        %v725 = vpop.permute.xlu0 %724
        %v728 = vadd.f32 %v194, %v723
        %v729 = vadd.f32 %v194, %v725
        %v730 = vsel %vm263, %v362, %v494
        %v731 = vsel %vm263, %v363, %v495
        %v732 = vsel %vm213, %v730, %v611
        %v733 = vsel %vm213, %v731, %v612
        %vm734 = vcmask 195584
        %v735 = vsel %vm734, %v732, %v728
        %v736 = vsel %vm734, %v733, %v729
        %v737 = vld [vmem:[#allocation2 + $0x30] sm:$0xf]
        %v738 = vld [vmem:[#allocation2 + $0x34] sm:$0xf]
        %v739 = vld [vmem:[#allocation2 + $0x38] sm:$0xf]
        %v740 = vld [vmem:[#allocation2 + $0x3c] sm:$0xf]
        %v741 = vld [vmem:[#allocation2 + $0x40] sm:$0x1]
        %v742 = vunpack.c.l.bf16 %v741
        %v743 = vpack.c.bf16 %v736, %v735
        %v744 = vperm.slane %v742, 0
        %v749 = vunpack.c.l.b16 %v737
        %v750 = vunpack.c.l.b16 %v738
        %v751 = vunpack.c.l.b16 %v739
        %v752 = vunpack.c.l.b16 %v740
        %v753 = vpack.c.b16 %v750, %v749
        %v754 = vpack.c.b16 %v752, %v751
        %v758 = vsel %vm180, %v743, 0
        %760 = vmatpush.bf16.msra.mxu0 0
        %761 = vmatpush.bf16.msra.mxu0 0
        %762 = vmatpush.bf16.msra.mxu0 0
        %763 = vmatpush.bf16.msra.mxu0 0
        %764 = vmatpush.bf16.msra.mxu0 0
        %765 = vmatpush.bf16.msra.mxu0 0
        %766 = vmatpush.bf16.msra.mxu0 %v754
        %767 = vmatpush.bf16.msra.mxu0 %v753
        %768 = vmatmul.bf16.gmra.mxu0 %v758
        %v769 = vpop.f32.mrf.mxu0
        %v770 = vadd.f32 %v744, %v769
        %v771 = vpop.f32.mrf.mxu0
        %v772 = vadd.f32 %v744, %v771
        %773 = vdwg.mxu0
        %v774 = vmax.f32 %v770, 0.0
        %v775 = vmax.f32 %v772, 0.0
        %v776 = vadd.f32 %v735, %v774
        %v777 = vadd.f32 %v736, %v775
        %v778 = vld [vmem:[#allocation2 + $0x44] sm:$0xf]
        %v779 = vld [vmem:[#allocation2 + $0x48] sm:$0xf]
        %v780 = vld [vmem:[#allocation2 + $0x4c] sm:$0x1]
        %v781 = vunpack.c.l.bf16 %v780
        %v782 = vperm.slane %v781, 0
        %v785 = vunpack.c.l.b16 %v778
        %v786 = vunpack.c.l.b16 %v779
        %v787 = vpack.c.b16 %v786, %v785
        %789 = vmatpush.bf16.msra.mxu0 0
        %790 = vmatpush.bf16.msra.mxu0 0
        %791 = vmatpush.bf16.msra.mxu0 0
        %792 = vmatpush.bf16.msra.mxu0 0
        %793 = vmatpush.bf16.msra.mxu0 0
        %794 = vmatpush.bf16.msra.mxu0 0
        %795 = vmatpush.bf16.msra.mxu0 0
        %796 = vmatpush.bf16.msra.mxu0 %v787
        %797 = vmatmul.bf16.gmra.mxu0 %v215
        %v798 = vpop.f32.mrf.mxu0
        %v799 = vadd.f32 %v782, %v798
        %v800 = vpop.f32.mrf.mxu0
        %v801 = vadd.f32 %v782, %v800
        %802 = vdwg.mxu0
        %v803 = vpack.c.bf16 %v777, %v776
        %v804 = vld [vmem:[#allocation2 + $0x50] sm:$0xf]
        %v805 = vld [vmem:[#allocation2 + $0x54] sm:$0xf]
        %v806 = vld [vmem:[#allocation2 + $0x58] sm:$0xf]
        %v807 = vld [vmem:[#allocation2 + $0x5c] sm:$0xf]
        %v808 = vld [vmem:[#allocation2 + $0x60] sm:$0x1]
        %v809 = vunpack.c.l.bf16 %v808
        %v810 = vperm.slane %v809, 0
        %v815 = vunpack.c.l.b16 %v804
        %v816 = vunpack.c.l.b16 %v805
        %v817 = vunpack.c.l.b16 %v806
        %v818 = vunpack.c.l.b16 %v807
        %v819 = vpack.c.b16 %v816, %v815
        %v820 = vpack.c.b16 %v818, %v817
        %v824 = vsel %vm180, %v803, 0
        %826 = vmatpush.bf16.msra.mxu0 0
        %827 = vmatpush.bf16.msra.mxu0 0
        %828 = vmatpush.bf16.msra.mxu0 0
        %829 = vmatpush.bf16.msra.mxu0 0
        %830 = vmatpush.bf16.msra.mxu0 0
        %831 = vmatpush.bf16.msra.mxu0 0
        %832 = vmatpush.bf16.msra.mxu0 %v820
        %833 = vmatpush.bf16.msra.mxu0 %v819
        %834 = vmatmul.bf16.gmra.mxu0 %v824
        %v835 = vpop.f32.mrf.mxu0
        %v836 = vadd.f32 %v810, %v835
        %v837 = vpop.f32.mrf.mxu0
        %v838 = vadd.f32 %v810, %v837
        %839 = vdwg.mxu0
        %v840 = vmul.f32 %v836, 0.17677669
        %v841 = vmul.f32 %v838, 0.17677669
        %v842 = vpack.c.bf16 %v840, %v840
        %v843 = vpack.c.bf16 %v841, %v841
        %v844 = vld [vmem:[#allocation2 + $0x64] sm:$0xf]
        %v845 = vld [vmem:[#allocation2 + $0x68] sm:$0xf]
        %v846 = vld [vmem:[#allocation2 + $0x6c] sm:$0xf]
        %v847 = vld [vmem:[#allocation2 + $0x70] sm:$0xf]
        %v848 = vld [vmem:[#allocation2 + $0x74] sm:$0x1]
        %v849 = vunpack.c.l.bf16 %v848
        %v850 = vperm.slane %v849, 0
        %v855 = vunpack.c.l.b16 %v844
        %v856 = vunpack.c.l.b16 %v845
        %v857 = vunpack.c.l.b16 %v846
        %v858 = vunpack.c.l.b16 %v847
        %v859 = vpack.c.b16 %v856, %v855
        %v860 = vpack.c.b16 %v858, %v857
        %863 = vmatpush.bf16.msra.mxu0 0
        %864 = vmatpush.bf16.msra.mxu0 0
        %865 = vmatpush.bf16.msra.mxu0 0
        %866 = vmatpush.bf16.msra.mxu0 0
        %867 = vmatpush.bf16.msra.mxu0 0
        %868 = vmatpush.bf16.msra.mxu0 0
        %869 = vmatpush.bf16.msra.mxu0 %v860
        %870 = vmatpush.bf16.msra.mxu0 %v859
        %871 = vmatmul.bf16.gmra.mxu0 %v824
        %v872 = vpop.f32.mrf.mxu0
        %v873 = vadd.f32 %v850, %v872
        %v874 = vpop.f32.mrf.mxu0
        %v875 = vadd.f32 %v850, %v874
        %876 = vdwg.mxu0
        %v877 = vpack.c.bf16 %v873, %v873
        %v878 = vpack.c.bf16 %v875, %v875
        %v879 = vpack.c.bf16 %v799, %v799
        %v880 = vpack.c.bf16 %v801, %v801
        %v882 = vsel %vm263, %v879, 0
        %v885 = vsel %vm263, %v842, 0
        %887 = vmatpush.bf16.xpose.msra.mxu0 0
        %888 = vmatpush.bf16.xpose.msra.mxu0 0
        %889 = vmatpush.bf16.xpose.msra.mxu0 0
        %890 = vmatpush.bf16.xpose.msra.mxu0 0
        %891 = vmatpush.bf16.xpose.msra.mxu0 0
        %892 = vmatpush.bf16.xpose.msra.mxu0 0
        %893 = vmatpush.bf16.xpose.msra.mxu0 0
        %894 = vmatpush.bf16.xpose.msra.mxu0 %v885
        %895 = vmatmul.bf16.gmra.mxu0 %v882
        %v896 = vpop.f32.mrf.mxu0
        %v897 = vadd.f32 0.0, %v896
        %v898 = vpop.f32.mrf.mxu0
        %899 = vdwg.mxu0
        %v901 = vsel %vm263, %v880, 0
        %v904 = vsel %vm263, %v843, 0
        %906 = vmatpush.bf16.xpose.msra.mxu0 0
        %907 = vmatpush.bf16.xpose.msra.mxu0 0
        %908 = vmatpush.bf16.xpose.msra.mxu0 0
        %909 = vmatpush.bf16.xpose.msra.mxu0 0
        %910 = vmatpush.bf16.xpose.msra.mxu0 0
        %911 = vmatpush.bf16.xpose.msra.mxu0 0
        %912 = vmatpush.bf16.xpose.msra.mxu0 0
        %913 = vmatpush.bf16.xpose.msra.mxu0 %v904
        %914 = vmatmul.bf16.gmra.mxu0 %v901
        %v915 = vpop.f32.mrf.mxu0
        %v916 = vadd.f32 0.0, %v915
        %v917 = vpop.f32.mrf.mxu0
        %918 = vdwg.mxu0
        %v919 = vsel %vm263, %v897, -inf
        %920 = vmax.xlane.f32.xlu0 %v919
        %v921 = vpop.xlane.xlu0 %920
        %v922 = vsel %vm263, %v916, -inf
        %923 = vmax.xlane.f32.xlu0 %v922
        %v924 = vpop.xlane.xlu0 %923
        %v925 = vsub.f32 %v897, %v921
        %v926 = vsub.f32 %v916, %v924
        %v927 = vmul.f32 %v925, 1.442695
        %v928 = vpow.pop %v927
        %v929 = vmul.f32 %v926, 1.442695
        %v930 = vpow.pop %v929
        %v931 = vsel %vm263, %v928, 0.0
        %932 = vadd.xlane.f32.xlu0 %v931
        %v933 = vpop.xlane.xlu0 %932
        %v934 = vsel %vm263, %v930, 0.0
        %935 = vadd.xlane.f32.xlu0 %v934
        %v936 = vpop.xlane.xlu0 %935
        %v937 = vrcp.pop %v933
        %v938 = vrcp.pop %v936
        %v939 = vmul.f32 %v928, %v937
        %v940 = vmul.f32 %v930, %v938
        %v941 = vpack.c.bf16 %v939, %v939
        %v942 = vpack.c.bf16 %v940, %v940
        %v944 = vsel %vm263, %v941, 0
        %v947 = vsel %vm326, %v877, 0
        %949 = vmatpush.bf16.msra.mxu0 0
        %950 = vmatpush.bf16.msra.mxu0 0
        %951 = vmatpush.bf16.msra.mxu0 0
        %952 = vmatpush.bf16.msra.mxu0 0
        %953 = vmatpush.bf16.msra.mxu0 0
        %954 = vmatpush.bf16.msra.mxu0 0
        %955 = vmatpush.bf16.msra.mxu0 0
        %956 = vmatpush.bf16.msra.mxu0 %v947
        %957 = vmatmul.bf16.gmra.mxu0 %v944
        %v958 = vpop.f32.mrf.mxu0
        %v959 = vadd.f32 0.0, %v958
        %v960 = vpop.f32.mrf.mxu0
        %961 = vdwg.mxu0
        %v963 = vsel %vm263, %v942, 0
        %v966 = vsel %vm326, %v878, 0
        %968 = vmatpush.bf16.msra.mxu0 0
        %969 = vmatpush.bf16.msra.mxu0 0
        %970 = vmatpush.bf16.msra.mxu0 0
        %971 = vmatpush.bf16.msra.mxu0 0
        %972 = vmatpush.bf16.msra.mxu0 0
        %973 = vmatpush.bf16.msra.mxu0 0
        %974 = vmatpush.bf16.msra.mxu0 0
        %975 = vmatpush.bf16.msra.mxu0 %v966
        %976 = vmatmul.bf16.gmra.mxu0 %v963
        %v977 = vpop.f32.mrf.mxu0
        %v978 = vadd.f32 0.0, %v977
        %v979 = vpop.f32.mrf.mxu0
        %980 = vdwg.mxu0
        %v981 = vadd.f32 %v799, %v959
        %v982 = vadd.f32 %v801, %v978
        %v984 = vunpack.c.l.b16 %v879
        %v985 = vpack.c.b16 %v984, %v984
        %986 = vrot.lane.b32.xlu0 %v985, 120
        %v987 = vpop.permute.xlu0 %986
        %v989 = vunpack.c.l.b16 %v842
        %v990 = vpack.c.b16 %v989, %v989
        %991 = vrot.lane.b32.xlu0 %v990, 120
        %v992 = vpop.permute.xlu0 %991
        %v994 = vsel %vm263, %v987, 0
        %v997 = vsel %vm263, %v992, 0
        %999 = vmatpush.bf16.xpose.msra.mxu0 0
        %1000 = vmatpush.bf16.xpose.msra.mxu0 0
        %1001 = vmatpush.bf16.xpose.msra.mxu0 0
        %1002 = vmatpush.bf16.xpose.msra.mxu0 0
        %1003 = vmatpush.bf16.xpose.msra.mxu0 0
        %1004 = vmatpush.bf16.xpose.msra.mxu0 0
        %1005 = vmatpush.bf16.xpose.msra.mxu0 0
        %1006 = vmatpush.bf16.xpose.msra.mxu0 %v997
        %1007 = vmatmul.bf16.gmra.mxu0 %v994
        %v1008 = vpop.f32.mrf.mxu0
        %v1009 = vadd.f32 0.0, %v1008
        %v1010 = vpop.f32.mrf.mxu0
        %1011 = vdwg.mxu0
        %v1013 = vunpack.c.l.b16 %v880
        %v1014 = vpack.c.b16 %v1013, %v1013
        %1015 = vrot.lane.b32.xlu0 %v1014, 120
        %v1016 = vpop.permute.xlu0 %1015
        %v1018 = vunpack.c.l.b16 %v843
        %v1019 = vpack.c.b16 %v1018, %v1018
        %1020 = vrot.lane.b32.xlu0 %v1019, 120
        %v1021 = vpop.permute.xlu0 %1020
        %v1023 = vsel %vm263, %v1016, 0
        %v1026 = vsel %vm263, %v1021, 0
        %1028 = vmatpush.bf16.xpose.msra.mxu0 0
        %1029 = vmatpush.bf16.xpose.msra.mxu0 0
        %1030 = vmatpush.bf16.xpose.msra.mxu0 0
        %1031 = vmatpush.bf16.xpose.msra.mxu0 0
        %1032 = vmatpush.bf16.xpose.msra.mxu0 0
        %1033 = vmatpush.bf16.xpose.msra.mxu0 0
        %1034 = vmatpush.bf16.xpose.msra.mxu0 0
        %1035 = vmatpush.bf16.xpose.msra.mxu0 %v1026
        %1036 = vmatmul.bf16.gmra.mxu0 %v1023
        %v1037 = vpop.f32.mrf.mxu0
        %v1038 = vadd.f32 0.0, %v1037
        %v1039 = vpop.f32.mrf.mxu0
        %1040 = vdwg.mxu0
        %v1041 = vsel %vm263, %v1009, -inf
        %1042 = vmax.xlane.f32.xlu0 %v1041
        %v1043 = vpop.xlane.xlu0 %1042
        %v1044 = vsel %vm263, %v1038, -inf
        %1045 = vmax.xlane.f32.xlu0 %v1044
        %v1046 = vpop.xlane.xlu0 %1045
        %v1047 = vsub.f32 %v1009, %v1043
        %v1048 = vsub.f32 %v1038, %v1046
        %v1049 = vmul.f32 %v1047, 1.442695
        %v1050 = vpow.pop %v1049
        %v1051 = vmul.f32 %v1048, 1.442695
        %v1052 = vpow.pop %v1051
        %v1053 = vsel %vm263, %v1050, 0.0
        %1054 = vadd.xlane.f32.xlu0 %v1053
        %v1055 = vpop.xlane.xlu0 %1054
        %v1056 = vsel %vm263, %v1052, 0.0
        %1057 = vadd.xlane.f32.xlu0 %v1056
        %v1058 = vpop.xlane.xlu0 %1057
        %v1059 = vrcp.pop %v1055
        %v1060 = vrcp.pop %v1058
        %v1061 = vmul.f32 %v1050, %v1059
        %v1062 = vmul.f32 %v1052, %v1060
        %v1063 = vpack.c.bf16 %v1061, %v1061
        %v1064 = vpack.c.bf16 %v1062, %v1062
        %v1066 = vunpack.c.l.b16 %v877
        %v1067 = vpack.c.b16 %v1066, %v1066
        %1068 = vrot.lane.b32.xlu0 %v1067, 120
        %v1069 = vpop.permute.xlu0 %1068
        %v1071 = vsel %vm263, %v1063, 0
        %v1074 = vsel %vm326, %v1069, 0
        %1076 = vmatpush.bf16.msra.mxu0 0
        %1077 = vmatpush.bf16.msra.mxu0 0
        %1078 = vmatpush.bf16.msra.mxu0 0
        %1079 = vmatpush.bf16.msra.mxu0 0
        %1080 = vmatpush.bf16.msra.mxu0 0
        %1081 = vmatpush.bf16.msra.mxu0 0
        %1082 = vmatpush.bf16.msra.mxu0 0
        %1083 = vmatpush.bf16.msra.mxu0 %v1074
        %1084 = vmatmul.bf16.gmra.mxu0 %v1071
        %v1085 = vpop.f32.mrf.mxu0
        %v1086 = vadd.f32 0.0, %v1085
        %v1087 = vpop.f32.mrf.mxu0
        %1088 = vdwg.mxu0
        %v1090 = vunpack.c.l.b16 %v878
        %v1091 = vpack.c.b16 %v1090, %v1090
        %1092 = vrot.lane.b32.xlu0 %v1091, 120
        %v1093 = vpop.permute.xlu0 %1092
        %v1095 = vsel %vm263, %v1064, 0
        %v1098 = vsel %vm326, %v1093, 0
        %1100 = vmatpush.bf16.msra.mxu0 0
        %1101 = vmatpush.bf16.msra.mxu0 0
        %1102 = vmatpush.bf16.msra.mxu0 0
        %1103 = vmatpush.bf16.msra.mxu0 0
        %1104 = vmatpush.bf16.msra.mxu0 0
        %1105 = vmatpush.bf16.msra.mxu0 0
        %1106 = vmatpush.bf16.msra.mxu0 0
        %1107 = vmatpush.bf16.msra.mxu0 %v1098
        %1108 = vmatmul.bf16.gmra.mxu0 %v1095
        %v1109 = vpop.f32.mrf.mxu0
        %v1110 = vadd.f32 0.0, %v1109
        %v1111 = vpop.f32.mrf.mxu0
        %1112 = vdwg.mxu0
        %1115 = vrot.lane.b32.xlu0 %v1086, 8
        %v1116 = vpop.permute.xlu0 %1115
        %1117 = vrot.lane.b32.xlu0 %v1110, 8
        %v1118 = vpop.permute.xlu0 %1117
        %v1121 = vadd.f32 %v799, %v1116
        %v1122 = vadd.f32 %v801, %v1118
        %1123 = vrot.lane.b32.xlu0 %v985, 112
        %v1124 = vpop.permute.xlu0 %1123
        %1125 = vrot.lane.b32.xlu0 %v990, 112
        %v1126 = vpop.permute.xlu0 %1125
        %v1128 = vsel %vm263, %v1124, 0
        %v1131 = vsel %vm263, %v1126, 0
        %1133 = vmatpush.bf16.xpose.msra.mxu0 0
        %1134 = vmatpush.bf16.xpose.msra.mxu0 0
        %1135 = vmatpush.bf16.xpose.msra.mxu0 0
        %1136 = vmatpush.bf16.xpose.msra.mxu0 0
        %1137 = vmatpush.bf16.xpose.msra.mxu0 0
        %1138 = vmatpush.bf16.xpose.msra.mxu0 0
        %1139 = vmatpush.bf16.xpose.msra.mxu0 0
        %1140 = vmatpush.bf16.xpose.msra.mxu0 %v1131
        %1141 = vmatmul.bf16.gmra.mxu0 %v1128
        %v1142 = vpop.f32.mrf.mxu0
        %v1143 = vadd.f32 0.0, %v1142
        %v1144 = vpop.f32.mrf.mxu0
        %1145 = vdwg.mxu0
        %1146 = vrot.lane.b32.xlu0 %v1014, 112
        %v1147 = vpop.permute.xlu0 %1146
        %1148 = vrot.lane.b32.xlu0 %v1019, 112
        %v1149 = vpop.permute.xlu0 %1148
        %v1151 = vsel %vm263, %v1147, 0
        %v1154 = vsel %vm263, %v1149, 0
        %1156 = vmatpush.bf16.xpose.msra.mxu0 0
        %1157 = vmatpush.bf16.xpose.msra.mxu0 0
        %1158 = vmatpush.bf16.xpose.msra.mxu0 0
        %1159 = vmatpush.bf16.xpose.msra.mxu0 0
        %1160 = vmatpush.bf16.xpose.msra.mxu0 0
        %1161 = vmatpush.bf16.xpose.msra.mxu0 0
        %1162 = vmatpush.bf16.xpose.msra.mxu0 0
        %1163 = vmatpush.bf16.xpose.msra.mxu0 %v1154
        %1164 = vmatmul.bf16.gmra.mxu0 %v1151
        %v1165 = vpop.f32.mrf.mxu0
        %v1166 = vadd.f32 0.0, %v1165
        %v1167 = vpop.f32.mrf.mxu0
        %1168 = vdwg.mxu0
        %v1169 = vsel %vm263, %v1143, -inf
        %1170 = vmax.xlane.f32.xlu0 %v1169
        %v1171 = vpop.xlane.xlu0 %1170
        %v1172 = vsel %vm263, %v1166, -inf
        %1173 = vmax.xlane.f32.xlu0 %v1172
        %v1174 = vpop.xlane.xlu0 %1173
        %v1175 = vsub.f32 %v1143, %v1171
        %v1176 = vsub.f32 %v1166, %v1174
        %v1177 = vmul.f32 %v1175, 1.442695
        %v1178 = vpow.pop %v1177
        %v1179 = vmul.f32 %v1176, 1.442695
        %v1180 = vpow.pop %v1179
        %v1181 = vsel %vm263, %v1178, 0.0
        %1182 = vadd.xlane.f32.xlu0 %v1181
        %v1183 = vpop.xlane.xlu0 %1182
        %v1184 = vsel %vm263, %v1180, 0.0
        %1185 = vadd.xlane.f32.xlu0 %v1184
        %v1186 = vpop.xlane.xlu0 %1185
        %v1187 = vrcp.pop %v1183
        %v1188 = vrcp.pop %v1186
        %v1189 = vmul.f32 %v1178, %v1187
        %v1190 = vmul.f32 %v1180, %v1188
        %v1191 = vpack.c.bf16 %v1189, %v1189
        %v1192 = vpack.c.bf16 %v1190, %v1190
        %1193 = vrot.lane.b32.xlu0 %v1067, 112
        %v1194 = vpop.permute.xlu0 %1193
        %v1196 = vsel %vm263, %v1191, 0
        %v1199 = vsel %vm326, %v1194, 0
        %1201 = vmatpush.bf16.msra.mxu0 0
        %1202 = vmatpush.bf16.msra.mxu0 0
        %1203 = vmatpush.bf16.msra.mxu0 0
        %1204 = vmatpush.bf16.msra.mxu0 0
        %1205 = vmatpush.bf16.msra.mxu0 0
        %1206 = vmatpush.bf16.msra.mxu0 0
        %1207 = vmatpush.bf16.msra.mxu0 0
        %1208 = vmatpush.bf16.msra.mxu0 %v1199
        %1209 = vmatmul.bf16.gmra.mxu0 %v1196
        %v1210 = vpop.f32.mrf.mxu0
        %v1211 = vadd.f32 0.0, %v1210
        %v1212 = vpop.f32.mrf.mxu0
        %1213 = vdwg.mxu0
        %1214 = vrot.lane.b32.xlu0 %v1091, 112
        %v1215 = vpop.permute.xlu0 %1214
        %v1217 = vsel %vm263, %v1192, 0
        %v1220 = vsel %vm326, %v1215, 0
        %1222 = vmatpush.bf16.msra.mxu0 0
        %1223 = vmatpush.bf16.msra.mxu0 0
        %1224 = vmatpush.bf16.msra.mxu0 0
        %1225 = vmatpush.bf16.msra.mxu0 0
        %1226 = vmatpush.bf16.msra.mxu0 0
        %1227 = vmatpush.bf16.msra.mxu0 0
        %1228 = vmatpush.bf16.msra.mxu0 0
        %1229 = vmatpush.bf16.msra.mxu0 %v1220
        %1230 = vmatmul.bf16.gmra.mxu0 %v1217
        %v1231 = vpop.f32.mrf.mxu0
        %v1232 = vadd.f32 0.0, %v1231
        %v1233 = vpop.f32.mrf.mxu0
        %1234 = vdwg.mxu0
        %1237 = vrot.lane.b32.xlu0 %v1211, 16
        %v1238 = vpop.permute.xlu0 %1237
        %1239 = vrot.lane.b32.xlu0 %v1232, 16
        %v1240 = vpop.permute.xlu0 %1239
        %v1243 = vadd.f32 %v799, %v1238
        %v1244 = vadd.f32 %v801, %v1240
        %1245 = vrot.lane.b32.xlu0 %v985, 104
        %v1246 = vpop.permute.xlu0 %1245
        %1247 = vrot.lane.b32.xlu0 %v990, 104
        %v1248 = vpop.permute.xlu0 %1247
        %v1250 = vsel %vm263, %v1246, 0
        %v1253 = vsel %vm263, %v1248, 0
        %1255 = vmatpush.bf16.xpose.msra.mxu0 0
        %1256 = vmatpush.bf16.xpose.msra.mxu0 0
        %1257 = vmatpush.bf16.xpose.msra.mxu0 0
        %1258 = vmatpush.bf16.xpose.msra.mxu0 0
        %1259 = vmatpush.bf16.xpose.msra.mxu0 0
        %1260 = vmatpush.bf16.xpose.msra.mxu0 0
        %1261 = vmatpush.bf16.xpose.msra.mxu0 0
        %1262 = vmatpush.bf16.xpose.msra.mxu0 %v1253
        %1263 = vmatmul.bf16.gmra.mxu0 %v1250
        %v1264 = vpop.f32.mrf.mxu0
        %v1265 = vadd.f32 0.0, %v1264
        %v1266 = vpop.f32.mrf.mxu0
        %1267 = vdwg.mxu0
        %1268 = vrot.lane.b32.xlu0 %v1014, 104
        %v1269 = vpop.permute.xlu0 %1268
        %1270 = vrot.lane.b32.xlu0 %v1019, 104
        %v1271 = vpop.permute.xlu0 %1270
        %v1273 = vsel %vm263, %v1269, 0
        %v1276 = vsel %vm263, %v1271, 0
        %1278 = vmatpush.bf16.xpose.msra.mxu0 0
        %1279 = vmatpush.bf16.xpose.msra.mxu0 0
        %1280 = vmatpush.bf16.xpose.msra.mxu0 0
        %1281 = vmatpush.bf16.xpose.msra.mxu0 0
        %1282 = vmatpush.bf16.xpose.msra.mxu0 0
        %1283 = vmatpush.bf16.xpose.msra.mxu0 0
        %1284 = vmatpush.bf16.xpose.msra.mxu0 0
        %1285 = vmatpush.bf16.xpose.msra.mxu0 %v1276
        %1286 = vmatmul.bf16.gmra.mxu0 %v1273
        %v1287 = vpop.f32.mrf.mxu0
        %v1288 = vadd.f32 0.0, %v1287
        %v1289 = vpop.f32.mrf.mxu0
        %1290 = vdwg.mxu0
        %v1291 = vsel %vm263, %v1265, -inf
        %1292 = vmax.xlane.f32.xlu0 %v1291
        %v1293 = vpop.xlane.xlu0 %1292
        %v1294 = vsel %vm263, %v1288, -inf
        %1295 = vmax.xlane.f32.xlu0 %v1294
        %v1296 = vpop.xlane.xlu0 %1295
        %v1297 = vsub.f32 %v1265, %v1293
        %v1298 = vsub.f32 %v1288, %v1296
        %v1299 = vmul.f32 %v1297, 1.442695
        %v1300 = vpow.pop %v1299
        %v1301 = vmul.f32 %v1298, 1.442695
        %v1302 = vpow.pop %v1301
        %v1303 = vsel %vm263, %v1300, 0.0
        %1304 = vadd.xlane.f32.xlu0 %v1303
        %v1305 = vpop.xlane.xlu0 %1304
        %v1306 = vsel %vm263, %v1302, 0.0
        %1307 = vadd.xlane.f32.xlu0 %v1306
        %v1308 = vpop.xlane.xlu0 %1307
        %v1309 = vrcp.pop %v1305
        %v1310 = vrcp.pop %v1308
        %v1311 = vmul.f32 %v1300, %v1309
        %v1312 = vmul.f32 %v1302, %v1310
        %v1313 = vpack.c.bf16 %v1311, %v1311
        %v1314 = vpack.c.bf16 %v1312, %v1312
        %1315 = vrot.lane.b32.xlu0 %v1067, 104
        %v1316 = vpop.permute.xlu0 %1315
        %v1318 = vsel %vm263, %v1313, 0
        %v1321 = vsel %vm326, %v1316, 0
        %1323 = vmatpush.bf16.msra.mxu0 0
        %1324 = vmatpush.bf16.msra.mxu0 0
        %1325 = vmatpush.bf16.msra.mxu0 0
        %1326 = vmatpush.bf16.msra.mxu0 0
        %1327 = vmatpush.bf16.msra.mxu0 0
        %1328 = vmatpush.bf16.msra.mxu0 0
        %1329 = vmatpush.bf16.msra.mxu0 0
        %1330 = vmatpush.bf16.msra.mxu0 %v1321
        %1331 = vmatmul.bf16.gmra.mxu0 %v1318
        %v1332 = vpop.f32.mrf.mxu0
        %v1333 = vadd.f32 0.0, %v1332
        %v1334 = vpop.f32.mrf.mxu0
        %1335 = vdwg.mxu0
        %1336 = vrot.lane.b32.xlu0 %v1091, 104
        %v1337 = vpop.permute.xlu0 %1336
        %v1339 = vsel %vm263, %v1314, 0
        %v1342 = vsel %vm326, %v1337, 0
        %1344 = vmatpush.bf16.msra.mxu0 0
        %1345 = vmatpush.bf16.msra.mxu0 0
        %1346 = vmatpush.bf16.msra.mxu0 0
        %1347 = vmatpush.bf16.msra.mxu0 0
        %1348 = vmatpush.bf16.msra.mxu0 0
        %1349 = vmatpush.bf16.msra.mxu0 0
        %1350 = vmatpush.bf16.msra.mxu0 0
        %1351 = vmatpush.bf16.msra.mxu0 %v1342
        %1352 = vmatmul.bf16.gmra.mxu0 %v1339
        %v1353 = vpop.f32.mrf.mxu0
        %v1354 = vadd.f32 0.0, %v1353
        %v1355 = vpop.f32.mrf.mxu0
        %1356 = vdwg.mxu0
        %1359 = vrot.lane.b32.xlu0 %v1333, 24
        %v1360 = vpop.permute.xlu0 %1359
        %1361 = vrot.lane.b32.xlu0 %v1354, 24
        %v1362 = vpop.permute.xlu0 %1361
        %v1365 = vadd.f32 %v799, %v1360
        %v1366 = vadd.f32 %v801, %v1362
        %v1367 = vsel %vm263, %v981, %v1121
        %v1368 = vsel %vm263, %v982, %v1122
        %v1369 = vsel %vm213, %v1367, %v1243
        %v1370 = vsel %vm213, %v1368, %v1244
        %v1371 = vsel %vm734, %v1369, %v1365
        %v1372 = vsel %vm734, %v1370, %v1366
        %v1373 = vld [vmem:[#allocation2 + $0x78] sm:$0xf]
        %v1374 = vld [vmem:[#allocation2 + $0x7c] sm:$0xf]
        %v1375 = vld [vmem:[#allocation2 + $0x80] sm:$0xf]
        %v1376 = vld [vmem:[#allocation2 + $0x84] sm:$0xf]
        %v1377 = vld [vmem:[#allocation2 + $0x88] sm:$0x1]
        %v1378 = vunpack.c.l.bf16 %v1377
        %v1379 = vpack.c.bf16 %v1372, %v1371
        %v1380 = vperm.slane %v1378, 0
        %v1385 = vunpack.c.l.b16 %v1373
        %v1386 = vunpack.c.l.b16 %v1374
        %v1387 = vunpack.c.l.b16 %v1375
        %v1388 = vunpack.c.l.b16 %v1376
        %v1389 = vpack.c.b16 %v1386, %v1385
        %v1390 = vpack.c.b16 %v1388, %v1387
        %v1394 = vsel %vm180, %v1379, 0
        %1396 = vmatpush.bf16.msra.mxu0 0
        %1397 = vmatpush.bf16.msra.mxu0 0
        %1398 = vmatpush.bf16.msra.mxu0 0
        %1399 = vmatpush.bf16.msra.mxu0 0
        %1400 = vmatpush.bf16.msra.mxu0 0
        %1401 = vmatpush.bf16.msra.mxu0 0
        %1402 = vmatpush.bf16.msra.mxu0 %v1390
        %1403 = vmatpush.bf16.msra.mxu0 %v1389
        %1404 = vmatmul.bf16.gmra.mxu0 %v1394
        %v1405 = vpop.f32.mrf.mxu0
        %v1406 = vadd.f32 %v1380, %v1405
        %v1407 = vpop.f32.mrf.mxu0
        %v1408 = vadd.f32 %v1380, %v1407
        %1409 = vdwg.mxu0
        %v1410 = vmax.f32 %v1406, 0.0
        %v1411 = vmax.f32 %v1408, 0.0
        %v1412 = vadd.f32 %v1371, %v1410
        %v1413 = vadd.f32 %v1372, %v1411
        %v1414 = vld [vmem:[#allocation2 + $0x8c] sm:$0xf]
        %v1415 = vld [vmem:[#allocation2 + $0x90] sm:$0xf]
        %v1416 = vld [vmem:[#allocation2 + $0x94] sm:$0xf]
        %v1417 = vld [vmem:[#allocation2 + $0x98] sm:$0xf]
        %v1418 = vld [vmem:[#allocation2 + $0x9c] sm:$0xf]
        %v1419 = vld [vmem:[#allocation2 + $0xa0] sm:$0x1]
        %v1420 = vunpack.c.l.bf16 %v1419
        %v1421 = vperm.slane %v1420, 0
        %v1426 = vunpack.c.l.b16 %v1415
        %v1427 = vunpack.c.l.b16 %v1416
        %v1428 = vunpack.c.l.b16 %v1417
        %v1429 = vunpack.c.l.b16 %v1418
        %v1430 = vpack.c.b16 %v1427, %v1426
        %v1431 = vpack.c.b16 %v1429, %v1428
        %v1435 = vsel %vm180, %v1414, 0
        %1437 = vmatpush.bf16.msra.mxu0 0
        %1438 = vmatpush.bf16.msra.mxu0 0
        %1439 = vmatpush.bf16.msra.mxu0 0
        %1440 = vmatpush.bf16.msra.mxu0 0
        %1441 = vmatpush.bf16.msra.mxu0 0
        %1442 = vmatpush.bf16.msra.mxu0 0
        %1443 = vmatpush.bf16.msra.mxu0 %v1431
        %1444 = vmatpush.bf16.msra.mxu0 %v1430
        %1445 = vmatmul.bf16.gmra.mxu0 %v1435
        %v1446 = vpop.f32.mrf.mxu0
        %v1447 = vadd.f32 %v1421, %v1446
        %v1448 = vpop.f32.mrf.mxu0
        %1449 = vdwg.mxu0
        %v1450 = vpack.c.bf16 %v1413, %v1412
        %v1451 = vld [vmem:[#allocation2 + $0xa4] sm:$0xf]
        %v1452 = vld [vmem:[#allocation2 + $0xa8] sm:$0xf]
        %v1453 = vld [vmem:[#allocation2 + $0xac] sm:$0xf]
        %v1454 = vld [vmem:[#allocation2 + $0xb0] sm:$0xf]
        %v1455 = vld [vmem:[#allocation2 + $0xb4] sm:$0x1]
        %v1456 = vunpack.c.l.bf16 %v1455
        %v1457 = vperm.slane %v1456, 0
        %v1462 = vunpack.c.l.b16 %v1451
        %v1463 = vunpack.c.l.b16 %v1452
        %v1464 = vunpack.c.l.b16 %v1453
        %v1465 = vunpack.c.l.b16 %v1454
        %v1466 = vpack.c.b16 %v1463, %v1462
        %v1467 = vpack.c.b16 %v1465, %v1464
        %v1471 = vsel %vm180, %v1450, 0
        %1473 = vmatpush.bf16.msra.mxu0 0
        %1474 = vmatpush.bf16.msra.mxu0 0
        %1475 = vmatpush.bf16.msra.mxu0 0
        %1476 = vmatpush.bf16.msra.mxu0 0
        %1477 = vmatpush.bf16.msra.mxu0 0
        %1478 = vmatpush.bf16.msra.mxu0 0
        %1479 = vmatpush.bf16.msra.mxu0 %v1467
        %1480 = vmatpush.bf16.msra.mxu0 %v1466
        %1481 = vmatmul.bf16.gmra.mxu0 %v1471
        %v1482 = vpop.f32.mrf.mxu0
        %v1483 = vadd.f32 %v1457, %v1482
        %v1484 = vpop.f32.mrf.mxu0
        %v1485 = vadd.f32 %v1457, %v1484
        %1486 = vdwg.mxu0
        %v1487 = vmul.f32 %v1483, 0.17677669
        %v1488 = vmul.f32 %v1485, 0.17677669
        %v1489 = vpack.c.bf16 %v1487, %v1487
        %v1490 = vpack.c.bf16 %v1488, %v1488
        %v1491 = vld [vmem:[#allocation2 + $0xb8] sm:$0xf]
        %v1492 = vld [vmem:[#allocation2 + $0xbc] sm:$0xf]
        %v1493 = vld [vmem:[#allocation2 + $0xc0] sm:$0xf]
        %v1494 = vld [vmem:[#allocation2 + $0xc4] sm:$0xf]
        %v1495 = vld [vmem:[#allocation2 + $0xc8] sm:$0x1]
        %v1496 = vunpack.c.l.bf16 %v1495
        %v1497 = vperm.slane %v1496, 0
        %v1502 = vunpack.c.l.b16 %v1491
        %v1503 = vunpack.c.l.b16 %v1492
        %v1504 = vunpack.c.l.b16 %v1493
        %v1505 = vunpack.c.l.b16 %v1494
        %v1506 = vpack.c.b16 %v1503, %v1502
        %v1507 = vpack.c.b16 %v1505, %v1504
        %1510 = vmatpush.bf16.msra.mxu0 0
        %1511 = vmatpush.bf16.msra.mxu0 0
        %1512 = vmatpush.bf16.msra.mxu0 0
        %1513 = vmatpush.bf16.msra.mxu0 0
        %1514 = vmatpush.bf16.msra.mxu0 0
        %1515 = vmatpush.bf16.msra.mxu0 0
        %1516 = vmatpush.bf16.msra.mxu0 %v1507
        %1517 = vmatpush.bf16.msra.mxu0 %v1506
        %1518 = vmatmul.bf16.gmra.mxu0 %v1471
        %v1519 = vpop.f32.mrf.mxu0
        %v1520 = vadd.f32 %v1497, %v1519
        %v1521 = vpop.f32.mrf.mxu0
        %v1522 = vadd.f32 %v1497, %v1521
        %1523 = vdwg.mxu0
        %v1524 = vpack.c.bf16 %v1520, %v1520
        %v1525 = vpack.c.bf16 %v1522, %v1522
        %v1526 = vpack.c.bf16 %v1447, %v1447
        %v1528 = vsel %vm263, %v1526, 0
        %v1531 = vsel %vm263, %v1489, 0
        %1533 = vmatpush.bf16.xpose.msra.mxu0 0
        %1534 = vmatpush.bf16.xpose.msra.mxu0 0
        %1535 = vmatpush.bf16.xpose.msra.mxu0 0
        %1536 = vmatpush.bf16.xpose.msra.mxu0 0
        %1537 = vmatpush.bf16.xpose.msra.mxu0 0
        %1538 = vmatpush.bf16.xpose.msra.mxu0 0
        %1539 = vmatpush.bf16.xpose.msra.mxu0 0
        %1540 = vmatpush.bf16.xpose.msra.mxu0 %v1531
        %1541 = vmatmul.bf16.gmra.mxu0 %v1528
        %v1542 = vpop.f32.mrf.mxu0
        %v1543 = vadd.f32 0.0, %v1542
        %v1544 = vpop.f32.mrf.mxu0
        %1545 = vdwg.mxu0
        %v1547 = vsel %vm263, %v1490, 0
        %1549 = vmatpush.bf16.xpose.msra.mxu0 0
        %1550 = vmatpush.bf16.xpose.msra.mxu0 0
        %1551 = vmatpush.bf16.xpose.msra.mxu0 0
        %1552 = vmatpush.bf16.xpose.msra.mxu0 0
        %1553 = vmatpush.bf16.xpose.msra.mxu0 0
        %1554 = vmatpush.bf16.xpose.msra.mxu0 0
        %1555 = vmatpush.bf16.xpose.msra.mxu0 0
        %1556 = vmatpush.bf16.xpose.msra.mxu0 %v1547
        %1557 = vmatmul.bf16.gmra.mxu0 %v1528
        %v1558 = vpop.f32.mrf.mxu0
        %v1559 = vadd.f32 0.0, %v1558
        %v1560 = vpop.f32.mrf.mxu0
        %1561 = vdwg.mxu0
        %v1562 = vsel %vm263, %v1543, -inf
        %1563 = vmax.xlane.f32.xlu0 %v1562
        %v1564 = vpop.xlane.xlu0 %1563
        %v1565 = vsel %vm263, %v1559, -inf
        %1566 = vmax.xlane.f32.xlu0 %v1565
        %v1567 = vpop.xlane.xlu0 %1566
        %v1568 = vsub.f32 %v1543, %v1564
        %v1569 = vsub.f32 %v1559, %v1567
        %v1570 = vmul.f32 %v1568, 1.442695
        %v1571 = vpow.pop %v1570
        %v1572 = vmul.f32 %v1569, 1.442695
        %v1573 = vpow.pop %v1572
        %v1574 = vsel %vm263, %v1571, 0.0
        %1575 = vadd.xlane.f32.xlu0 %v1574
        %v1576 = vpop.xlane.xlu0 %1575
        %v1577 = vsel %vm263, %v1573, 0.0
        %1578 = vadd.xlane.f32.xlu0 %v1577
        %v1579 = vpop.xlane.xlu0 %1578
        %v1580 = vrcp.pop %v1576
        %v1581 = vrcp.pop %v1579
        %v1582 = vmul.f32 %v1571, %v1580
        %v1583 = vmul.f32 %v1573, %v1581
        %v1584 = vpack.c.bf16 %v1582, %v1582
        %v1585 = vpack.c.bf16 %v1583, %v1583
        %v1587 = vsel %vm263, %v1584, 0
        %v1590 = vsel %vm326, %v1524, 0
        %1592 = vmatpush.bf16.msra.mxu0 0
        %1593 = vmatpush.bf16.msra.mxu0 0
        %1594 = vmatpush.bf16.msra.mxu0 0
        %1595 = vmatpush.bf16.msra.mxu0 0
        %1596 = vmatpush.bf16.msra.mxu0 0
        %1597 = vmatpush.bf16.msra.mxu0 0
        %1598 = vmatpush.bf16.msra.mxu0 0
        %1599 = vmatpush.bf16.msra.mxu0 %v1590
        %1600 = vmatmul.bf16.gmra.mxu0 %v1587
        %v1601 = vpop.f32.mrf.mxu0
        %v1602 = vadd.f32 0.0, %v1601
        %v1603 = vpop.f32.mrf.mxu0
        %1604 = vdwg.mxu0
        %v1606 = vsel %vm263, %v1585, 0
        %v1609 = vsel %vm326, %v1525, 0
        %1611 = vmatpush.bf16.msra.mxu0 0
        %1612 = vmatpush.bf16.msra.mxu0 0
        %1613 = vmatpush.bf16.msra.mxu0 0
        %1614 = vmatpush.bf16.msra.mxu0 0
        %1615 = vmatpush.bf16.msra.mxu0 0
        %1616 = vmatpush.bf16.msra.mxu0 0
        %1617 = vmatpush.bf16.msra.mxu0 0
        %1618 = vmatpush.bf16.msra.mxu0 %v1609
        %1619 = vmatmul.bf16.gmra.mxu0 %v1606
        %v1620 = vpop.f32.mrf.mxu0
        %v1621 = vadd.f32 0.0, %v1620
        %v1622 = vpop.f32.mrf.mxu0
        %1623 = vdwg.mxu0
        %v1624 = vadd.f32 %v1447, %v1602
        %v1625 = vadd.f32 %v1447, %v1621
        %v1627 = vunpack.c.l.b16 %v1526
        %v1628 = vpack.c.b16 %v1627, %v1627
        %1629 = vrot.lane.b32.xlu0 %v1628, 120
        %v1630 = vpop.permute.xlu0 %1629
        %v1632 = vunpack.c.l.b16 %v1489
        %v1633 = vpack.c.b16 %v1632, %v1632
        %1634 = vrot.lane.b32.xlu0 %v1633, 120
        %v1635 = vpop.permute.xlu0 %1634
        %v1637 = vsel %vm263, %v1630, 0
        %v1640 = vsel %vm263, %v1635, 0
        %1642 = vmatpush.bf16.xpose.msra.mxu0 0
        %1643 = vmatpush.bf16.xpose.msra.mxu0 0
        %1644 = vmatpush.bf16.xpose.msra.mxu0 0
        %1645 = vmatpush.bf16.xpose.msra.mxu0 0
        %1646 = vmatpush.bf16.xpose.msra.mxu0 0
        %1647 = vmatpush.bf16.xpose.msra.mxu0 0
        %1648 = vmatpush.bf16.xpose.msra.mxu0 0
        %1649 = vmatpush.bf16.xpose.msra.mxu0 %v1640
        %1650 = vmatmul.bf16.gmra.mxu0 %v1637
        %v1651 = vpop.f32.mrf.mxu0
        %v1652 = vadd.f32 0.0, %v1651
        %v1653 = vpop.f32.mrf.mxu0
        %1654 = vdwg.mxu0
        %v1656 = vunpack.c.l.b16 %v1490
        %v1657 = vpack.c.b16 %v1656, %v1656
        %1658 = vrot.lane.b32.xlu0 %v1657, 120
        %v1659 = vpop.permute.xlu0 %1658
        %v1661 = vsel %vm263, %v1659, 0
        %1663 = vmatpush.bf16.xpose.msra.mxu0 0
        %1664 = vmatpush.bf16.xpose.msra.mxu0 0
        %1665 = vmatpush.bf16.xpose.msra.mxu0 0
        %1666 = vmatpush.bf16.xpose.msra.mxu0 0
        %1667 = vmatpush.bf16.xpose.msra.mxu0 0
        %1668 = vmatpush.bf16.xpose.msra.mxu0 0
        %1669 = vmatpush.bf16.xpose.msra.mxu0 0
        %1670 = vmatpush.bf16.xpose.msra.mxu0 %v1661
        %1671 = vmatmul.bf16.gmra.mxu0 %v1637
        %v1672 = vpop.f32.mrf.mxu0
        %v1673 = vadd.f32 0.0, %v1672
        %v1674 = vpop.f32.mrf.mxu0
        %1675 = vdwg.mxu0
        %v1676 = vsel %vm263, %v1652, -inf
        %1677 = vmax.xlane.f32.xlu0 %v1676
        %v1678 = vpop.xlane.xlu0 %1677
        %v1679 = vsel %vm263, %v1673, -inf
        %1680 = vmax.xlane.f32.xlu0 %v1679
        %v1681 = vpop.xlane.xlu0 %1680
        %v1682 = vsub.f32 %v1652, %v1678
        %v1683 = vsub.f32 %v1673, %v1681
        %v1684 = vmul.f32 %v1682, 1.442695
        %v1685 = vpow.pop %v1684
        %v1686 = vmul.f32 %v1683, 1.442695
        %v1687 = vpow.pop %v1686
        %v1688 = vsel %vm263, %v1685, 0.0
        %1689 = vadd.xlane.f32.xlu0 %v1688
        %v1690 = vpop.xlane.xlu0 %1689
        %v1691 = vsel %vm263, %v1687, 0.0
        %1692 = vadd.xlane.f32.xlu0 %v1691
        %v1693 = vpop.xlane.xlu0 %1692
        %v1694 = vrcp.pop %v1690
        %v1695 = vrcp.pop %v1693
        %v1696 = vmul.f32 %v1685, %v1694
        %v1697 = vmul.f32 %v1687, %v1695
        %v1698 = vpack.c.bf16 %v1696, %v1696
        %v1699 = vpack.c.bf16 %v1697, %v1697
        %v1701 = vunpack.c.l.b16 %v1524
        %v1702 = vpack.c.b16 %v1701, %v1701
        %1703 = vrot.lane.b32.xlu0 %v1702, 120
        %v1704 = vpop.permute.xlu0 %1703
        %v1706 = vsel %vm263, %v1698, 0
        %v1709 = vsel %vm326, %v1704, 0
        %1711 = vmatpush.bf16.msra.mxu0 0
        %1712 = vmatpush.bf16.msra.mxu0 0
        %1713 = vmatpush.bf16.msra.mxu0 0
        %1714 = vmatpush.bf16.msra.mxu0 0
        %1715 = vmatpush.bf16.msra.mxu0 0
        %1716 = vmatpush.bf16.msra.mxu0 0
        %1717 = vmatpush.bf16.msra.mxu0 0
        %1718 = vmatpush.bf16.msra.mxu0 %v1709
        %1719 = vmatmul.bf16.gmra.mxu0 %v1706
        %v1720 = vpop.f32.mrf.mxu0
        %v1721 = vadd.f32 0.0, %v1720
        %v1722 = vpop.f32.mrf.mxu0
        %1723 = vdwg.mxu0
        %v1725 = vunpack.c.l.b16 %v1525
        %v1726 = vpack.c.b16 %v1725, %v1725
        %1727 = vrot.lane.b32.xlu0 %v1726, 120
        %v1728 = vpop.permute.xlu0 %1727
        %v1730 = vsel %vm263, %v1699, 0
        %v1733 = vsel %vm326, %v1728, 0
        %1735 = vmatpush.bf16.msra.mxu0 0
        %1736 = vmatpush.bf16.msra.mxu0 0
        %1737 = vmatpush.bf16.msra.mxu0 0
        %1738 = vmatpush.bf16.msra.mxu0 0
        %1739 = vmatpush.bf16.msra.mxu0 0
        %1740 = vmatpush.bf16.msra.mxu0 0
        %1741 = vmatpush.bf16.msra.mxu0 0
        %1742 = vmatpush.bf16.msra.mxu0 %v1733
        %1743 = vmatmul.bf16.gmra.mxu0 %v1730
        %v1744 = vpop.f32.mrf.mxu0
        %v1745 = vadd.f32 0.0, %v1744
        %v1746 = vpop.f32.mrf.mxu0
        %1747 = vdwg.mxu0
        %1750 = vrot.lane.b32.xlu0 %v1721, 8
        %v1751 = vpop.permute.xlu0 %1750
        %1752 = vrot.lane.b32.xlu0 %v1745, 8
        %v1753 = vpop.permute.xlu0 %1752
        %v1756 = vadd.f32 %v1447, %v1751
        %v1757 = vadd.f32 %v1447, %v1753
        %1758 = vrot.lane.b32.xlu0 %v1628, 112
        %v1759 = vpop.permute.xlu0 %1758
        %1760 = vrot.lane.b32.xlu0 %v1633, 112
        %v1761 = vpop.permute.xlu0 %1760
        %v1763 = vsel %vm263, %v1759, 0
        %v1766 = vsel %vm263, %v1761, 0
        %1768 = vmatpush.bf16.xpose.msra.mxu0 0
        %1769 = vmatpush.bf16.xpose.msra.mxu0 0
        %1770 = vmatpush.bf16.xpose.msra.mxu0 0
        %1771 = vmatpush.bf16.xpose.msra.mxu0 0
        %1772 = vmatpush.bf16.xpose.msra.mxu0 0
        %1773 = vmatpush.bf16.xpose.msra.mxu0 0
        %1774 = vmatpush.bf16.xpose.msra.mxu0 0
        %1775 = vmatpush.bf16.xpose.msra.mxu0 %v1766
        %1776 = vmatmul.bf16.gmra.mxu0 %v1763
        %v1777 = vpop.f32.mrf.mxu0
        %v1778 = vadd.f32 0.0, %v1777
        %v1779 = vpop.f32.mrf.mxu0
        %1780 = vdwg.mxu0
        %1781 = vrot.lane.b32.xlu0 %v1657, 112
        %v1782 = vpop.permute.xlu0 %1781
        %v1784 = vsel %vm263, %v1782, 0
        %1786 = vmatpush.bf16.xpose.msra.mxu0 0
        %1787 = vmatpush.bf16.xpose.msra.mxu0 0
        %1788 = vmatpush.bf16.xpose.msra.mxu0 0
        %1789 = vmatpush.bf16.xpose.msra.mxu0 0
        %1790 = vmatpush.bf16.xpose.msra.mxu0 0
        %1791 = vmatpush.bf16.xpose.msra.mxu0 0
        %1792 = vmatpush.bf16.xpose.msra.mxu0 0
        %1793 = vmatpush.bf16.xpose.msra.mxu0 %v1784
        %1794 = vmatmul.bf16.gmra.mxu0 %v1763
        %v1795 = vpop.f32.mrf.mxu0
        %v1796 = vadd.f32 0.0, %v1795
        %v1797 = vpop.f32.mrf.mxu0
        %1798 = vdwg.mxu0
        %v1799 = vsel %vm263, %v1778, -inf
        %1800 = vmax.xlane.f32.xlu0 %v1799
        %v1801 = vpop.xlane.xlu0 %1800
        %v1802 = vsel %vm263, %v1796, -inf
        %1803 = vmax.xlane.f32.xlu0 %v1802
        %v1804 = vpop.xlane.xlu0 %1803
        %v1805 = vsub.f32 %v1778, %v1801
        %v1806 = vsub.f32 %v1796, %v1804
        %v1807 = vmul.f32 %v1805, 1.442695
        %v1808 = vpow.pop %v1807
        %v1809 = vmul.f32 %v1806, 1.442695
        %v1810 = vpow.pop %v1809
        %v1811 = vsel %vm263, %v1808, 0.0
        %1812 = vadd.xlane.f32.xlu0 %v1811
        %v1813 = vpop.xlane.xlu0 %1812
        %v1814 = vsel %vm263, %v1810, 0.0
        %1815 = vadd.xlane.f32.xlu0 %v1814
        %v1816 = vpop.xlane.xlu0 %1815
        %v1817 = vrcp.pop %v1813
        %v1818 = vrcp.pop %v1816
        %v1819 = vmul.f32 %v1808, %v1817
        %v1820 = vmul.f32 %v1810, %v1818
        %v1821 = vpack.c.bf16 %v1819, %v1819
        %v1822 = vpack.c.bf16 %v1820, %v1820
        %1823 = vrot.lane.b32.xlu0 %v1702, 112
        %v1824 = vpop.permute.xlu0 %1823
        %v1826 = vsel %vm263, %v1821, 0
        %v1829 = vsel %vm326, %v1824, 0
        %1831 = vmatpush.bf16.msra.mxu0 0
        %1832 = vmatpush.bf16.msra.mxu0 0
        %1833 = vmatpush.bf16.msra.mxu0 0
        %1834 = vmatpush.bf16.msra.mxu0 0
        %1835 = vmatpush.bf16.msra.mxu0 0
        %1836 = vmatpush.bf16.msra.mxu0 0
        %1837 = vmatpush.bf16.msra.mxu0 0
        %1838 = vmatpush.bf16.msra.mxu0 %v1829
        %1839 = vmatmul.bf16.gmra.mxu0 %v1826
        %v1840 = vpop.f32.mrf.mxu0
        %v1841 = vadd.f32 0.0, %v1840
        %v1842 = vpop.f32.mrf.mxu0
        %1843 = vdwg.mxu0
        %1844 = vrot.lane.b32.xlu0 %v1726, 112
        %v1845 = vpop.permute.xlu0 %1844
        %v1847 = vsel %vm263, %v1822, 0
        %v1850 = vsel %vm326, %v1845, 0
        %1852 = vmatpush.bf16.msra.mxu0 0
        %1853 = vmatpush.bf16.msra.mxu0 0
        %1854 = vmatpush.bf16.msra.mxu0 0
        %1855 = vmatpush.bf16.msra.mxu0 0
        %1856 = vmatpush.bf16.msra.mxu0 0
        %1857 = vmatpush.bf16.msra.mxu0 0
        %1858 = vmatpush.bf16.msra.mxu0 0
        %1859 = vmatpush.bf16.msra.mxu0 %v1850
        %1860 = vmatmul.bf16.gmra.mxu0 %v1847
        %v1861 = vpop.f32.mrf.mxu0
        %v1862 = vadd.f32 0.0, %v1861
        %v1863 = vpop.f32.mrf.mxu0
        %1864 = vdwg.mxu0
        %1867 = vrot.lane.b32.xlu0 %v1841, 16
        %v1868 = vpop.permute.xlu0 %1867
        %1869 = vrot.lane.b32.xlu0 %v1862, 16
        %v1870 = vpop.permute.xlu0 %1869
        %v1873 = vadd.f32 %v1447, %v1868
        %v1874 = vadd.f32 %v1447, %v1870
        %1875 = vrot.lane.b32.xlu0 %v1628, 104
        %v1876 = vpop.permute.xlu0 %1875
        %1877 = vrot.lane.b32.xlu0 %v1633, 104
        %v1878 = vpop.permute.xlu0 %1877
        %v1880 = vsel %vm263, %v1876, 0
        %v1883 = vsel %vm263, %v1878, 0
        %1885 = vmatpush.bf16.xpose.msra.mxu0 0
        %1886 = vmatpush.bf16.xpose.msra.mxu0 0
        %1887 = vmatpush.bf16.xpose.msra.mxu0 0
        %1888 = vmatpush.bf16.xpose.msra.mxu0 0
        %1889 = vmatpush.bf16.xpose.msra.mxu0 0
        %1890 = vmatpush.bf16.xpose.msra.mxu0 0
        %1891 = vmatpush.bf16.xpose.msra.mxu0 0
        %1892 = vmatpush.bf16.xpose.msra.mxu0 %v1883
        %1893 = vmatmul.bf16.gmra.mxu0 %v1880
        %v1894 = vpop.f32.mrf.mxu0
        %v1895 = vadd.f32 0.0, %v1894
        %v1896 = vpop.f32.mrf.mxu0
        %1897 = vdwg.mxu0
        %1898 = vrot.lane.b32.xlu0 %v1657, 104
        %v1899 = vpop.permute.xlu0 %1898
        %v1901 = vsel %vm263, %v1899, 0
        %1903 = vmatpush.bf16.xpose.msra.mxu0 0
        %1904 = vmatpush.bf16.xpose.msra.mxu0 0
        %1905 = vmatpush.bf16.xpose.msra.mxu0 0
        %1906 = vmatpush.bf16.xpose.msra.mxu0 0
        %1907 = vmatpush.bf16.xpose.msra.mxu0 0
        %1908 = vmatpush.bf16.xpose.msra.mxu0 0
        %1909 = vmatpush.bf16.xpose.msra.mxu0 0
        %1910 = vmatpush.bf16.xpose.msra.mxu0 %v1901
        %1911 = vmatmul.bf16.gmra.mxu0 %v1880
        %v1912 = vpop.f32.mrf.mxu0
        %v1913 = vadd.f32 0.0, %v1912
        %v1914 = vpop.f32.mrf.mxu0
        %1915 = vdwg.mxu0
        %v1916 = vsel %vm263, %v1895, -inf
        %1917 = vmax.xlane.f32.xlu0 %v1916
        %v1918 = vpop.xlane.xlu0 %1917
        %v1919 = vsel %vm263, %v1913, -inf
        %1920 = vmax.xlane.f32.xlu0 %v1919
        %v1921 = vpop.xlane.xlu0 %1920
        %v1922 = vsub.f32 %v1895, %v1918
        %v1923 = vsub.f32 %v1913, %v1921
        %v1924 = vmul.f32 %v1922, 1.442695
        %v1925 = vpow.pop %v1924
        %v1926 = vmul.f32 %v1923, 1.442695
        %v1927 = vpow.pop %v1926
        %v1928 = vsel %vm263, %v1925, 0.0
        %1929 = vadd.xlane.f32.xlu0 %v1928
        %v1930 = vpop.xlane.xlu0 %1929
        %v1931 = vsel %vm263, %v1927, 0.0
        %1932 = vadd.xlane.f32.xlu0 %v1931
        %v1933 = vpop.xlane.xlu0 %1932
        %v1934 = vrcp.pop %v1930
        %v1935 = vrcp.pop %v1933
        %v1936 = vmul.f32 %v1925, %v1934
        %v1937 = vmul.f32 %v1927, %v1935
        %v1938 = vpack.c.bf16 %v1936, %v1936
        %v1939 = vpack.c.bf16 %v1937, %v1937
        %1940 = vrot.lane.b32.xlu0 %v1702, 104
        %v1941 = vpop.permute.xlu0 %1940
        %v1943 = vsel %vm263, %v1938, 0
        %v1946 = vsel %vm326, %v1941, 0
        %1948 = vmatpush.bf16.msra.mxu0 0
        %1949 = vmatpush.bf16.msra.mxu0 0
        %1950 = vmatpush.bf16.msra.mxu0 0
        %1951 = vmatpush.bf16.msra.mxu0 0
        %1952 = vmatpush.bf16.msra.mxu0 0
        %1953 = vmatpush.bf16.msra.mxu0 0
        %1954 = vmatpush.bf16.msra.mxu0 0
        %1955 = vmatpush.bf16.msra.mxu0 %v1946
        %1956 = vmatmul.bf16.gmra.mxu0 %v1943
        %v1957 = vpop.f32.mrf.mxu0
        %v1958 = vadd.f32 0.0, %v1957
        %v1959 = vpop.f32.mrf.mxu0
        %1960 = vdwg.mxu0
        %1961 = vrot.lane.b32.xlu0 %v1726, 104
        %v1962 = vpop.permute.xlu0 %1961
        %v1964 = vsel %vm263, %v1939, 0
        %v1967 = vsel %vm326, %v1962, 0
        %1969 = vmatpush.bf16.msra.mxu0 0
        %1970 = vmatpush.bf16.msra.mxu0 0
        %1971 = vmatpush.bf16.msra.mxu0 0
        %1972 = vmatpush.bf16.msra.mxu0 0
        %1973 = vmatpush.bf16.msra.mxu0 0
        %1974 = vmatpush.bf16.msra.mxu0 0
        %1975 = vmatpush.bf16.msra.mxu0 0
        %1976 = vmatpush.bf16.msra.mxu0 %v1967
        %1977 = vmatmul.bf16.gmra.mxu0 %v1964
        %v1978 = vpop.f32.mrf.mxu0
        %v1979 = vadd.f32 0.0, %v1978
        %v1980 = vpop.f32.mrf.mxu0
        %1981 = vdwg.mxu0
        %1984 = vrot.lane.b32.xlu0 %v1958, 24
        %v1985 = vpop.permute.xlu0 %1984
        %1986 = vrot.lane.b32.xlu0 %v1979, 24
        %v1987 = vpop.permute.xlu0 %1986
        %v1990 = vadd.f32 %v1447, %v1985
        %v1991 = vadd.f32 %v1447, %v1987
        %v1992 = vsel %vm263, %v1624, %v1756
        %v1993 = vsel %vm263, %v1625, %v1757
        %v1994 = vsel %vm213, %v1992, %v1873
        %v1995 = vsel %vm213, %v1993, %v1874
        %v1996 = vsel %vm734, %v1994, %v1990
        %v1997 = vsel %vm734, %v1995, %v1991
        %v1998 = vld [vmem:[#allocation2 + $0xcc] sm:$0xf]
        %v1999 = vld [vmem:[#allocation2 + $0xd0] sm:$0xf]
        %v2000 = vld [vmem:[#allocation2 + $0xd4] sm:$0xf]
        %v2001 = vld [vmem:[#allocation2 + $0xd8] sm:$0xf]
        %v2002 = vld [vmem:[#allocation2 + $0xdc] sm:$0x1]
        %v2003 = vunpack.c.l.bf16 %v2002
        %v2004 = vpack.c.bf16 %v1997, %v1996
        %v2005 = vperm.slane %v2003, 0
        %v2010 = vunpack.c.l.b16 %v1998
        %v2011 = vunpack.c.l.b16 %v1999
        %v2012 = vunpack.c.l.b16 %v2000
        %v2013 = vunpack.c.l.b16 %v2001
        %v2014 = vpack.c.b16 %v2011, %v2010
        %v2015 = vpack.c.b16 %v2013, %v2012
        %v2019 = vsel %vm180, %v2004, 0
        %2021 = vmatpush.bf16.msra.mxu0 0
        %2022 = vmatpush.bf16.msra.mxu0 0
        %2023 = vmatpush.bf16.msra.mxu0 0
        %2024 = vmatpush.bf16.msra.mxu0 0
        %2025 = vmatpush.bf16.msra.mxu0 0
        %2026 = vmatpush.bf16.msra.mxu0 0
        %2027 = vmatpush.bf16.msra.mxu0 %v2015
        %2028 = vmatpush.bf16.msra.mxu0 %v2014
        %2029 = vmatmul.bf16.gmra.mxu0 %v2019
        %v2030 = vpop.f32.mrf.mxu0
        %v2031 = vadd.f32 %v2005, %v2030
        %v2032 = vpop.f32.mrf.mxu0
        %v2033 = vadd.f32 %v2005, %v2032
        %2034 = vdwg.mxu0
        %v2035 = vmax.f32 %v2031, 0.0
        %v2036 = vmax.f32 %v2033, 0.0
        %v2037 = vadd.f32 %v1996, %v2035
        %v2038 = vadd.f32 %v1997, %v2036
        %v2039 = vld [vmem:[#allocation2 + $0xe0] sm:$0xf]
        %v2040 = vld [vmem:[#allocation2 + $0xe4] sm:$0xf]
        %v2041 = vld [vmem:[#allocation2 + $0xe8] sm:$0xf]
        %v2042 = vld [vmem:[#allocation2 + $0xec] sm:$0xf]
        %v2043 = vld [vmem:[#allocation2 + $0xf0] sm:$0x1]
        %v2044 = vunpack.c.l.bf16 %v2043
        %v2045 = vperm.slane %v2044, 0
        %v2050 = vunpack.c.l.b16 %v2039
        %v2051 = vunpack.c.l.b16 %v2040
        %v2052 = vunpack.c.l.b16 %v2041
        %v2053 = vunpack.c.l.b16 %v2042
        %v2054 = vpack.c.b16 %v2051, %v2050
        %v2055 = vpack.c.b16 %v2053, %v2052
        %2058 = vmatpush.bf16.msra.mxu0 0
        %2059 = vmatpush.bf16.msra.mxu0 0
        %2060 = vmatpush.bf16.msra.mxu0 0
        %2061 = vmatpush.bf16.msra.mxu0 0
        %2062 = vmatpush.bf16.msra.mxu0 0
        %2063 = vmatpush.bf16.msra.mxu0 0
        %2064 = vmatpush.bf16.msra.mxu0 %v2055
        %2065 = vmatpush.bf16.msra.mxu0 %v2054
        %2066 = vmatmul.bf16.gmra.mxu0 %v1471
        %v2067 = vpop.f32.mrf.mxu0
        %v2068 = vadd.f32 %v2045, %v2067
        %v2069 = vpop.f32.mrf.mxu0
        %v2070 = vadd.f32 %v2045, %v2069
        %2071 = vdwg.mxu0
        %v2072 = vpack.c.bf16 %v2038, %v2037
        %v2073 = vld [vmem:[#allocation2 + $0xf4] sm:$0xf]
        %v2074 = vld [vmem:[#allocation2 + $0xf8] sm:$0xf]
        %v2075 = vld [vmem:[#allocation2 + $0xfc] sm:$0xf]
        %v2076 = vld [vmem:[#allocation2 + $0x100] sm:$0xf]
        %v2077 = vld [vmem:[#allocation2 + $0x104] sm:$0x1]
        %v2078 = vunpack.c.l.bf16 %v2077
        %v2079 = vperm.slane %v2078, 0
        %v2084 = vunpack.c.l.b16 %v2073
        %v2085 = vunpack.c.l.b16 %v2074
        %v2086 = vunpack.c.l.b16 %v2075
        %v2087 = vunpack.c.l.b16 %v2076
        %v2088 = vpack.c.b16 %v2085, %v2084
        %v2089 = vpack.c.b16 %v2087, %v2086
        %v2093 = vsel %vm180, %v2072, 0
        %2095 = vmatpush.bf16.msra.mxu0 0
        %2096 = vmatpush.bf16.msra.mxu0 0
        %2097 = vmatpush.bf16.msra.mxu0 0
        %2098 = vmatpush.bf16.msra.mxu0 0
        %2099 = vmatpush.bf16.msra.mxu0 0
        %2100 = vmatpush.bf16.msra.mxu0 0
        %2101 = vmatpush.bf16.msra.mxu0 %v2089
        %2102 = vmatpush.bf16.msra.mxu0 %v2088
        %2103 = vmatmul.bf16.gmra.mxu0 %v2093
        %v2104 = vpop.f32.mrf.mxu0
        %v2105 = vadd.f32 %v2079, %v2104
        %v2106 = vpop.f32.mrf.mxu0
        %v2107 = vadd.f32 %v2079, %v2106
        %2108 = vdwg.mxu0
        %v2109 = vmul.f32 %v2105, 0.17677669
        %v2110 = vmul.f32 %v2107, 0.17677669
        %v2111 = vpack.c.bf16 %v2109, %v2109
        %v2112 = vpack.c.bf16 %v2110, %v2110
        %v2113 = vld [vmem:[#allocation2 + $0x108] sm:$0xf]
        %v2114 = vld [vmem:[#allocation2 + $0x10c] sm:$0xf]
        %v2115 = vld [vmem:[#allocation2 + $0x110] sm:$0xf]
        %v2116 = vld [vmem:[#allocation2 + $0x114] sm:$0xf]
        %v2117 = vld [vmem:[#allocation2 + $0x118] sm:$0x1]
        %v2118 = vunpack.c.l.bf16 %v2117
        %v2119 = vperm.slane %v2118, 0
        %v2124 = vunpack.c.l.b16 %v2113
        %v2125 = vunpack.c.l.b16 %v2114
        %v2126 = vunpack.c.l.b16 %v2115
        %v2127 = vunpack.c.l.b16 %v2116
        %v2128 = vpack.c.b16 %v2125, %v2124
        %v2129 = vpack.c.b16 %v2127, %v2126
        %2132 = vmatpush.bf16.msra.mxu0 0
        %2133 = vmatpush.bf16.msra.mxu0 0
        %2134 = vmatpush.bf16.msra.mxu0 0
        %2135 = vmatpush.bf16.msra.mxu0 0
        %2136 = vmatpush.bf16.msra.mxu0 0
        %2137 = vmatpush.bf16.msra.mxu0 0
        %2138 = vmatpush.bf16.msra.mxu0 %v2129
        %2139 = vmatpush.bf16.msra.mxu0 %v2128
        %2140 = vmatmul.bf16.gmra.mxu0 %v2093
        %v2141 = vpop.f32.mrf.mxu0
        %v2142 = vadd.f32 %v2119, %v2141
        %v2143 = vpop.f32.mrf.mxu0
        %v2144 = vadd.f32 %v2119, %v2143
        %2145 = vdwg.mxu0
        %v2146 = vpack.c.bf16 %v2142, %v2142
        %v2147 = vpack.c.bf16 %v2144, %v2144
        %v2148 = vpack.c.bf16 %v2068, %v2068
        %v2149 = vpack.c.bf16 %v2070, %v2070
        %v2151 = vsel %vm263, %v2148, 0
        %v2154 = vsel %vm263, %v2111, 0
        %2156 = vmatpush.bf16.xpose.msra.mxu0 0
        %2157 = vmatpush.bf16.xpose.msra.mxu0 0
        %2158 = vmatpush.bf16.xpose.msra.mxu0 0
        %2159 = vmatpush.bf16.xpose.msra.mxu0 0
        %2160 = vmatpush.bf16.xpose.msra.mxu0 0
        %2161 = vmatpush.bf16.xpose.msra.mxu0 0
        %2162 = vmatpush.bf16.xpose.msra.mxu0 0
        %2163 = vmatpush.bf16.xpose.msra.mxu0 %v2154
        %2164 = vmatmul.bf16.gmra.mxu0 %v2151
        %v2165 = vpop.f32.mrf.mxu0
        %v2166 = vadd.f32 0.0, %v2165
        %v2167 = vpop.f32.mrf.mxu0
        %2168 = vdwg.mxu0
        %v2170 = vsel %vm263, %v2149, 0
        %v2173 = vsel %vm263, %v2112, 0
        %2175 = vmatpush.bf16.xpose.msra.mxu0 0
        %2176 = vmatpush.bf16.xpose.msra.mxu0 0
        %2177 = vmatpush.bf16.xpose.msra.mxu0 0
        %2178 = vmatpush.bf16.xpose.msra.mxu0 0
        %2179 = vmatpush.bf16.xpose.msra.mxu0 0
        %2180 = vmatpush.bf16.xpose.msra.mxu0 0
        %2181 = vmatpush.bf16.xpose.msra.mxu0 0
        %2182 = vmatpush.bf16.xpose.msra.mxu0 %v2173
        %2183 = vmatmul.bf16.gmra.mxu0 %v2170
        %v2184 = vpop.f32.mrf.mxu0
        %v2185 = vadd.f32 0.0, %v2184
        %v2186 = vpop.f32.mrf.mxu0
        %2187 = vdwg.mxu0
        %v2188 = vsel %vm263, %v2166, -inf
        %2189 = vmax.xlane.f32.xlu0 %v2188
        %v2190 = vpop.xlane.xlu0 %2189
        %v2191 = vsel %vm263, %v2185, -inf
        %2192 = vmax.xlane.f32.xlu0 %v2191
        %v2193 = vpop.xlane.xlu0 %2192
        %v2194 = vsub.f32 %v2166, %v2190
        %v2195 = vsub.f32 %v2185, %v2193
        %v2196 = vmul.f32 %v2194, 1.442695
        %v2197 = vpow.pop %v2196
        %v2198 = vmul.f32 %v2195, 1.442695
        %v2199 = vpow.pop %v2198
        %v2200 = vsel %vm263, %v2197, 0.0
        %2201 = vadd.xlane.f32.xlu0 %v2200
        %v2202 = vpop.xlane.xlu0 %2201
        %v2203 = vsel %vm263, %v2199, 0.0
        %2204 = vadd.xlane.f32.xlu0 %v2203
        %v2205 = vpop.xlane.xlu0 %2204
        %v2206 = vrcp.pop %v2202
        %v2207 = vrcp.pop %v2205
        %v2208 = vmul.f32 %v2197, %v2206
        %v2209 = vmul.f32 %v2199, %v2207
        %v2210 = vpack.c.bf16 %v2208, %v2208
        %v2211 = vpack.c.bf16 %v2209, %v2209
        %v2213 = vsel %vm263, %v2210, 0
        %v2216 = vsel %vm326, %v2146, 0
        %2218 = vmatpush.bf16.msra.mxu0 0
        %2219 = vmatpush.bf16.msra.mxu0 0
        %2220 = vmatpush.bf16.msra.mxu0 0
        %2221 = vmatpush.bf16.msra.mxu0 0
        %2222 = vmatpush.bf16.msra.mxu0 0
        %2223 = vmatpush.bf16.msra.mxu0 0
        %2224 = vmatpush.bf16.msra.mxu0 0
        %2225 = vmatpush.bf16.msra.mxu0 %v2216
        %2226 = vmatmul.bf16.gmra.mxu0 %v2213
        %v2227 = vpop.f32.mrf.mxu0
        %v2228 = vadd.f32 0.0, %v2227
        %v2229 = vpop.f32.mrf.mxu0
        %2230 = vdwg.mxu0
        %v2232 = vsel %vm263, %v2211, 0
        %v2235 = vsel %vm326, %v2147, 0
        %2237 = vmatpush.bf16.msra.mxu0 0
        %2238 = vmatpush.bf16.msra.mxu0 0
        %2239 = vmatpush.bf16.msra.mxu0 0
        %2240 = vmatpush.bf16.msra.mxu0 0
        %2241 = vmatpush.bf16.msra.mxu0 0
        %2242 = vmatpush.bf16.msra.mxu0 0
        %2243 = vmatpush.bf16.msra.mxu0 0
        %2244 = vmatpush.bf16.msra.mxu0 %v2235
        %2245 = vmatmul.bf16.gmra.mxu0 %v2232
        %v2246 = vpop.f32.mrf.mxu0
        %v2247 = vadd.f32 0.0, %v2246
        %v2248 = vpop.f32.mrf.mxu0
        %2249 = vdwg.mxu0
        %v2250 = vadd.f32 %v2068, %v2228
        %v2251 = vadd.f32 %v2070, %v2247
        %v2253 = vunpack.c.l.b16 %v2148
        %v2254 = vpack.c.b16 %v2253, %v2253
        %2255 = vrot.lane.b32.xlu0 %v2254, 120
        %v2256 = vpop.permute.xlu0 %2255
        %v2258 = vunpack.c.l.b16 %v2111
        %v2259 = vpack.c.b16 %v2258, %v2258
        %2260 = vrot.lane.b32.xlu0 %v2259, 120
        %v2261 = vpop.permute.xlu0 %2260
        %v2263 = vsel %vm263, %v2256, 0
        %v2266 = vsel %vm263, %v2261, 0
        %2268 = vmatpush.bf16.xpose.msra.mxu0 0
        %2269 = vmatpush.bf16.xpose.msra.mxu0 0
        %2270 = vmatpush.bf16.xpose.msra.mxu0 0
        %2271 = vmatpush.bf16.xpose.msra.mxu0 0
        %2272 = vmatpush.bf16.xpose.msra.mxu0 0
        %2273 = vmatpush.bf16.xpose.msra.mxu0 0
        %2274 = vmatpush.bf16.xpose.msra.mxu0 0
        %2275 = vmatpush.bf16.xpose.msra.mxu0 %v2266
        %2276 = vmatmul.bf16.gmra.mxu0 %v2263
        %v2277 = vpop.f32.mrf.mxu0
        %v2278 = vadd.f32 0.0, %v2277
        %v2279 = vpop.f32.mrf.mxu0
        %2280 = vdwg.mxu0
        %v2282 = vunpack.c.l.b16 %v2149
        %v2283 = vpack.c.b16 %v2282, %v2282
        %2284 = vrot.lane.b32.xlu0 %v2283, 120
        %v2285 = vpop.permute.xlu0 %2284
        %v2287 = vunpack.c.l.b16 %v2112
        %v2288 = vpack.c.b16 %v2287, %v2287
        %2289 = vrot.lane.b32.xlu0 %v2288, 120
        %v2290 = vpop.permute.xlu0 %2289
        %v2292 = vsel %vm263, %v2285, 0
        %v2295 = vsel %vm263, %v2290, 0
        %2297 = vmatpush.bf16.xpose.msra.mxu0 0
        %2298 = vmatpush.bf16.xpose.msra.mxu0 0
        %2299 = vmatpush.bf16.xpose.msra.mxu0 0
        %2300 = vmatpush.bf16.xpose.msra.mxu0 0
        %2301 = vmatpush.bf16.xpose.msra.mxu0 0
        %2302 = vmatpush.bf16.xpose.msra.mxu0 0
        %2303 = vmatpush.bf16.xpose.msra.mxu0 0
        %2304 = vmatpush.bf16.xpose.msra.mxu0 %v2295
        %2305 = vmatmul.bf16.gmra.mxu0 %v2292
        %v2306 = vpop.f32.mrf.mxu0
        %v2307 = vadd.f32 0.0, %v2306
        %v2308 = vpop.f32.mrf.mxu0
        %2309 = vdwg.mxu0
        %v2310 = vsel %vm263, %v2278, -inf
        %2311 = vmax.xlane.f32.xlu0 %v2310
        %v2312 = vpop.xlane.xlu0 %2311
        %v2313 = vsel %vm263, %v2307, -inf
        %2314 = vmax.xlane.f32.xlu0 %v2313
        %v2315 = vpop.xlane.xlu0 %2314
        %v2316 = vsub.f32 %v2278, %v2312
        %v2317 = vsub.f32 %v2307, %v2315
        %v2318 = vmul.f32 %v2316, 1.442695
        %v2319 = vpow.pop %v2318
        %v2320 = vmul.f32 %v2317, 1.442695
        %v2321 = vpow.pop %v2320
        %v2322 = vsel %vm263, %v2319, 0.0
        %2323 = vadd.xlane.f32.xlu0 %v2322
        %v2324 = vpop.xlane.xlu0 %2323
        %v2325 = vsel %vm263, %v2321, 0.0
        %2326 = vadd.xlane.f32.xlu0 %v2325
        %v2327 = vpop.xlane.xlu0 %2326
        %v2328 = vrcp.pop %v2324
        %v2329 = vrcp.pop %v2327
        %v2330 = vmul.f32 %v2319, %v2328
        %v2331 = vmul.f32 %v2321, %v2329
        %v2332 = vpack.c.bf16 %v2330, %v2330
        %v2333 = vpack.c.bf16 %v2331, %v2331
        %v2335 = vunpack.c.l.b16 %v2146
        %v2336 = vpack.c.b16 %v2335, %v2335
        %2337 = vrot.lane.b32.xlu0 %v2336, 120
        %v2338 = vpop.permute.xlu0 %2337
        %v2340 = vsel %vm263, %v2332, 0
        %v2343 = vsel %vm326, %v2338, 0
        %2345 = vmatpush.bf16.msra.mxu0 0
        %2346 = vmatpush.bf16.msra.mxu0 0
        %2347 = vmatpush.bf16.msra.mxu0 0
        %2348 = vmatpush.bf16.msra.mxu0 0
        %2349 = vmatpush.bf16.msra.mxu0 0
        %2350 = vmatpush.bf16.msra.mxu0 0
        %2351 = vmatpush.bf16.msra.mxu0 0
        %2352 = vmatpush.bf16.msra.mxu0 %v2343
        %2353 = vmatmul.bf16.gmra.mxu0 %v2340
        %v2354 = vpop.f32.mrf.mxu0
        %v2355 = vadd.f32 0.0, %v2354
        %v2356 = vpop.f32.mrf.mxu0
        %2357 = vdwg.mxu0
        %v2359 = vunpack.c.l.b16 %v2147
        %v2360 = vpack.c.b16 %v2359, %v2359
        %2361 = vrot.lane.b32.xlu0 %v2360, 120
        %v2362 = vpop.permute.xlu0 %2361
        %v2364 = vsel %vm263, %v2333, 0
        %v2367 = vsel %vm326, %v2362, 0
        %2369 = vmatpush.bf16.msra.mxu0 0
        %2370 = vmatpush.bf16.msra.mxu0 0
        %2371 = vmatpush.bf16.msra.mxu0 0
        %2372 = vmatpush.bf16.msra.mxu0 0
        %2373 = vmatpush.bf16.msra.mxu0 0
        %2374 = vmatpush.bf16.msra.mxu0 0
        %2375 = vmatpush.bf16.msra.mxu0 0
        %2376 = vmatpush.bf16.msra.mxu0 %v2367
        %2377 = vmatmul.bf16.gmra.mxu0 %v2364
        %v2378 = vpop.f32.mrf.mxu0
        %v2379 = vadd.f32 0.0, %v2378
        %v2380 = vpop.f32.mrf.mxu0
        %2381 = vdwg.mxu0
        %2384 = vrot.lane.b32.xlu0 %v2355, 8
        %v2385 = vpop.permute.xlu0 %2384
        %2386 = vrot.lane.b32.xlu0 %v2379, 8
        %v2387 = vpop.permute.xlu0 %2386
        %v2390 = vadd.f32 %v2068, %v2385
        %v2391 = vadd.f32 %v2070, %v2387
        %2392 = vrot.lane.b32.xlu0 %v2254, 112
        %v2393 = vpop.permute.xlu0 %2392
        %2394 = vrot.lane.b32.xlu0 %v2259, 112
        %v2395 = vpop.permute.xlu0 %2394
        %v2397 = vsel %vm263, %v2393, 0
        %v2400 = vsel %vm263, %v2395, 0
        %2402 = vmatpush.bf16.xpose.msra.mxu0 0
        %2403 = vmatpush.bf16.xpose.msra.mxu0 0
        %2404 = vmatpush.bf16.xpose.msra.mxu0 0
        %2405 = vmatpush.bf16.xpose.msra.mxu0 0
        %2406 = vmatpush.bf16.xpose.msra.mxu0 0
        %2407 = vmatpush.bf16.xpose.msra.mxu0 0
        %2408 = vmatpush.bf16.xpose.msra.mxu0 0
        %2409 = vmatpush.bf16.xpose.msra.mxu0 %v2400
        %2410 = vmatmul.bf16.gmra.mxu0 %v2397
        %v2411 = vpop.f32.mrf.mxu0
        %v2412 = vadd.f32 0.0, %v2411
        %v2413 = vpop.f32.mrf.mxu0
        %2414 = vdwg.mxu0
        %2415 = vrot.lane.b32.xlu0 %v2283, 112
        %v2416 = vpop.permute.xlu0 %2415
        %2417 = vrot.lane.b32.xlu0 %v2288, 112
        %v2418 = vpop.permute.xlu0 %2417
        %v2420 = vsel %vm263, %v2416, 0
        %v2423 = vsel %vm263, %v2418, 0
        %2425 = vmatpush.bf16.xpose.msra.mxu0 0
        %2426 = vmatpush.bf16.xpose.msra.mxu0 0
        %2427 = vmatpush.bf16.xpose.msra.mxu0 0
        %2428 = vmatpush.bf16.xpose.msra.mxu0 0
        %2429 = vmatpush.bf16.xpose.msra.mxu0 0
        %2430 = vmatpush.bf16.xpose.msra.mxu0 0
        %2431 = vmatpush.bf16.xpose.msra.mxu0 0
        %2432 = vmatpush.bf16.xpose.msra.mxu0 %v2423
        %2433 = vmatmul.bf16.gmra.mxu0 %v2420
        %v2434 = vpop.f32.mrf.mxu0
        %v2435 = vadd.f32 0.0, %v2434
        %v2436 = vpop.f32.mrf.mxu0
        %2437 = vdwg.mxu0
        %v2438 = vsel %vm263, %v2412, -inf
        %2439 = vmax.xlane.f32.xlu0 %v2438
        %v2440 = vpop.xlane.xlu0 %2439
        %v2441 = vsel %vm263, %v2435, -inf
        %2442 = vmax.xlane.f32.xlu0 %v2441
        %v2443 = vpop.xlane.xlu0 %2442
        %v2444 = vsub.f32 %v2412, %v2440
        %v2445 = vsub.f32 %v2435, %v2443
        %v2446 = vmul.f32 %v2444, 1.442695
        %v2447 = vpow.pop %v2446
        %v2448 = vmul.f32 %v2445, 1.442695
        %v2449 = vpow.pop %v2448
        %v2450 = vsel %vm263, %v2447, 0.0
        %2451 = vadd.xlane.f32.xlu0 %v2450
        %v2452 = vpop.xlane.xlu0 %2451
        %v2453 = vsel %vm263, %v2449, 0.0
        %2454 = vadd.xlane.f32.xlu0 %v2453
        %v2455 = vpop.xlane.xlu0 %2454
        %v2456 = vrcp.pop %v2452
        %v2457 = vrcp.pop %v2455
        %v2458 = vmul.f32 %v2447, %v2456
        %v2459 = vmul.f32 %v2449, %v2457
        %v2460 = vpack.c.bf16 %v2458, %v2458
        %v2461 = vpack.c.bf16 %v2459, %v2459
        %2462 = vrot.lane.b32.xlu0 %v2336, 112
        %v2463 = vpop.permute.xlu0 %2462
        %v2465 = vsel %vm263, %v2460, 0
        %v2468 = vsel %vm326, %v2463, 0
        %2470 = vmatpush.bf16.msra.mxu0 0
        %2471 = vmatpush.bf16.msra.mxu0 0
        %2472 = vmatpush.bf16.msra.mxu0 0
        %2473 = vmatpush.bf16.msra.mxu0 0
        %2474 = vmatpush.bf16.msra.mxu0 0
        %2475 = vmatpush.bf16.msra.mxu0 0
        %2476 = vmatpush.bf16.msra.mxu0 0
        %2477 = vmatpush.bf16.msra.mxu0 %v2468
        %2478 = vmatmul.bf16.gmra.mxu0 %v2465
        %v2479 = vpop.f32.mrf.mxu0
        %v2480 = vadd.f32 0.0, %v2479
        %v2481 = vpop.f32.mrf.mxu0
        %2482 = vdwg.mxu0
        %2483 = vrot.lane.b32.xlu0 %v2360, 112
        %v2484 = vpop.permute.xlu0 %2483
        %v2486 = vsel %vm263, %v2461, 0
        %v2489 = vsel %vm326, %v2484, 0
        %2491 = vmatpush.bf16.msra.mxu0 0
        %2492 = vmatpush.bf16.msra.mxu0 0
        %2493 = vmatpush.bf16.msra.mxu0 0
        %2494 = vmatpush.bf16.msra.mxu0 0
        %2495 = vmatpush.bf16.msra.mxu0 0
        %2496 = vmatpush.bf16.msra.mxu0 0
        %2497 = vmatpush.bf16.msra.mxu0 0
        %2498 = vmatpush.bf16.msra.mxu0 %v2489
        %2499 = vmatmul.bf16.gmra.mxu0 %v2486
        %v2500 = vpop.f32.mrf.mxu0
        %v2501 = vadd.f32 0.0, %v2500
        %v2502 = vpop.f32.mrf.mxu0
        %2503 = vdwg.mxu0
        %2506 = vrot.lane.b32.xlu0 %v2480, 16
        %v2507 = vpop.permute.xlu0 %2506
        %2508 = vrot.lane.b32.xlu0 %v2501, 16
        %v2509 = vpop.permute.xlu0 %2508
        %v2512 = vadd.f32 %v2068, %v2507
        %v2513 = vadd.f32 %v2070, %v2509
        %2514 = vrot.lane.b32.xlu0 %v2254, 104
        %v2515 = vpop.permute.xlu0 %2514
        %2516 = vrot.lane.b32.xlu0 %v2259, 104
        %v2517 = vpop.permute.xlu0 %2516
        %v2519 = vsel %vm263, %v2515, 0
        %v2522 = vsel %vm263, %v2517, 0
        %2524 = vmatpush.bf16.xpose.msra.mxu0 0
        %2525 = vmatpush.bf16.xpose.msra.mxu0 0
        %2526 = vmatpush.bf16.xpose.msra.mxu0 0
        %2527 = vmatpush.bf16.xpose.msra.mxu0 0
        %2528 = vmatpush.bf16.xpose.msra.mxu0 0
        %2529 = vmatpush.bf16.xpose.msra.mxu0 0
        %2530 = vmatpush.bf16.xpose.msra.mxu0 0
        %2531 = vmatpush.bf16.xpose.msra.mxu0 %v2522
        %2532 = vmatmul.bf16.gmra.mxu0 %v2519
        %v2533 = vpop.f32.mrf.mxu0
        %v2534 = vadd.f32 0.0, %v2533
        %v2535 = vpop.f32.mrf.mxu0
        %2536 = vdwg.mxu0
        %2537 = vrot.lane.b32.xlu0 %v2283, 104
        %v2538 = vpop.permute.xlu0 %2537
        %2539 = vrot.lane.b32.xlu0 %v2288, 104
        %v2540 = vpop.permute.xlu0 %2539
        %v2542 = vsel %vm263, %v2538, 0
        %v2545 = vsel %vm263, %v2540, 0
        %2547 = vmatpush.bf16.xpose.msra.mxu0 0
        %2548 = vmatpush.bf16.xpose.msra.mxu0 0
        %2549 = vmatpush.bf16.xpose.msra.mxu0 0
        %2550 = vmatpush.bf16.xpose.msra.mxu0 0
        %2551 = vmatpush.bf16.xpose.msra.mxu0 0
        %2552 = vmatpush.bf16.xpose.msra.mxu0 0
        %2553 = vmatpush.bf16.xpose.msra.mxu0 0
        %2554 = vmatpush.bf16.xpose.msra.mxu0 %v2545
        %2555 = vmatmul.bf16.gmra.mxu0 %v2542
        %v2556 = vpop.f32.mrf.mxu0
        %v2557 = vadd.f32 0.0, %v2556
        %v2558 = vpop.f32.mrf.mxu0
        %2559 = vdwg.mxu0
        %v2560 = vsel %vm263, %v2534, -inf
        %2561 = vmax.xlane.f32.xlu0 %v2560
        %v2562 = vpop.xlane.xlu0 %2561
        %v2563 = vsel %vm263, %v2557, -inf
        %2564 = vmax.xlane.f32.xlu0 %v2563
        %v2565 = vpop.xlane.xlu0 %2564
        %v2566 = vsub.f32 %v2534, %v2562
        %v2567 = vsub.f32 %v2557, %v2565
        %v2568 = vmul.f32 %v2566, 1.442695
        %v2569 = vpow.pop %v2568
        %v2570 = vmul.f32 %v2567, 1.442695
        %v2571 = vpow.pop %v2570
        %v2572 = vsel %vm263, %v2569, 0.0
        %2573 = vadd.xlane.f32.xlu0 %v2572
        %v2574 = vpop.xlane.xlu0 %2573
        %v2575 = vsel %vm263, %v2571, 0.0
        %2576 = vadd.xlane.f32.xlu0 %v2575
        %v2577 = vpop.xlane.xlu0 %2576
        %v2578 = vrcp.pop %v2574
        %v2579 = vrcp.pop %v2577
        %v2580 = vmul.f32 %v2569, %v2578
        %v2581 = vmul.f32 %v2571, %v2579
        %v2582 = vpack.c.bf16 %v2580, %v2580
        %v2583 = vpack.c.bf16 %v2581, %v2581
        %2584 = vrot.lane.b32.xlu0 %v2336, 104
        %v2585 = vpop.permute.xlu0 %2584
        %v2587 = vsel %vm263, %v2582, 0
        %v2590 = vsel %vm326, %v2585, 0
        %2592 = vmatpush.bf16.msra.mxu0 0
        %2593 = vmatpush.bf16.msra.mxu0 0
        %2594 = vmatpush.bf16.msra.mxu0 0
        %2595 = vmatpush.bf16.msra.mxu0 0
        %2596 = vmatpush.bf16.msra.mxu0 0
        %2597 = vmatpush.bf16.msra.mxu0 0
        %2598 = vmatpush.bf16.msra.mxu0 0
        %2599 = vmatpush.bf16.msra.mxu0 %v2590
        %2600 = vmatmul.bf16.gmra.mxu0 %v2587
        %v2601 = vpop.f32.mrf.mxu0
        %v2602 = vadd.f32 0.0, %v2601
        %v2603 = vpop.f32.mrf.mxu0
        %2604 = vdwg.mxu0
        %2605 = vrot.lane.b32.xlu0 %v2360, 104
        %v2606 = vpop.permute.xlu0 %2605
        %v2608 = vsel %vm263, %v2583, 0
        %v2611 = vsel %vm326, %v2606, 0
        %2613 = vmatpush.bf16.msra.mxu0 0
        %2614 = vmatpush.bf16.msra.mxu0 0
        %2615 = vmatpush.bf16.msra.mxu0 0
        %2616 = vmatpush.bf16.msra.mxu0 0
        %2617 = vmatpush.bf16.msra.mxu0 0
        %2618 = vmatpush.bf16.msra.mxu0 0
        %2619 = vmatpush.bf16.msra.mxu0 0
        %2620 = vmatpush.bf16.msra.mxu0 %v2611
        %2621 = vmatmul.bf16.gmra.mxu0 %v2608
        %v2622 = vpop.f32.mrf.mxu0
        %v2623 = vadd.f32 0.0, %v2622
        %v2624 = vpop.f32.mrf.mxu0
        %2625 = vdwg.mxu0
        %2628 = vrot.lane.b32.xlu0 %v2602, 24
        %v2629 = vpop.permute.xlu0 %2628
        %2630 = vrot.lane.b32.xlu0 %v2623, 24
        %v2631 = vpop.permute.xlu0 %2630
        %v2634 = vadd.f32 %v2068, %v2629
        %v2635 = vadd.f32 %v2070, %v2631
        %v2636 = vsel %vm263, %v2250, %v2390
        %v2637 = vsel %vm263, %v2251, %v2391
        %v2638 = vsel %vm213, %v2636, %v2512
        %v2639 = vsel %vm213, %v2637, %v2513
        %v2640 = vsel %vm734, %v2638, %v2634
        %v2641 = vsel %vm734, %v2639, %v2635
        %v2642 = vld [vmem:[#allocation2 + $0x11c] sm:$0xf]
        %v2643 = vld [vmem:[#allocation2 + $0x120] sm:$0xf]
        %v2644 = vld [vmem:[#allocation2 + $0x124] sm:$0xf]
        %v2645 = vld [vmem:[#allocation2 + $0x128] sm:$0xf]
        %v2646 = vld [vmem:[#allocation2 + $0x12c] sm:$0x1]
        %v2647 = vunpack.c.l.bf16 %v2646
        %v2648 = vpack.c.bf16 %v2641, %v2640
        %v2649 = vperm.slane %v2647, 0
        %v2654 = vunpack.c.l.b16 %v2642
        %v2655 = vunpack.c.l.b16 %v2643
        %v2656 = vunpack.c.l.b16 %v2644
        %v2657 = vunpack.c.l.b16 %v2645
        %v2658 = vpack.c.b16 %v2655, %v2654
        %v2659 = vpack.c.b16 %v2657, %v2656
        %v2663 = vsel %vm180, %v2648, 0
        %2665 = vmatpush.bf16.msra.mxu0 0
        %2666 = vmatpush.bf16.msra.mxu0 0
        %2667 = vmatpush.bf16.msra.mxu0 0
        %2668 = vmatpush.bf16.msra.mxu0 0
        %2669 = vmatpush.bf16.msra.mxu0 0
        %2670 = vmatpush.bf16.msra.mxu0 0
        %2671 = vmatpush.bf16.msra.mxu0 %v2659
        %2672 = vmatpush.bf16.msra.mxu0 %v2658
        %2673 = vmatmul.bf16.gmra.mxu0 %v2663
        %v2674 = vpop.f32.mrf.mxu0
        %v2675 = vadd.f32 %v2649, %v2674
        %v2676 = vpop.f32.mrf.mxu0
        %v2677 = vadd.f32 %v2649, %v2676
        %2678 = vdwg.mxu0
        %v2679 = vmax.f32 %v2675, 0.0
        %v2680 = vmax.f32 %v2677, 0.0
        %v2681 = vadd.f32 %v2640, %v2679
        %v2682 = vadd.f32 %v2641, %v2680
        %v2683 = vld [vmem:[#allocation2 + $0x130] sm:$0x1]
        %v2684 = vld [vmem:[#allocation2 + $0x134] sm:$0xf]
        %v2685 = vld [vmem:[#allocation2 + $0x138] sm:$0xf]
        %v2686 = vld [vmem:[#allocation2 + $0x13c] sm:$0xf]
        %v2687 = vld [vmem:[#allocation2 + $0x140] sm:$0xf]
        %v2688 = vld [vmem:[#allocation2 + $0x144] sm:$0x1]
        %v2689 = vunpack.c.l.bf16 %v2688
        %v2694 = vunpack.c.l.b16 %v2684
        %v2695 = vunpack.c.l.b16 %v2685
        %v2696 = vunpack.c.l.b16 %v2686
        %v2697 = vunpack.c.l.b16 %v2687
        %v2698 = vpack.c.b16 %v2695, %v2694
        %v2699 = vpack.c.b16 %v2697, %v2696
        %v2703 = vsel %vm180, %v2683, 0
        %2705 = vmatpush.bf16.msra.mxu0 0
        %2706 = vmatpush.bf16.msra.mxu0 0
        %2707 = vmatpush.bf16.msra.mxu0 0
        %2708 = vmatpush.bf16.msra.mxu0 0
        %2709 = vmatpush.bf16.msra.mxu0 0
        %2710 = vmatpush.bf16.msra.mxu0 0
        %2711 = vmatpush.bf16.msra.mxu0 %v2699
        %2712 = vmatpush.bf16.msra.mxu0 %v2698
        %2713 = vmatmul.bf16.gmra.mxu0 %v2703
        %v2714 = vpop.f32.mrf.mxu0
        %v2715 = vadd.f32 %v2689, %v2714
        %v2716 = vpop.f32.mrf.mxu0
        %2717 = vdwg.mxu0
        %v2718 = vpack.c.bf16 %v2682, %v2681
        %v2719 = vld [vmem:[#allocation2 + $0x148] sm:$0xf]
        %v2720 = vld [vmem:[#allocation2 + $0x14c] sm:$0xf]
        %v2721 = vld [vmem:[#allocation2 + $0x150] sm:$0xf]
        %v2722 = vld [vmem:[#allocation2 + $0x154] sm:$0xf]
        %v2723 = vld [vmem:[#allocation2 + $0x158] sm:$0x1]
        %v2724 = vunpack.c.l.bf16 %v2723
        %v2725 = vperm.slane %v2724, 0
        %v2730 = vunpack.c.l.b16 %v2719
        %v2731 = vunpack.c.l.b16 %v2720
        %v2732 = vunpack.c.l.b16 %v2721
        %v2733 = vunpack.c.l.b16 %v2722
        %v2734 = vpack.c.b16 %v2731, %v2730
        %v2735 = vpack.c.b16 %v2733, %v2732
        %v2739 = vsel %vm180, %v2718, 0
        %2741 = vmatpush.bf16.msra.mxu0 0
        %2742 = vmatpush.bf16.msra.mxu0 0
        %2743 = vmatpush.bf16.msra.mxu0 0
        %2744 = vmatpush.bf16.msra.mxu0 0
        %2745 = vmatpush.bf16.msra.mxu0 0
        %2746 = vmatpush.bf16.msra.mxu0 0
        %2747 = vmatpush.bf16.msra.mxu0 %v2735
        %2748 = vmatpush.bf16.msra.mxu0 %v2734
        %2749 = vmatmul.bf16.gmra.mxu0 %v2739
        %v2750 = vpop.f32.mrf.mxu0
        %v2751 = vadd.f32 %v2725, %v2750
        %v2752 = vpop.f32.mrf.mxu0
        %v2753 = vadd.f32 %v2725, %v2752
        %2754 = vdwg.mxu0
        %v2755 = vmul.f32 %v2751, 0.17677669
        %v2756 = vmul.f32 %v2753, 0.17677669
        %v2757 = vpack.c.bf16 %v2755, %v2755
        %v2758 = vpack.c.bf16 %v2756, %v2756
        %v2759 = vld [vmem:[#allocation2 + $0x15c] sm:$0xf]
        %v2760 = vld [vmem:[#allocation2 + $0x160] sm:$0xf]
        %v2761 = vld [vmem:[#allocation2 + $0x164] sm:$0xf]
        %v2762 = vld [vmem:[#allocation2 + $0x168] sm:$0xf]
        %v2763 = vld [vmem:[#allocation2 + $0x16c] sm:$0x1]
        %v2764 = vunpack.c.l.bf16 %v2763
        %v2765 = vperm.slane %v2764, 0
        %v2770 = vunpack.c.l.b16 %v2759
        %v2771 = vunpack.c.l.b16 %v2760
        %v2772 = vunpack.c.l.b16 %v2761
        %v2773 = vunpack.c.l.b16 %v2762
        %v2774 = vpack.c.b16 %v2771, %v2770
        %v2775 = vpack.c.b16 %v2773, %v2772
        %2778 = vmatpush.bf16.msra.mxu0 0
        %2779 = vmatpush.bf16.msra.mxu0 0
        %2780 = vmatpush.bf16.msra.mxu0 0
        %2781 = vmatpush.bf16.msra.mxu0 0
        %2782 = vmatpush.bf16.msra.mxu0 0
        %2783 = vmatpush.bf16.msra.mxu0 0
        %2784 = vmatpush.bf16.msra.mxu0 %v2775
        %2785 = vmatpush.bf16.msra.mxu0 %v2774
        %2786 = vmatmul.bf16.gmra.mxu0 %v2739
        %v2787 = vpop.f32.mrf.mxu0
        %v2788 = vadd.f32 %v2765, %v2787
        %v2789 = vpop.f32.mrf.mxu0
        %v2790 = vadd.f32 %v2765, %v2789
        %2791 = vdwg.mxu0
        %v2792 = vpack.c.bf16 %v2788, %v2788
        %v2793 = vpack.c.bf16 %v2790, %v2790
        %v2794 = vpack.c.bf16 %v2715, %v2715
        %v2797 = vunpack.c.l.b16 %v2757
        %v2798 = vunpack.c.l.b16 %v2758
        %v2799 = vpack.c.b16 %v2798, %v2797
        %v2801 = vsel %vm263, %v2794, 0
        %v2804 = vsel %vm263, %v2799, 0
        %2806 = vmatpush.bf16.xpose.msra.mxu0 0
        %2807 = vmatpush.bf16.xpose.msra.mxu0 0
        %2808 = vmatpush.bf16.xpose.msra.mxu0 0
        %2809 = vmatpush.bf16.xpose.msra.mxu0 0
        %2810 = vmatpush.bf16.xpose.msra.mxu0 0
        %2811 = vmatpush.bf16.xpose.msra.mxu0 0
        %2812 = vmatpush.bf16.xpose.msra.mxu0 0
        %2813 = vmatpush.bf16.xpose.msra.mxu0 %v2804
        %2814 = vmatmul.bf16.gmra.mxu0 %v2801
        %v2815 = vpop.f32.mrf.mxu0
        %v2816 = vadd.f32 0.0, %v2815
        %v2817 = vpop.f32.mrf.mxu0
        %2818 = vdwg.mxu0
        %vm2819 = vcmask 122880
        %v2820 = vsel %vm2819, %v2816, -inf
        %2821 = vmax.xlane.f32.xlu0 %v2820
        %v2822 = vpop.xlane.xlu0 %2821
        %v2823 = vsub.f32 %v2816, %v2822
        %v2824 = vmul.f32 %v2823, 1.442695
        %v2825 = vpow.pop %v2824
        %v2826 = vsel %vm2819, %v2825, 0.0
        %2827 = vadd.xlane.f32.xlu0 %v2826
        %v2828 = vpop.xlane.xlu0 %2827
        %v2829 = vrcp.pop %v2828
        %v2830 = vmul.f32 %v2825, %v2829
        %v2831 = vpack.c.bf16 %v2830, %v2830
        %v2834 = vunpack.c.l.b16 %v2792
        %v2835 = vunpack.c.l.b16 %v2793
        %v2836 = vpack.c.b16 %v2835, %v2834
        %v2839 = vsel %vm213, %v2831, 0
        %2841 = vmatpush.bf16.msra.mxu0 0
        %2842 = vmatpush.bf16.msra.mxu0 0
        %2843 = vmatpush.bf16.msra.mxu0 0
        %2844 = vmatpush.bf16.msra.mxu0 0
        %2845 = vmatpush.bf16.msra.mxu0 0
        %2846 = vmatpush.bf16.msra.mxu0 0
        %2847 = vmatpush.bf16.msra.mxu0 0
        %2848 = vmatpush.bf16.msra.mxu0 %v2836
        %2849 = vmatmul.bf16.gmra.mxu0 %v2839
        %v2850 = vpop.f32.mrf.mxu0
        %v2851 = vadd.f32 0.0, %v2850
        %v2852 = vpop.f32.mrf.mxu0
        %2853 = vdwg.mxu0
        %v2854 = vadd.f32 %v2715, %v2851
        %v2856 = vunpack.c.l.b16 %v2794
        %v2857 = vpack.c.b16 %v2856, %v2856
        %2858 = vrot.lane.b32.xlu0 %v2857, 120
        %v2859 = vpop.permute.xlu0 %2858
        %2860 = vrot.lane.b32.xlu0 %v2799, 120
        %v2861 = vpop.permute.xlu0 %2860
        %v2863 = vsel %vm263, %v2859, 0
        %v2866 = vsel %vm263, %v2861, 0
        %2868 = vmatpush.bf16.xpose.msra.mxu0 0
        %2869 = vmatpush.bf16.xpose.msra.mxu0 0
        %2870 = vmatpush.bf16.xpose.msra.mxu0 0
        %2871 = vmatpush.bf16.xpose.msra.mxu0 0
        %2872 = vmatpush.bf16.xpose.msra.mxu0 0
        %2873 = vmatpush.bf16.xpose.msra.mxu0 0
        %2874 = vmatpush.bf16.xpose.msra.mxu0 0
        %2875 = vmatpush.bf16.xpose.msra.mxu0 %v2866
        %2876 = vmatmul.bf16.gmra.mxu0 %v2863
        %v2877 = vpop.f32.mrf.mxu0
        %v2878 = vadd.f32 0.0, %v2877
        %v2879 = vpop.f32.mrf.mxu0
        %2880 = vdwg.mxu0
        %v2881 = vsel %vm2819, %v2878, -inf
        %2882 = vmax.xlane.f32.xlu0 %v2881
        %v2883 = vpop.xlane.xlu0 %2882
        %v2884 = vsub.f32 %v2878, %v2883
        %v2885 = vmul.f32 %v2884, 1.442695
        %v2886 = vpow.pop %v2885
        %v2887 = vsel %vm2819, %v2886, 0.0
        %2888 = vadd.xlane.f32.xlu0 %v2887
        %v2889 = vpop.xlane.xlu0 %2888
        %v2890 = vrcp.pop %v2889
        %v2891 = vmul.f32 %v2886, %v2890
        %v2892 = vpack.c.bf16 %v2891, %v2891
        %2893 = vrot.lane.b32.xlu0 %v2836, 120
        %v2894 = vpop.permute.xlu0 %2893
        %v2897 = vsel %vm213, %v2892, 0
        %2899 = vmatpush.bf16.msra.mxu0 0
        %2900 = vmatpush.bf16.msra.mxu0 0
        %2901 = vmatpush.bf16.msra.mxu0 0
        %2902 = vmatpush.bf16.msra.mxu0 0
        %2903 = vmatpush.bf16.msra.mxu0 0
        %2904 = vmatpush.bf16.msra.mxu0 0
        %2905 = vmatpush.bf16.msra.mxu0 0
        %2906 = vmatpush.bf16.msra.mxu0 %v2894
        %2907 = vmatmul.bf16.gmra.mxu0 %v2897
        %v2908 = vpop.f32.mrf.mxu0
        %v2909 = vadd.f32 0.0, %v2908
        %v2910 = vpop.f32.mrf.mxu0
        %2911 = vdwg.mxu0
        %2913 = vrot.lane.b32.xlu0 %v2909, 8
        %v2914 = vpop.permute.xlu0 %2913
        %v2916 = vadd.f32 %v2715, %v2914
        %2917 = vrot.lane.b32.xlu0 %v2857, 112
        %v2918 = vpop.permute.xlu0 %2917
        %2919 = vrot.lane.b32.xlu0 %v2799, 112
        %v2920 = vpop.permute.xlu0 %2919
        %v2922 = vsel %vm263, %v2918, 0
        %v2925 = vsel %vm263, %v2920, 0
        %2927 = vmatpush.bf16.xpose.msra.mxu0 0
        %2928 = vmatpush.bf16.xpose.msra.mxu0 0
        %2929 = vmatpush.bf16.xpose.msra.mxu0 0
        %2930 = vmatpush.bf16.xpose.msra.mxu0 0
        %2931 = vmatpush.bf16.xpose.msra.mxu0 0
        %2932 = vmatpush.bf16.xpose.msra.mxu0 0
        %2933 = vmatpush.bf16.xpose.msra.mxu0 0
        %2934 = vmatpush.bf16.xpose.msra.mxu0 %v2925
        %2935 = vmatmul.bf16.gmra.mxu0 %v2922
        %v2936 = vpop.f32.mrf.mxu0
        %v2937 = vadd.f32 0.0, %v2936
        %v2938 = vpop.f32.mrf.mxu0
        %2939 = vdwg.mxu0
        %v2940 = vsel %vm2819, %v2937, -inf
        %2941 = vmax.xlane.f32.xlu0 %v2940
        %v2942 = vpop.xlane.xlu0 %2941
        %v2943 = vsub.f32 %v2937, %v2942
        %v2944 = vmul.f32 %v2943, 1.442695
        %v2945 = vpow.pop %v2944
        %v2946 = vsel %vm2819, %v2945, 0.0
        %2947 = vadd.xlane.f32.xlu0 %v2946
        %v2948 = vpop.xlane.xlu0 %2947
        %v2949 = vrcp.pop %v2948
        %v2950 = vmul.f32 %v2945, %v2949
        %v2951 = vpack.c.bf16 %v2950, %v2950
        %2952 = vrot.lane.b32.xlu0 %v2836, 112
        %v2953 = vpop.permute.xlu0 %2952
        %v2956 = vsel %vm213, %v2951, 0
        %2958 = vmatpush.bf16.msra.mxu0 0
        %2959 = vmatpush.bf16.msra.mxu0 0
        %2960 = vmatpush.bf16.msra.mxu0 0
        %2961 = vmatpush.bf16.msra.mxu0 0
        %2962 = vmatpush.bf16.msra.mxu0 0
        %2963 = vmatpush.bf16.msra.mxu0 0
        %2964 = vmatpush.bf16.msra.mxu0 0
        %2965 = vmatpush.bf16.msra.mxu0 %v2953
        %2966 = vmatmul.bf16.gmra.mxu0 %v2956
        %v2967 = vpop.f32.mrf.mxu0
        %v2968 = vadd.f32 0.0, %v2967
        %v2969 = vpop.f32.mrf.mxu0
        %2970 = vdwg.mxu0
        %2972 = vrot.lane.b32.xlu0 %v2968, 16
        %v2973 = vpop.permute.xlu0 %2972
        %v2975 = vadd.f32 %v2715, %v2973
        %2976 = vrot.lane.b32.xlu0 %v2857, 104
        %v2977 = vpop.permute.xlu0 %2976
        %2978 = vrot.lane.b32.xlu0 %v2799, 104
        %v2979 = vpop.permute.xlu0 %2978
        %v2981 = vsel %vm263, %v2977, 0
        %v2984 = vsel %vm263, %v2979, 0
        %2986 = vmatpush.bf16.xpose.msra.mxu0 0
        %2987 = vmatpush.bf16.xpose.msra.mxu0 0
        %2988 = vmatpush.bf16.xpose.msra.mxu0 0
        %2989 = vmatpush.bf16.xpose.msra.mxu0 0
        %2990 = vmatpush.bf16.xpose.msra.mxu0 0
        %2991 = vmatpush.bf16.xpose.msra.mxu0 0
        %2992 = vmatpush.bf16.xpose.msra.mxu0 0
        %2993 = vmatpush.bf16.xpose.msra.mxu0 %v2984
        %2994 = vmatmul.bf16.gmra.mxu0 %v2981
        %v2995 = vpop.f32.mrf.mxu0
        %v2996 = vadd.f32 0.0, %v2995
        %v2997 = vpop.f32.mrf.mxu0
        %2998 = vdwg.mxu0
        %v2999 = vsel %vm2819, %v2996, -inf
        %3000 = vmax.xlane.f32.xlu0 %v2999
        %v3001 = vpop.xlane.xlu0 %3000
        %v3002 = vsub.f32 %v2996, %v3001
        %v3003 = vmul.f32 %v3002, 1.442695
        %v3004 = vpow.pop %v3003
        %v3005 = vsel %vm2819, %v3004, 0.0
        %3006 = vadd.xlane.f32.xlu0 %v3005
        %v3007 = vpop.xlane.xlu0 %3006
        %v3008 = vrcp.pop %v3007
        %v3009 = vmul.f32 %v3004, %v3008
        %v3010 = vpack.c.bf16 %v3009, %v3009
        %3011 = vrot.lane.b32.xlu0 %v2836, 104
        %v3012 = vpop.permute.xlu0 %3011
        %v3015 = vsel %vm213, %v3010, 0
        %3017 = vmatpush.bf16.msra.mxu0 0
        %3018 = vmatpush.bf16.msra.mxu0 0
        %3019 = vmatpush.bf16.msra.mxu0 0
        %3020 = vmatpush.bf16.msra.mxu0 0
        %3021 = vmatpush.bf16.msra.mxu0 0
        %3022 = vmatpush.bf16.msra.mxu0 0
        %3023 = vmatpush.bf16.msra.mxu0 0
        %3024 = vmatpush.bf16.msra.mxu0 %v3012
        %3025 = vmatmul.bf16.gmra.mxu0 %v3015
        %v3026 = vpop.f32.mrf.mxu0
        %v3027 = vadd.f32 0.0, %v3026
        %v3028 = vpop.f32.mrf.mxu0
        %3029 = vdwg.mxu0
        %3031 = vrot.lane.b32.xlu0 %v3027, 24
        %v3032 = vpop.permute.xlu0 %3031
        %v3034 = vadd.f32 %v2715, %v3032
        %v3035 = vsel %vm263, %v2854, %v2916
        %v3036 = vsel %vm213, %v3035, %v2975
        %v3037 = vsel %vm734, %v3036, %v3034
        %v3038 = vld [vmem:[#allocation2 + $0x170] sm:$0xf]
        %v3039 = vld [vmem:[#allocation2 + $0x174] sm:$0xf]
        %v3040 = vld [vmem:[#allocation2 + $0x178] sm:$0xf]
        %v3041 = vld [vmem:[#allocation2 + $0x17c] sm:$0xf]
        %v3042 = vld [vmem:[#allocation2 + $0x180] sm:$0x1]
        %v3043 = vunpack.c.l.bf16 %v3042
        %v3044 = vpack.c.bf16 %v3037, %v3037
        %v3049 = vunpack.c.l.b16 %v3038
        %v3050 = vunpack.c.l.b16 %v3039
        %v3051 = vunpack.c.l.b16 %v3040
        %v3052 = vunpack.c.l.b16 %v3041
        %v3053 = vpack.c.b16 %v3050, %v3049
        %v3054 = vpack.c.b16 %v3052, %v3051
        %v3058 = vsel %vm180, %v3044, 0
        %3060 = vmatpush.bf16.msra.mxu0 0
        %3061 = vmatpush.bf16.msra.mxu0 0
        %3062 = vmatpush.bf16.msra.mxu0 0
        %3063 = vmatpush.bf16.msra.mxu0 0
        %3064 = vmatpush.bf16.msra.mxu0 0
        %3065 = vmatpush.bf16.msra.mxu0 0
        %3066 = vmatpush.bf16.msra.mxu0 %v3054
        %3067 = vmatpush.bf16.msra.mxu0 %v3053
        %3068 = vmatmul.bf16.gmra.mxu0 %v3058
        %v3069 = vpop.f32.mrf.mxu0
        %v3070 = vadd.f32 %v3043, %v3069
        %v3071 = vpop.f32.mrf.mxu0
        %3072 = vdwg.mxu0
        %v3073 = vmax.f32 %v3070, 0.0
        %v3074 = vadd.f32 %v3037, %v3073
        %v3075 = vld [vmem:[#allocation2 + $0x184] sm:$0xf]
        %v3076 = vld [vmem:[#allocation2 + $0x188] sm:$0xf]
        %v3077 = vld [vmem:[#allocation2 + $0x18c] sm:$0xf]
        %v3078 = vld [vmem:[#allocation2 + $0x190] sm:$0xf]
        %v3079 = vld [vmem:[#allocation2 + $0x194] sm:$0x1]
        %v3080 = vunpack.c.l.bf16 %v3079
        %v3081 = vpack.c.bf16 %v3074, %v3074
        %v3086 = vunpack.c.l.b16 %v3075
        %v3087 = vunpack.c.l.b16 %v3076
        %v3088 = vunpack.c.l.b16 %v3077
        %v3089 = vunpack.c.l.b16 %v3078
        %v3090 = vpack.c.b16 %v3087, %v3086
        %v3091 = vpack.c.b16 %v3089, %v3088
        %v3095 = vsel %vm180, %v3081, 0
        %3097 = vmatpush.bf16.msra.mxu0 0
        %3098 = vmatpush.bf16.msra.mxu0 0
        %3099 = vmatpush.bf16.msra.mxu0 0
        %3100 = vmatpush.bf16.msra.mxu0 0
        %3101 = vmatpush.bf16.msra.mxu0 0
        %3102 = vmatpush.bf16.msra.mxu0 0
        %3103 = vmatpush.bf16.msra.mxu0 %v3091
        %3104 = vmatpush.bf16.msra.mxu0 %v3090
        %3105 = vmatmul.bf16.gmra.mxu0 %v3095
        %v3106 = vpop.f32.mrf.mxu0
        %v3107 = vadd.f32 %v3080, %v3106
        %v3108 = vpop.f32.mrf.mxu0
        %3109 = vdwg.mxu0
        %3110 = vst [vmem:[%s156] sm:$0x1] %v3107
        %p3111 = scmp.lt.s32.totalorder %s14, 1
        %s3112 = scalar_select %p3111, %s14, 1
        %s3113 = scalar_lea.vmem %s2, %s3112
        // Predicated region
        $region33: #{set_transformer_forward.1} parent=27 // pred_check
          %p3114 = pneg %p79
        $region34: #{set_transformer_forward.1} parent=27 // pred_check_branch
          %3116 = sbr.rel (%p3114) target = $region36
        $region35: #{set_transformer_forward.1} parent=27 // pred_region
          _
        $region36: #{set_transformer_forward.1} parent=27 // pred_fallthru
          _
      $region28: #{set_transformer_forward.1} parent=5 // pred_fallthru
        _
      %p3117 = scmp.le.s32.totalorder 2, %s9
      // Predicated region
      $region37: #{set_transformer_forward.1} parent=5 // pred_check
        %p3118 = pneg %p3117
      $region38: #{set_transformer_forward.1} parent=5 // pred_check_branch
        %3120 = sbr.rel (%p3118) target = $region40
      $region39: #{set_transformer_forward.1} parent=5 // pred_region
        %s3121 = ssub.s32 %s9, 2
        // Predicated region
        $region41: #{set_transformer_forward.1} parent=39 // pred_check
          %p3122 = pneg %p85
        $region42: #{set_transformer_forward.1} parent=39 // pred_check_branch
          %3124 = sbr.rel (%p3122) target = $region44
        $region43: #{set_transformer_forward.1} parent=39 // pred_region
          %p3125 = scmp.lt.s32.totalorder %s15, 1
          %s3126 = scalar_select %p3125, %s15, 1
          %s3127 = scalar_lea.vmem %s2, %s3126
        $region44: #{set_transformer_forward.1} parent=39 // pred_fallthru
          _
      $region40: #{set_transformer_forward.1} parent=5 // pred_fallthru
        _
    $region6: #{set_transformer_forward.1} parent=1 // loop_footer
      %s13 = sadd.s32 1, %s9
    $region7: #{set_transformer_forward.1} parent=1 // loop_footer_branch
      %8 = sbr.rel target = $region3
    $region8: #{set_transformer_forward.1} parent=1 // loop_exit
      _
    %3128 = vsyncpa [#allocation3], 1
    %s3129 = scalar_lea.sflag [#allocation3], 1
    %3130 = vsyncpa %s3129, 1

</llo_original>
